<compile_context>
chip_gen: v7x
topology: tpu7x:2x2x1
jax: 0.10.0
libtpu: 0.0.40
codegen_flags: <defaults>
</compile_context>

<pallas_src>
import functools

import jax
import jax.numpy as jnp
from jax.experimental import pallas as pl
from jax.experimental.pallas import tpu as pltpu


def _fused_vgg_block_kernel(xp_ref, w0_ref, b0_ref, w1_ref, b1_ref, o_ref,
                            col1_ref, y3_ref, *, TH, H, W, CIN, C1, C2):
    """conv1(3x3, CIN->C1) -> ReLU -> conv2(3x3, C1->C2) for one TH-row output tile.

    xp_ref  : (1, H+4, W+4, CIN) bf16  input, zero-padded by 2 in H and W
    w0_ref  : (9*CIN, C1)        bf16  conv1 weights, k = (dy*3+dx)*CIN + cin
    b0_ref  : (1, C1)            f32
    w1_ref  : (3, 3*C1, C2)      bf16  conv2 weights, [dy, dx*C1 + cin, cout]
    b1_ref  : (1, C2)            f32
    o_ref   : (1, TH, W, C2)     f32   output row-tile
    col1_ref: (TH+2, W, 9*CIN)   bf16  conv1 im2col scratch
    y3_ref  : (TH+2, W, 3*C1)    bf16  ReLU'd intermediate, dx taps folded into lanes
    """
    t = pl.program_id(1)
    row0 = pl.multiple_of(t * TH, 8)  # top padded-input row of this tile

    # ---- conv1: build the K = 9*CIN im2col for the TH+2 intermediate rows ----
    # Intermediate local row i = 0..TH+1  <->  global row g = t*TH - 1 + i.
    # y[g, w] uses padded-input rows (row0+i .. row0+i+2) and cols (w+1 .. w+3).
    for a in range(3):          # dy tap
        for b in range(3):      # dx tap
            k = a * 3 + b
            col1_ref[:, :, CIN * k: CIN * (k + 1)] = xp_ref[
                0, pl.ds(row0 + a, TH + 2), b + 1: b + 1 + W, :]

    z = jnp.dot(col1_ref[...].reshape((TH + 2) * W, 9 * CIN), w0_ref[...],
                preferred_element_type=jnp.float32)            # ((TH+2)*W, C1) f32
    z = jnp.maximum(z + b0_ref[0].astype(jnp.float32), 0.0)    # bias + ReLU in f32
    zb = z.reshape(TH + 2, W, C1).astype(jnp.bfloat16)

    # ---- dx-folded intermediate:  y3[i, w, dx*C1 + c] = y[i, w-1+dx, c] ----
    zero_col = jnp.zeros((TH + 2, 1, C1), jnp.bfloat16)
    y3_ref[:, :, C1:2 * C1] = zb                                # dx = 1 (center)
    y3_ref[:, 0:1, 0:C1] = zero_col                             # dx = 0, w = 0 (left pad)
    y3_ref[:, 1:W, 0:C1] = zb[:, 0:W - 1, :]                    # dx = 0
    y3_ref[:, W - 1:W, 2 * C1:3 * C1] = zero_col                # dx = 2, w = W-1 (right pad)
    y3_ref[:, 0:W - 1, 2 * C1:3 * C1] = zb[:, 1:W, :]           # dx = 2

    # conv2's zero padding in H: halo rows whose global index falls outside [0, H).
    @pl.when(t == 0)
    def _():
        y3_ref[0:1, :, :] = jnp.zeros((1, W, 3 * C1), jnp.bfloat16)

    @pl.when(t == pl.num_programs(1) - 1)
    def _():
        y3_ref[TH + 1:TH + 2, :, :] = jnp.zeros((1, W, 3 * C1), jnp.bfloat16)

    # ---- conv2: 3 matmuls with K = 3*C1 (dx taps and cin folded into K) ----
    acc = jnp.zeros((TH * W, C2), jnp.float32)
    for a2 in range(3):         # dy tap
        lhs = y3_ref[a2: a2 + TH, :, :].reshape(TH * W, 3 * C1)
        acc = acc + jnp.dot(lhs, w1_ref[a2], preferred_element_type=jnp.float32)
    acc = acc + b1_ref[0].astype(jnp.float32)

    # TODO(synk): lane-dense output (block last dim a multiple of 128, e.g. (1, TH, W*C2))
    # needs a minor-dim-changing relayout of acc; skipped to keep lowering robust.
    o_ref[...] = acc.reshape(1, TH, W, C2).astype(o_ref.dtype)


def _pick_row_tile(H):
    # <=16 rows keeps 2x(in+out)+scratch well under v7x's 64 MiB VMEM even at 224x224.
    for th in (16, 8):
        if H % th == 0 and H > th:
            return th
    return H


def vgg_feature_extractor(x_nchw, params):
    """vgg19.features[:3]: Conv2d(3,64,3,p=1) -> ReLU -> Conv2d(64,64,3,p=1).

    x_nchw: (N, 3, H, W) float32 (PyTorch layout). Returns (N, 64, H, W) float32.
    """
    w0, b0, w1, b1 = params["w0"], params["b0"], params["w1"], params["b1"]
    CIN, C1 = w0.shape[2], w0.shape[3]
    C2 = w1.shape[3]

    x = jnp.transpose(x_nchw, (0, 2, 3, 1))                   # NCHW -> NHWC
    N, H, W, _ = x.shape
    TH = _pick_row_tile(H)
    nH = H // TH

    # Only the tiny CIN=3 input is padded in HBM (covers both convs' halos);
    # the C1=64 intermediate stays in VMEM (no pad copy / HBM round trip).
    # TODO(synk): lane-pack the CIN=3 input as (N, H+4, (W+4)*CIN) for a lane-dense DMA;
    # it needs an in-kernel lane-splitting reshape, left out for lowering robustness.
    xp = jnp.pad(x, ((0, 0), (2, 2), (2, 2), (0, 0))).astype(jnp.bfloat16)

    # Weight layouts chosen so filter taps fold into the matmul K dimension.
    w0r = w0.reshape(9 * CIN, C1).astype(jnp.bfloat16)        # k = (dy*3+dx)*CIN + cin
    w1f = w1.reshape(3, 3 * C1, C2).astype(jnp.bfloat16)      # [dy, dx*C1 + cin, cout]
    b0r = b0.reshape(1, C1).astype(jnp.float32)
    b1r = b1.reshape(1, C2).astype(jnp.float32)

    kernel = functools.partial(_fused_vgg_block_kernel,
                               TH=TH, H=H, W=W, CIN=CIN, C1=C1, C2=C2)

    out_nhwc = pl.pallas_call(
        kernel,
        out_shape=jax.ShapeDtypeStruct((N, H, W, C2), jnp.float32),
        grid_spec=pltpu.PrefetchScalarGridSpec(
            num_scalar_prefetch=0,
            grid=(N, nH),
            in_specs=[
                pl.BlockSpec((1, H + 4, W + 4, CIN), lambda n, t: (n, 0, 0, 0)),
                pl.BlockSpec((9 * CIN, C1), lambda n, t: (0, 0)),
                pl.BlockSpec((1, C1), lambda n, t: (0, 0)),
                pl.BlockSpec((3, 3 * C1, C2), lambda n, t: (0, 0, 0)),
                pl.BlockSpec((1, C2), lambda n, t: (0, 0)),
            ],
            out_specs=pl.BlockSpec((1, TH, W, C2), lambda n, t: (n, t, 0, 0)),
            scratch_shapes=[
                pltpu.VMEM((TH + 2, W, 9 * CIN), jnp.bfloat16),   # conv1 im2col
                pltpu.VMEM((TH + 2, W, 3 * C1), jnp.bfloat16),    # dx-folded intermediate
            ],
        ),
        compiler_params=pltpu.CompilerParams(
            dimension_semantics=("parallel", "parallel"),
            vmem_limit_bytes=48 * 1024 * 1024,
        ),
    )(xp, w0r, b0r, w1f, b1r)

    return jnp.transpose(out_nhwc, (0, 3, 1, 2))              # NHWC -> NCHW


def init_params(key):
    """Deterministic synthetic weights (same shapes as vgg19.features[0] and [2])."""
    k0, k1, k2, k3 = jax.random.split(key, 4)
    w0 = jax.random.normal(k0, (3, 3, 3, 64), jnp.float32) * 0.1   # (kh, kw, Cin, Cout)
    b0 = jax.random.normal(k1, (64,), jnp.float32) * 0.1
    w1 = jax.random.normal(k2, (3, 3, 64, 64), jnp.float32) * 0.05
    b1 = jax.random.normal(k3, (64,), jnp.float32) * 0.1
    return {"w0": w0, "b0": b0, "w1": w1, "b1": b1}


def _reference(x_nchw, p):
    def conv(x, w, b):
        wt = jnp.transpose(w, (3, 2, 0, 1))                   # (kh,kw,Cin,Cout) -> OIHW
        y = jax.lax.conv_general_dilated(
            x, wt, window_strides=(1, 1), padding="SAME",
            dimension_numbers=("NCHW", "OIHW", "NCHW"))
        return y + b.reshape(1, -1, 1, 1)
    y = jnp.maximum(conv(x_nchw, p["w0"], p["b0"]), 0.0)
    return conv(y, p["w1"], p["b1"])


if __name__ == "__main__":
    key = jax.random.PRNGKey(0)
    params = init_params(key)
    x = jax.random.normal(jax.random.PRNGKey(1), (2, 3, 16, 16), jnp.float32)

    out = jax.jit(vgg_feature_extractor)(x, params)
    out = jax.block_until_ready(out)
    assert out.shape == (2, 64, 16, 16), out.shape

    expected = _reference(x, params)
    err = float(jnp.max(jnp.abs(out - expected)))
    # bf16 MXU operands (f32 accumulation) -> tolerance loosened vs the pure-f32 1e-3 check.
    assert err < 5e-2, f"max abs err {err}"
    print("KERNEL_OK")
</pallas_src>

<mosaic_0001>
module attributes {stable_mosaic.version = 11 : i64} {
  func.func @_fused_vgg_block_kernel(%arg0: i32, %arg1: i32, %arg2: memref<1x20x20x3xbf16, #tpu.memory_space<vmem>>, %arg3: memref<27x64xbf16, #tpu.memory_space<vmem>>, %arg4: memref<1x64xf32, #tpu.memory_space<vmem>>, %arg5: memref<3x192x64xbf16, #tpu.memory_space<vmem>>, %arg6: memref<1x64xf32, #tpu.memory_space<vmem>>, %arg7: memref<1x8x16x64xf32, #tpu.memory_space<vmem>>, %arg8: memref<10x16x27xbf16, #tpu.memory_space<vmem>>, %arg9: memref<10x16x192xbf16, #tpu.memory_space<vmem>>) attributes {dimension_semantics = [#tpu.dimension_semantics<parallel>, #tpu.dimension_semantics<parallel>], iteration_bounds = array<i64: 2, 2>, scalar_prefetch = 0 : i64, scratch_operands = 2 : i64, tpu.core_type = #tpu.core_type<tc>, window_params = [{transform_indices = @transform_0, window_bounds = array<i64: 1, 20, 20, 3>}, {pipeline_mode = #tpu.pipeline_mode<synchronous>, transform_indices = @transform_1, window_bounds = array<i64: 27, 64>}, {pipeline_mode = #tpu.pipeline_mode<synchronous>, transform_indices = @transform_2, window_bounds = array<i64: 1, 64>}, {pipeline_mode = #tpu.pipeline_mode<synchronous>, transform_indices = @transform_3, window_bounds = array<i64: 3, 192, 64>}, {pipeline_mode = #tpu.pipeline_mode<synchronous>, transform_indices = @transform_4, window_bounds = array<i64: 1, 64>}, {transform_indices = @transform_5, window_bounds = array<i64: 1, 8, 16, 64>}]} {
    %c8_i32 = arith.constant 8 : i32
    %0 = arith.muli %arg1, %c8_i32 : i32
    %1 = tpu.assume_multiple %0, 8 : i32
    %c0_i32 = arith.constant 0 : i32
    %2 = arith.addi %1, %c0_i32 : i32
    %c0 = arith.constant 0 : index
    %3 = arith.index_cast %2 : i32 to index
    %c1 = arith.constant 1 : index
    %c0_0 = arith.constant 0 : index
    %4 = vector.load %arg2[%c0, %3, %c1, %c0_0] : memref<1x20x20x3xbf16, #tpu.memory_space<vmem>>, vector<1x10x16x3xbf16>
    %5 = vector.shape_cast %4 : vector<1x10x16x3xbf16> to vector<10x16x3xbf16>
    %c0_1 = arith.constant 0 : index
    %c0_2 = arith.constant 0 : index
    %c0_3 = arith.constant 0 : index
    %6 = vector.load %arg8[%c0_1, %c0_2, %c0_3] : memref<10x16x27xbf16, #tpu.memory_space<vmem>>, vector<10x16x3xbf16>
    tpu.vector_store %arg8[%c0_1, %c0_2, %c0_3], %5 {strides = array<i32>} : memref<10x16x27xbf16, #tpu.memory_space<vmem>>, vector<10x16x3xbf16>,
    %c0_i32_4 = arith.constant 0 : i32
    %7 = arith.addi %1, %c0_i32_4 : i32
    %c0_5 = arith.constant 0 : index
    %8 = arith.index_cast %7 : i32 to index
    %c2 = arith.constant 2 : index
    %c0_6 = arith.constant 0 : index
    %9 = vector.load %arg2[%c0_5, %8, %c2, %c0_6] : memref<1x20x20x3xbf16, #tpu.memory_space<vmem>>, vector<1x10x16x3xbf16>
    %10 = vector.shape_cast %9 : vector<1x10x16x3xbf16> to vector<10x16x3xbf16>
    %c0_7 = arith.constant 0 : index
    %c0_8 = arith.constant 0 : index
    %c3 = arith.constant 3 : index
    %11 = vector.load %arg8[%c0_7, %c0_8, %c3] : memref<10x16x27xbf16, #tpu.memory_space<vmem>>, vector<10x16x3xbf16>
    tpu.vector_store %arg8[%c0_7, %c0_8, %c3], %10 {strides = array<i32>} : memref<10x16x27xbf16, #tpu.memory_space<vmem>>, vector<10x16x3xbf16>,
    %c0_i32_9 = arith.constant 0 : i32
    %12 = arith.addi %1, %c0_i32_9 : i32
    %c0_10 = arith.constant 0 : index
    %13 = arith.index_cast %12 : i32 to index
    %c3_11 = arith.constant 3 : index
    %c0_12 = arith.constant 0 : index
    %14 = vector.load %arg2[%c0_10, %13, %c3_11, %c0_12] : memref<1x20x20x3xbf16, #tpu.memory_space<vmem>>, vector<1x10x16x3xbf16>
    %15 = vector.shape_cast %14 : vector<1x10x16x3xbf16> to vector<10x16x3xbf16>
    %c0_13 = arith.constant 0 : index
    %c0_14 = arith.constant 0 : index
    %c6 = arith.constant 6 : index
    %16 = vector.load %arg8[%c0_13, %c0_14, %c6] : memref<10x16x27xbf16, #tpu.memory_space<vmem>>, vector<10x16x3xbf16>
    tpu.vector_store %arg8[%c0_13, %c0_14, %c6], %15 {strides = array<i32>} : memref<10x16x27xbf16, #tpu.memory_space<vmem>>, vector<10x16x3xbf16>,
    %c1_i32 = arith.constant 1 : i32
    %17 = arith.addi %1, %c1_i32 : i32
    %c0_15 = arith.constant 0 : index
    %18 = arith.index_cast %17 : i32 to index
    %c1_16 = arith.constant 1 : index
    %c0_17 = arith.constant 0 : index
    %19 = vector.load %arg2[%c0_15, %18, %c1_16, %c0_17] : memref<1x20x20x3xbf16, #tpu.memory_space<vmem>>, vector<1x10x16x3xbf16>
    %20 = vector.shape_cast %19 : vector<1x10x16x3xbf16> to vector<10x16x3xbf16>
    %c0_18 = arith.constant 0 : index
    %c0_19 = arith.constant 0 : index
    %c9 = arith.constant 9 : index
    %21 = vector.load %arg8[%c0_18, %c0_19, %c9] : memref<10x16x27xbf16, #tpu.memory_space<vmem>>, vector<10x16x3xbf16>
    tpu.vector_store %arg8[%c0_18, %c0_19, %c9], %20 {strides = array<i32>} : memref<10x16x27xbf16, #tpu.memory_space<vmem>>, vector<10x16x3xbf16>,
    %c1_i32_20 = arith.constant 1 : i32
    %22 = arith.addi %1, %c1_i32_20 : i32
    %c0_21 = arith.constant 0 : index
    %23 = arith.index_cast %22 : i32 to index
    %c2_22 = arith.constant 2 : index
    %c0_23 = arith.constant 0 : index
    %24 = vector.load %arg2[%c0_21, %23, %c2_22, %c0_23] : memref<1x20x20x3xbf16, #tpu.memory_space<vmem>>, vector<1x10x16x3xbf16>
    %25 = vector.shape_cast %24 : vector<1x10x16x3xbf16> to vector<10x16x3xbf16>
    %c0_24 = arith.constant 0 : index
    %c0_25 = arith.constant 0 : index
    %c12 = arith.constant 12 : index
    %26 = vector.load %arg8[%c0_24, %c0_25, %c12] : memref<10x16x27xbf16, #tpu.memory_space<vmem>>, vector<10x16x3xbf16>
    tpu.vector_store %arg8[%c0_24, %c0_25, %c12], %25 {strides = array<i32>} : memref<10x16x27xbf16, #tpu.memory_space<vmem>>, vector<10x16x3xbf16>,
    %c1_i32_26 = arith.constant 1 : i32
    %27 = arith.addi %1, %c1_i32_26 : i32
    %c0_27 = arith.constant 0 : index
    %28 = arith.index_cast %27 : i32 to index
    %c3_28 = arith.constant 3 : index
    %c0_29 = arith.constant 0 : index
    %29 = vector.load %arg2[%c0_27, %28, %c3_28, %c0_29] : memref<1x20x20x3xbf16, #tpu.memory_space<vmem>>, vector<1x10x16x3xbf16>
    %30 = vector.shape_cast %29 : vector<1x10x16x3xbf16> to vector<10x16x3xbf16>
    %c0_30 = arith.constant 0 : index
    %c0_31 = arith.constant 0 : index
    %c15 = arith.constant 15 : index
    %31 = vector.load %arg8[%c0_30, %c0_31, %c15] : memref<10x16x27xbf16, #tpu.memory_space<vmem>>, vector<10x16x3xbf16>
    tpu.vector_store %arg8[%c0_30, %c0_31, %c15], %30 {strides = array<i32>} : memref<10x16x27xbf16, #tpu.memory_space<vmem>>, vector<10x16x3xbf16>,
    %c2_i32 = arith.constant 2 : i32
    %32 = arith.addi %1, %c2_i32 : i32
    %c0_32 = arith.constant 0 : index
    %33 = arith.index_cast %32 : i32 to index
    %c1_33 = arith.constant 1 : index
    %c0_34 = arith.constant 0 : index
    %34 = vector.load %arg2[%c0_32, %33, %c1_33, %c0_34] : memref<1x20x20x3xbf16, #tpu.memory_space<vmem>>, vector<1x10x16x3xbf16>
    %35 = vector.shape_cast %34 : vector<1x10x16x3xbf16> to vector<10x16x3xbf16>
    %c0_35 = arith.constant 0 : index
    %c0_36 = arith.constant 0 : index
    %c18 = arith.constant 18 : index
    %36 = vector.load %arg8[%c0_35, %c0_36, %c18] : memref<10x16x27xbf16, #tpu.memory_space<vmem>>, vector<10x16x3xbf16>
    tpu.vector_store %arg8[%c0_35, %c0_36, %c18], %35 {strides = array<i32>} : memref<10x16x27xbf16, #tpu.memory_space<vmem>>, vector<10x16x3xbf16>,
    %c2_i32_37 = arith.constant 2 : i32
    %37 = arith.addi %1, %c2_i32_37 : i32
    %c0_38 = arith.constant 0 : index
    %38 = arith.index_cast %37 : i32 to index
    %c2_39 = arith.constant 2 : index
    %c0_40 = arith.constant 0 : index
    %39 = vector.load %arg2[%c0_38, %38, %c2_39, %c0_40] : memref<1x20x20x3xbf16, #tpu.memory_space<vmem>>, vector<1x10x16x3xbf16>
    %40 = vector.shape_cast %39 : vector<1x10x16x3xbf16> to vector<10x16x3xbf16>
    %c0_41 = arith.constant 0 : index
    %c0_42 = arith.constant 0 : index
    %c21 = arith.constant 21 : index
    %41 = vector.load %arg8[%c0_41, %c0_42, %c21] : memref<10x16x27xbf16, #tpu.memory_space<vmem>>, vector<10x16x3xbf16>
    tpu.vector_store %arg8[%c0_41, %c0_42, %c21], %40 {strides = array<i32>} : memref<10x16x27xbf16, #tpu.memory_space<vmem>>, vector<10x16x3xbf16>,
    %c2_i32_43 = arith.constant 2 : i32
    %42 = arith.addi %1, %c2_i32_43 : i32
    %c0_44 = arith.constant 0 : index
    %43 = arith.index_cast %42 : i32 to index
    %c3_45 = arith.constant 3 : index
    %c0_46 = arith.constant 0 : index
    %44 = vector.load %arg2[%c0_44, %43, %c3_45, %c0_46] : memref<1x20x20x3xbf16, #tpu.memory_space<vmem>>, vector<1x10x16x3xbf16>
    %45 = vector.shape_cast %44 : vector<1x10x16x3xbf16> to vector<10x16x3xbf16>
    %c0_47 = arith.constant 0 : index
    %c0_48 = arith.constant 0 : index
    %c24 = arith.constant 24 : index
    %46 = vector.load %arg8[%c0_47, %c0_48, %c24] : memref<10x16x27xbf16, #tpu.memory_space<vmem>>, vector<10x16x3xbf16>
    tpu.vector_store %arg8[%c0_47, %c0_48, %c24], %45 {strides = array<i32>} : memref<10x16x27xbf16, #tpu.memory_space<vmem>>, vector<10x16x3xbf16>,
    %c0_49 = arith.constant 0 : index
    %c0_50 = arith.constant 0 : index
    %c0_51 = arith.constant 0 : index
    %47 = vector.load %arg8[%c0_49, %c0_50, %c0_51] : memref<10x16x27xbf16, #tpu.memory_space<vmem>>, vector<10x16x27xbf16>
    %48 = vector.shape_cast %47 : vector<10x16x27xbf16> to vector<160x27xbf16>
    %c0_52 = arith.constant 0 : index
    %c0_53 = arith.constant 0 : index
    %49 = vector.load %arg3[%c0_52, %c0_53] : memref<27x64xbf16, #tpu.memory_space<vmem>>, vector<27x64xbf16>
    %cst = arith.constant dense<0.000000e+00> : vector<160x64xf32>
    %50 = tpu.matmul %48, %49, %cst {dimension_numbers = #tpu.dot_dimension_numbers<[1], [0], [0], [1], [0, 0, 1, 1], [], []>} : vector<160x27xbf16>, vector<27x64xbf16>, vector<160x64xf32> -> vector<160x64xf32>
    %c0_54 = arith.constant 0 : index
    %c0_55 = arith.constant 0 : index
    %51 = vector.load %arg4[%c0_54, %c0_55] : memref<1x64xf32, #tpu.memory_space<vmem>>, vector<1x64xf32>
    %52 = vector.shape_cast %51 : vector<1x64xf32> to vector<64xf32>
    %53 = vector.shape_cast %52 : vector<64xf32> to vector<1x64xf32>
    %54 = vector.broadcast %53 : vector<1x64xf32> to vector<160x64xf32>
    %55 = arith.addf %50, %54 : vector<160x64xf32>
    %cst_56 = arith.constant 0.000000e+00 : f32
    %56 = vector.broadcast %cst_56 : f32 to vector<160x64xf32>
    %57 = arith.maximumf %55, %56 : vector<160x64xf32>
    %58 = vector.shape_cast %57 : vector<160x64xf32> to vector<10x16x64xf32>
    %59 = arith.truncf %58 : vector<10x16x64xf32> to vector<10x16x64xbf16>
    %cst_57 = arith.constant 0.000000e+00 : bf16
    %60 = vector.broadcast %cst_57 : bf16 to vector<10x1x64xbf16>
    %c0_58 = arith.constant 0 : index
    %c0_59 = arith.constant 0 : index
    %c64 = arith.constant 64 : index
    %61 = vector.load %arg9[%c0_58, %c0_59, %c64] : memref<10x16x192xbf16, #tpu.memory_space<vmem>>, vector<10x16x64xbf16>
    tpu.vector_store %arg9[%c0_58, %c0_59, %c64], %59 {strides = array<i32>} : memref<10x16x192xbf16, #tpu.memory_space<vmem>>, vector<10x16x64xbf16>,
    %c0_60 = arith.constant 0 : index
    %c0_61 = arith.constant 0 : index
    %c0_62 = arith.constant 0 : index
    %62 = vector.load %arg9[%c0_60, %c0_61, %c0_62] : memref<10x16x192xbf16, #tpu.memory_space<vmem>>, vector<10x1x64xbf16>
    tpu.vector_store %arg9[%c0_60, %c0_61, %c0_62], %60 {strides = array<i32>} : memref<10x16x192xbf16, #tpu.memory_space<vmem>>, vector<10x1x64xbf16>,
    %63 = vector.extract_strided_slice %59 {offsets = [0, 0, 0], sizes = [10, 15, 64], strides = [1, 1, 1]} : vector<10x16x64xbf16> to vector<10x15x64xbf16>
    %c0_63 = arith.constant 0 : index
    %c1_64 = arith.constant 1 : index
    %c0_65 = arith.constant 0 : index
    %64 = vector.load %arg9[%c0_63, %c1_64, %c0_65] : memref<10x16x192xbf16, #tpu.memory_space<vmem>>, vector<10x15x64xbf16>
    tpu.vector_store %arg9[%c0_63, %c1_64, %c0_65], %63 {strides = array<i32>} : memref<10x16x192xbf16, #tpu.memory_space<vmem>>, vector<10x15x64xbf16>,
    %c0_66 = arith.constant 0 : index
    %c15_67 = arith.constant 15 : index
    %c128 = arith.constant 128 : index
    %65 = vector.load %arg9[%c0_66, %c15_67, %c128] : memref<10x16x192xbf16, #tpu.memory_space<vmem>>, vector<10x1x64xbf16>
    tpu.vector_store %arg9[%c0_66, %c15_67, %c128], %60 {strides = array<i32>} : memref<10x16x192xbf16, #tpu.memory_space<vmem>>, vector<10x1x64xbf16>,
    %66 = vector.extract_strided_slice %59 {offsets = [0, 1, 0], sizes = [10, 15, 64], strides = [1, 1, 1]} : vector<10x16x64xbf16> to vector<10x15x64xbf16>
    %c0_68 = arith.constant 0 : index
    %c0_69 = arith.constant 0 : index
    %c128_70 = arith.constant 128 : index
    %67 = vector.load %arg9[%c0_68, %c0_69, %c128_70] : memref<10x16x192xbf16, #tpu.memory_space<vmem>>, vector<10x15x64xbf16>
    tpu.vector_store %arg9[%c0_68, %c0_69, %c128_70], %66 {strides = array<i32>} : memref<10x16x192xbf16, #tpu.memory_space<vmem>>, vector<10x15x64xbf16>,
    %c0_i32_71 = arith.constant 0 : i32
    %68 = arith.cmpi eq, %arg1, %c0_i32_71 : i32
    %69 = arith.extui %68 : i1 to i32
    %c0_i32_72 = arith.constant 0 : i32
    %70 = arith.cmpi ne, %69, %c0_i32_72 : i32
    scf.if %70 {
      %cst_103 = arith.constant 0.000000e+00 : bf16
      %100 = vector.broadcast %cst_103 : bf16 to vector<1x16x192xbf16>
      %c0_104 = arith.constant 0 : index
      %c0_105 = arith.constant 0 : index
      %c0_106 = arith.constant 0 : index
      %101 = vector.load %arg9[%c0_104, %c0_105, %c0_106] : memref<10x16x192xbf16, #tpu.memory_space<vmem>>, vector<1x16x192xbf16>
      tpu.vector_store %arg9[%c0_104, %c0_105, %c0_106], %100 {strides = array<i32>} : memref<10x16x192xbf16, #tpu.memory_space<vmem>>, vector<1x16x192xbf16>,
    } else {
    }
    %c1_i32_73 = arith.constant 1 : i32
    %71 = arith.cmpi eq, %arg1, %c1_i32_73 : i32
    %72 = arith.extui %71 : i1 to i32
    %c0_i32_74 = arith.constant 0 : i32
    %73 = arith.cmpi ne, %72, %c0_i32_74 : i32
    scf.if %73 {
      %cst_103 = arith.constant 0.000000e+00 : bf16
      %100 = vector.broadcast %cst_103 : bf16 to vector<1x16x192xbf16>
      %c9_104 = arith.constant 9 : index
      %c0_105 = arith.constant 0 : index
      %c0_106 = arith.constant 0 : index
      %101 = vector.load %arg9[%c9_104, %c0_105, %c0_106] : memref<10x16x192xbf16, #tpu.memory_space<vmem>>, vector<1x16x192xbf16>
      tpu.vector_store %arg9[%c9_104, %c0_105, %c0_106], %100 {strides = array<i32>} : memref<10x16x192xbf16, #tpu.memory_space<vmem>>, vector<1x16x192xbf16>,
    } else {
    }
    %cst_75 = arith.constant 0.000000e+00 : f32
    %74 = vector.broadcast %cst_75 : f32 to vector<128x64xf32>
    %c0_76 = arith.constant 0 : index
    %c0_77 = arith.constant 0 : index
    %c0_78 = arith.constant 0 : index
    %75 = vector.load %arg9[%c0_76, %c0_77, %c0_78] : memref<10x16x192xbf16, #tpu.memory_space<vmem>>, vector<8x16x192xbf16>
    %76 = vector.shape_cast %75 : vector<8x16x192xbf16> to vector<128x192xbf16>
    %c0_79 = arith.constant 0 : index
    %c0_80 = arith.constant 0 : index
    %c0_81 = arith.constant 0 : index
    %77 = vector.load %arg5[%c0_79, %c0_80, %c0_81] : memref<3x192x64xbf16, #tpu.memory_space<vmem>>, vector<1x192x64xbf16>
    %78 = vector.shape_cast %77 : vector<1x192x64xbf16> to vector<192x64xbf16>
    %cst_82 = arith.constant dense<0.000000e+00> : vector<128x64xf32>
    %79 = tpu.matmul %76, %78, %cst_82 {dimension_numbers = #tpu.dot_dimension_numbers<[1], [0], [0], [1], [0, 0, 1, 1], [], []>} : vector<128x192xbf16>, vector<192x64xbf16>, vector<128x64xf32> -> vector<128x64xf32>
    %80 = arith.addf %74, %79 : vector<128x64xf32>
    %c1_83 = arith.constant 1 : index
    %c0_84 = arith.constant 0 : index
    %c0_85 = arith.constant 0 : index
    %81 = vector.load %arg9[%c1_83, %c0_84, %c0_85] : memref<10x16x192xbf16, #tpu.memory_space<vmem>>, vector<8x16x192xbf16>
    %82 = vector.shape_cast %81 : vector<8x16x192xbf16> to vector<128x192xbf16>
    %c1_86 = arith.constant 1 : index
    %c0_87 = arith.constant 0 : index
    %c0_88 = arith.constant 0 : index
    %83 = vector.load %arg5[%c1_86, %c0_87, %c0_88] : memref<3x192x64xbf16, #tpu.memory_space<vmem>>, vector<1x192x64xbf16>
    %84 = vector.shape_cast %83 : vector<1x192x64xbf16> to vector<192x64xbf16>
    %cst_89 = arith.constant dense<0.000000e+00> : vector<128x64xf32>
    %85 = tpu.matmul %82, %84, %cst_89 {dimension_numbers = #tpu.dot_dimension_numbers<[1], [0], [0], [1], [0, 0, 1, 1], [], []>} : vector<128x192xbf16>, vector<192x64xbf16>, vector<128x64xf32> -> vector<128x64xf32>
    %86 = arith.addf %80, %85 : vector<128x64xf32>
    %c2_90 = arith.constant 2 : index
    %c0_91 = arith.constant 0 : index
    %c0_92 = arith.constant 0 : index
    %87 = vector.load %arg9[%c2_90, %c0_91, %c0_92] : memref<10x16x192xbf16, #tpu.memory_space<vmem>>, vector<8x16x192xbf16>
    %88 = vector.shape_cast %87 : vector<8x16x192xbf16> to vector<128x192xbf16>
    %c2_93 = arith.constant 2 : index
    %c0_94 = arith.constant 0 : index
    %c0_95 = arith.constant 0 : index
    %89 = vector.load %arg5[%c2_93, %c0_94, %c0_95] : memref<3x192x64xbf16, #tpu.memory_space<vmem>>, vector<1x192x64xbf16>
    %90 = vector.shape_cast %89 : vector<1x192x64xbf16> to vector<192x64xbf16>
    %cst_96 = arith.constant dense<0.000000e+00> : vector<128x64xf32>
    %91 = tpu.matmul %88, %90, %cst_96 {dimension_numbers = #tpu.dot_dimension_numbers<[1], [0], [0], [1], [0, 0, 1, 1], [], []>} : vector<128x192xbf16>, vector<192x64xbf16>, vector<128x64xf32> -> vector<128x64xf32>
    %92 = arith.addf %86, %91 : vector<128x64xf32>
    %c0_97 = arith.constant 0 : index
    %c0_98 = arith.constant 0 : index
    %93 = vector.load %arg6[%c0_97, %c0_98] : memref<1x64xf32, #tpu.memory_space<vmem>>, vector<1x64xf32>
    %94 = vector.shape_cast %93 : vector<1x64xf32> to vector<64xf32>
    %95 = vector.shape_cast %94 : vector<64xf32> to vector<1x64xf32>
    %96 = vector.broadcast %95 : vector<1x64xf32> to vector<128x64xf32>
    %97 = arith.addf %92, %96 : vector<128x64xf32>
    %98 = vector.shape_cast %97 : vector<128x64xf32> to vector<1x8x16x64xf32>
    %c0_99 = arith.constant 0 : index
    %c0_100 = arith.constant 0 : index
    %c0_101 = arith.constant 0 : index
    %c0_102 = arith.constant 0 : index
    %99 = vector.load %arg7[%c0_99, %c0_100, %c0_101, %c0_102] : memref<1x8x16x64xf32, #tpu.memory_space<vmem>>, vector<1x8x16x64xf32>
    tpu.vector_store %arg7[%c0_99, %c0_100, %c0_101, %c0_102], %98 {strides = array<i32>} : memref<1x8x16x64xf32, #tpu.memory_space<vmem>>, vector<1x8x16x64xf32>,
    return
  }
  func.func @transform_0(%arg0: i32, %arg1: i32) -> (i32, i32, i32, i32) {
    %c0_i32 = arith.constant 0 : i32
    %c0_i32_0 = arith.constant 0 : i32
    %c0_i32_1 = arith.constant 0 : i32
    %c0_i32_2 = arith.constant 0 : i32
    return %arg0, %c0_i32, %c0_i32_0, %c0_i32_1 : i32, i32, i32, i32
  }
  func.func @transform_1(%arg0: i32, %arg1: i32) -> (i32, i32) {
    %c0_i32 = arith.constant 0 : i32
    %c0_i32_0 = arith.constant 0 : i32
    %c0_i32_1 = arith.constant 0 : i32
    return %c0_i32, %c0_i32_0 : i32, i32
  }
  func.func @transform_2(%arg0: i32, %arg1: i32) -> (i32, i32) {
    %c0_i32 = arith.constant 0 : i32
    %c0_i32_0 = arith.constant 0 : i32
    %c0_i32_1 = arith.constant 0 : i32
    return %c0_i32, %c0_i32_0 : i32, i32
  }
  func.func @transform_3(%arg0: i32, %arg1: i32) -> (i32, i32, i32) {
    %c0_i32 = arith.constant 0 : i32
    %c0_i32_0 = arith.constant 0 : i32
    %c0_i32_1 = arith.constant 0 : i32
    %c0_i32_2 = arith.constant 0 : i32
    return %c0_i32, %c0_i32_0, %c0_i32_1 : i32, i32, i32
  }
  func.func @transform_4(%arg0: i32, %arg1: i32) -> (i32, i32) {
    %c0_i32 = arith.constant 0 : i32
    %c0_i32_0 = arith.constant 0 : i32
    %c0_i32_1 = arith.constant 0 : i32
    return %c0_i32, %c0_i32_0 : i32, i32
  }
  func.func @transform_5(%arg0: i32, %arg1: i32) -> (i32, i32, i32, i32) {
    %c0_i32 = arith.constant 0 : i32
    %c0_i32_0 = arith.constant 0 : i32
    %c0_i32_1 = arith.constant 0 : i32
    return %arg0, %arg1, %c0_i32, %c0_i32_0 : i32, i32, i32, i32
  }
}

</mosaic_0001>

<llo_original>
// kernel: vgg_feature_extractor.1
$region0: #{vgg_feature_extractor.1}
  #allocation0 [shape = 'u32[]', space=smem, size = 0x4, offset = 0x4, fixed_abs, tag = 'smem constant byte address 0x4 - core index']
  #allocation1 [shape = 'u32[144,128]{1,0:T(1,128)}', space=vmem, size = 0x12000, scoped, tag = 'internal scratch']
  #allocation2 [shape = 'bf16[10,16,27]{2,1,0:T(16,128)(2,1)}', space=vmem, size = 0xa000, scoped, tag = 'scratch operand']
  #allocation3 [shape = 'bf16[10,16,192]{2,1,0:T(16,128)(2,1)}', space=vmem, size = 0x14000, scoped, tag = 'scratch operand']
  %s0 = inlined_call_operand.vmem [shape: bf16[2,20,20,3], index: 0, kind: input, shape index: {}]
  %s1 = inlined_call_operand.vmem [shape: bf16[27,64], index: 1, kind: input, shape index: {}]
  %s2 = inlined_call_operand.vmem [shape: f32[1,64], index: 2, kind: input, shape index: {}]
  %s3 = inlined_call_operand.vmem [shape: bf16[3,192,64], index: 3, kind: input, shape index: {}]
  %s4 = inlined_call_operand.vmem [shape: f32[1,64], index: 4, kind: input, shape index: {}]
  %s5 = inlined_call_operand.hbm [shape: f32[2,16,16,64], index: 5, kind: output, shape index: {}]
  %s6 = sld [smem:[#allocation0]]
  $region61: #{vgg_feature_extractor.1} parent=0
    _
  %s8 = ssub.s32 1, %s6
  %s9 = scalar_select 0, %s8, %s6
  $region1: #{vgg_feature_extractor.1} parent=0
    #allocation4 [shape = 'u8[131072]{0}', space=vmem, size = 0x20000, scoped, tag = 'output window, operand 0']
    #allocation5 [shape = 's32[2]{0}', space=sflag, size = 0x8, scoped, tag = 'scoped memory for vgg_feature_extractor.1']
    %10 = vsyncpa [#allocation5], 0
    %s11 = scalar_lea.sflag [#allocation5], 1
    %12 = vsyncpa %s11, 0
    loop: start=0, step=1, limit=6
    $region2: #{vgg_feature_extractor.1} parent=1 // loop_pre_header
      _
    $region3: #{vgg_feature_extractor.1} parent=1 // loop_header
      %s14 = sphi 0, %s18
      %p15 = scmp.ge.s32.totalorder %s14, 6
      %s21 = sphi 0, %s33
      %s22 = sphi 0, %s29
      %s23 = sphi 0, %s21
      %s24 = sphi 0, %s22
      %s25 = sphi 0, %s23
      %s26 = sphi 0, %s24
      %s36 = sphi 0, %s38
      %s39 = sphi 0, %s36
      %s40 = sphi 0, %s39
      %s56 = sphi 0, %s40
      %s60 = sphi 0, %s60
      %s62 = sphi 0, %s60
      %s63 = sphi 0, %s62
      %s77 = sphi 0, %s63
      %s81 = sphi 0, %s81
      %s83 = sphi 0, %s81
      %s84 = sphi 0, %s83
      %s98 = sphi 0, %s84
      %s102 = sphi 0, %s102
      %s104 = sphi 0, %s102
      %s105 = sphi 0, %s104
      %s119 = sphi 0, %s105
      %s123 = sphi 0, %s123
      %s125 = sphi 0, %s123
      %s126 = sphi 0, %s125
      %s140 = sphi 0, %s126
      %s148 = sphi 0, %s150
      %s151 = sphi 0, %s148
      %s152 = sphi 0, %s151
      %s168 = sphi 0, %s152
    $region4: #{vgg_feature_extractor.1} parent=1 // loop_header_branch
      %17 = sbr.rel (%p15) target = $region8
    $region5: #{vgg_feature_extractor.1} parent=1 // loop_body
      %s19 = ssub.s32 %s14, 1
      %s20 = ssub.s32 %s14, 2
      %s27 = sadd.s32 1, %s22
      %p28 = scmp.ge.s32.totalorder %s27, 2
      %s29 = scalar_select %p28, 0, %s27
      %s30 = sadd.s32 1, %s21
      %s31 = scalar_select %p28, %s30, %s21
      %p32 = scmp.ge.s32.totalorder %s31, 2
      %s33 = scalar_select %p32, 0, %s31
      %s34 = ssub.s32 %s21, %s33
      %p35 = scmp.eq.s32.totalorder %s34, 0
      %s37 = sadd.s32 %s36, 1
      %s38 = scalar_select %p35, %s36, %s37
      %p41 = pneg %p35
      %p42 = scmp.eq.s32.totalorder %s14, 3
      %p43 = por %p41, %p42
      %p44 = scmp.ne.s32.totalorder %s36, %s39
      %p45 = scmp.eq.s32.totalorder %s14, 0
      %p46 = por %p44, %p45
      %p47 = scmp.ne.s32.totalorder %s36, %s39
      %p48 = scmp.eq.s32.totalorder %s19, 3
      %p49 = por %p47, %p48
      %p50 = scmp.ne.s32.totalorder %s39, %s40
      %p51 = scmp.eq.s32.totalorder %s19, 0
      %p52 = por %p50, %p51
      %p53 = scmp.ne.s32.totalorder %s39, %s40
      %p54 = scmp.eq.s32.totalorder %s20, 3
      %p55 = por %p53, %p54
      %p57 = scmp.ne.s32.totalorder %s40, %s56
      %p58 = scmp.eq.s32.totalorder %s20, 0
      %p59 = por %p57, %p58
      %s61 = sadd.s32 %s60, 1
      %p64 = scmp.eq.s32.totalorder %s14, 3
      %p65 = scmp.ne.s32.totalorder %s60, %s62
      %p66 = scmp.eq.s32.totalorder %s14, 0
      %p67 = por %p65, %p66
      %p68 = scmp.ne.s32.totalorder %s60, %s62
      %p69 = scmp.eq.s32.totalorder %s19, 3
      %p70 = por %p68, %p69
      %p71 = scmp.ne.s32.totalorder %s62, %s63
      %p72 = scmp.eq.s32.totalorder %s19, 0
      %p73 = por %p71, %p72
      %p74 = scmp.ne.s32.totalorder %s62, %s63
      %p75 = scmp.eq.s32.totalorder %s20, 3
      %p76 = por %p74, %p75
      %p78 = scmp.ne.s32.totalorder %s63, %s77
      %p79 = scmp.eq.s32.totalorder %s20, 0
      %p80 = por %p78, %p79
      %s82 = sadd.s32 %s81, 1
      %p85 = scmp.eq.s32.totalorder %s14, 3
      %p86 = scmp.ne.s32.totalorder %s81, %s83
      %p87 = scmp.eq.s32.totalorder %s14, 0
      %p88 = por %p86, %p87
      %p89 = scmp.ne.s32.totalorder %s81, %s83
      %p90 = scmp.eq.s32.totalorder %s19, 3
      %p91 = por %p89, %p90
      %p92 = scmp.ne.s32.totalorder %s83, %s84
      %p93 = scmp.eq.s32.totalorder %s19, 0
      %p94 = por %p92, %p93
      %p95 = scmp.ne.s32.totalorder %s83, %s84
      %p96 = scmp.eq.s32.totalorder %s20, 3
      %p97 = por %p95, %p96
      %p99 = scmp.ne.s32.totalorder %s84, %s98
      %p100 = scmp.eq.s32.totalorder %s20, 0
      %p101 = por %p99, %p100
      %s103 = sadd.s32 %s102, 1
      %p106 = scmp.eq.s32.totalorder %s14, 3
      %p107 = scmp.ne.s32.totalorder %s102, %s104
      %p108 = scmp.eq.s32.totalorder %s14, 0
      %p109 = por %p107, %p108
      %p110 = scmp.ne.s32.totalorder %s102, %s104
      %p111 = scmp.eq.s32.totalorder %s19, 3
      %p112 = por %p110, %p111
      %p113 = scmp.ne.s32.totalorder %s104, %s105
      %p114 = scmp.eq.s32.totalorder %s19, 0
      %p115 = por %p113, %p114
      %p116 = scmp.ne.s32.totalorder %s104, %s105
      %p117 = scmp.eq.s32.totalorder %s20, 3
      %p118 = por %p116, %p117
      %p120 = scmp.ne.s32.totalorder %s105, %s119
      %p121 = scmp.eq.s32.totalorder %s20, 0
      %p122 = por %p120, %p121
      %s124 = sadd.s32 %s123, 1
      %p127 = scmp.eq.s32.totalorder %s14, 3
      %p128 = scmp.ne.s32.totalorder %s123, %s125
      %p129 = scmp.eq.s32.totalorder %s14, 0
      %p130 = por %p128, %p129
      %p131 = scmp.ne.s32.totalorder %s123, %s125
      %p132 = scmp.eq.s32.totalorder %s19, 3
      %p133 = por %p131, %p132
      %p134 = scmp.ne.s32.totalorder %s125, %s126
      %p135 = scmp.eq.s32.totalorder %s19, 0
      %p136 = por %p134, %p135
      %p137 = scmp.ne.s32.totalorder %s125, %s126
      %p138 = scmp.eq.s32.totalorder %s20, 3
      %p139 = por %p137, %p138
      %p141 = scmp.ne.s32.totalorder %s126, %s140
      %p142 = scmp.eq.s32.totalorder %s20, 0
      %p143 = por %p141, %p142
      %s144 = ssub.s32 %s21, %s33
      %s145 = ssub.s32 %s22, %s29
      %s146 = sor.u32 %s144, %s145
      %p147 = scmp.eq.s32.totalorder %s146, 0
      %s149 = sadd.s32 %s148, 1
      %s150 = scalar_select %p147, %s148, %s149
      %p153 = pneg %p147
      %p154 = scmp.eq.s32.totalorder %s14, 3
      %p155 = por %p153, %p154
      %p156 = scmp.ne.s32.totalorder %s148, %s151
      %p157 = scmp.eq.s32.totalorder %s14, 0
      %p158 = por %p156, %p157
      %p159 = scmp.ne.s32.totalorder %s148, %s151
      %p160 = scmp.eq.s32.totalorder %s19, 3
      %p161 = por %p159, %p160
      %p162 = scmp.ne.s32.totalorder %s151, %s152
      %p163 = scmp.eq.s32.totalorder %s19, 0
      %p164 = por %p162, %p163
      %p165 = scmp.ne.s32.totalorder %s151, %s152
      %p166 = scmp.eq.s32.totalorder %s20, 3
      %p167 = por %p165, %p166
      %p169 = scmp.ne.s32.totalorder %s152, %s168
      %p170 = scmp.eq.s32.totalorder %s20, 0
      %p171 = por %p169, %p170
      %p172 = scmp.le.s32.totalorder 1, %s14
      %p173 = scmp.lt.s32.totalorder %s14, 5
      %p174 = pnand %p172, %p173
      %p175 = pneg %p174
      // Predicated region
      $region9: #{vgg_feature_extractor.1} parent=5 // pred_check
        _
      $region10: #{vgg_feature_extractor.1} parent=5 // pred_check_branch
        %177 = sbr.rel (%p174) target = $region12
      $region11: #{vgg_feature_extractor.1} parent=5 // pred_region
        %s178 = ssub.s32 %s14, 1
        // Predicated region
        $region13: #{vgg_feature_extractor.1} parent=11 // pred_check
          %p179 = pneg %p73
        $region14: #{vgg_feature_extractor.1} parent=11 // pred_check_branch
          %181 = sbr.rel (%p179) target = $region16
        $region15: #{vgg_feature_extractor.1} parent=11 // pred_region
          _
        $region16: #{vgg_feature_extractor.1} parent=11 // pred_fallthru
          _
        // Predicated region
        $region17: #{vgg_feature_extractor.1} parent=11 // pred_check
          %p182 = pneg %p94
        $region18: #{vgg_feature_extractor.1} parent=11 // pred_check_branch
          %184 = sbr.rel (%p182) target = $region20
        $region19: #{vgg_feature_extractor.1} parent=11 // pred_region
          _
        $region20: #{vgg_feature_extractor.1} parent=11 // pred_fallthru
          _
        // Predicated region
        $region21: #{vgg_feature_extractor.1} parent=11 // pred_check
          %p185 = pneg %p115
        $region22: #{vgg_feature_extractor.1} parent=11 // pred_check_branch
          %187 = sbr.rel (%p185) target = $region24
        $region23: #{vgg_feature_extractor.1} parent=11 // pred_region
          _
        $region24: #{vgg_feature_extractor.1} parent=11 // pred_fallthru
          _
        // Predicated region
        $region25: #{vgg_feature_extractor.1} parent=11 // pred_check
          %p188 = pneg %p136
        $region26: #{vgg_feature_extractor.1} parent=11 // pred_check_branch
          %190 = sbr.rel (%p188) target = $region28
        $region27: #{vgg_feature_extractor.1} parent=11 // pred_region
          _
        $region28: #{vgg_feature_extractor.1} parent=11 // pred_fallthru
          _
      $region12: #{vgg_feature_extractor.1} parent=5 // pred_fallthru
        _
      %p191 = scmp.lt.s32.totalorder %s14, 4
      // Predicated region
      $region29: #{vgg_feature_extractor.1} parent=5 // pred_check
        %p192 = pneg %p191
      $region30: #{vgg_feature_extractor.1} parent=5 // pred_check_branch
        %194 = sbr.rel (%p192) target = $region32
      $region31: #{vgg_feature_extractor.1} parent=5 // pred_region
        // Predicated region
        $region33: #{vgg_feature_extractor.1} parent=31 // pred_check
          %p195 = pneg %p46
        $region34: #{vgg_feature_extractor.1} parent=31 // pred_check_branch
          %197 = sbr.rel (%p195) target = $region36
        $region35: #{vgg_feature_extractor.1} parent=31 // pred_region
          %p198 = scmp.lt.s32.totalorder %s21, 1
          %s199 = scalar_select %p198, %s21, 1
          %s200 = smul.addr %s199, 60
          %s201 = smul.addr %s200, 4
          %s202 = scalar_lea.vmem %s0, %s201
        $region36: #{vgg_feature_extractor.1} parent=31 // pred_fallthru
          _
      $region32: #{vgg_feature_extractor.1} parent=5 // pred_fallthru
        _
      %p203 = scmp.le.s32.totalorder 1, %s14
      %p204 = scmp.lt.s32.totalorder %s14, 5
      %p205 = pnand %p203, %p204
      %p206 = pneg %p205
      // Predicated region
      $region37: #{vgg_feature_extractor.1} parent=5 // pred_check
        _
      $region38: #{vgg_feature_extractor.1} parent=5 // pred_check_branch
        %208 = sbr.rel (%p205) target = $region40
      $region39: #{vgg_feature_extractor.1} parent=5 // pred_region
        %s209 = ssub.s32 %s14, 1
        %p210 = scmp.lt.s32.totalorder %s23, 1
        %s211 = scalar_select %p210, %s23, 1
        %s212 = smul.addr %s211, 60
        %s213 = smul.addr %s212, 4
        %s214 = scalar_lea.vmem %s0, %s213
        %p215 = pneg %p52
        %p216 = pneg %p49
        %p217 = pneg %p73
        %p218 = pneg %p70
        %p219 = pneg %p94
        %p220 = pneg %p91
        %p221 = pneg %p115
        %p222 = pneg %p112
        %p223 = pneg %p136
        %p224 = pneg %p133
        %p225 = pneg %p164
        %p226 = pneg %p161
        %s227 = sand.u32 %s151, 1
        %s228 = scalar_lea.sflag [#allocation5], %s227
        %s229 = sand.u32 %s151, 1
        %s230 = smul.addr %s229, 128
        %s231 = scalar_lea.vmem [#allocation4], %s230
        %p232 = scmp.lt.s32.totalorder %s23, 1
        %s233 = scalar_select %p232, %s23, 1
        %s234 = smul.addr %s233, 60
        %s235 = smul.addr %s234, 4
        %s236 = scalar_lea.vmem %s0, %s235
        %s237 = smul.u32 8, %s24
        %s239 = smul.u32 %s24, 8
        %s240 = smul.u32 %s239, 3
        %s241 = smul.addr %s240, 4
        %s242 = scalar_lea.vmem %s236, %s241
        %v243 = vld [vmem:[%s242] sm:$0xf]
        %v244 = vld [vmem:[%s242 + $0x4] sm:$0xf]
        %v245 = vld [vmem:[%s242 + $0x8] sm:$0x1]
        %v246 = vld [vmem:[%s242 + $0xc] sm:$0xf]
        %v247 = vld [vmem:[%s242 + $0x10] sm:$0xf]
        %v248 = vld [vmem:[%s242 + $0x14] sm:$0x1]
        %v249 = vld [vmem:[%s242 + $0x18] sm:$0xf]
        %v250 = vld [vmem:[%s242 + $0x1c] sm:$0xf]
        %v251 = vld [vmem:[%s242 + $0x20] sm:$0x1]
        %v252 = vld [vmem:[%s242 + $0x24] sm:$0xf]
        %v253 = vld [vmem:[%s242 + $0x28] sm:$0xf]
        %v254 = vld [vmem:[%s242 + $0x2c] sm:$0x1]
        %v255 = vld [vmem:[%s242 + $0x30] sm:$0xf]
        %v256 = vld [vmem:[%s242 + $0x34] sm:$0xf]
        %v257 = vld [vmem:[%s242 + $0x38] sm:$0x1]
        %v258 = vld [vmem:[%s242 + $0x3c] sm:$0xf]
        %v259 = vld [vmem:[%s242 + $0x40] sm:$0xf]
        %v260 = vld [vmem:[%s242 + $0x44] sm:$0x1]
        %v261 = vld [vmem:[%s242 + $0x48] sm:$0xf]
        %v262 = vld [vmem:[%s242 + $0x4c] sm:$0xf]
        %v263 = vld [vmem:[%s242 + $0x50] sm:$0x1]
        %v264 = vld [vmem:[%s242 + $0x54] sm:$0xf]
        %v265 = vld [vmem:[%s242 + $0x58] sm:$0xf]
        %v266 = vld [vmem:[%s242 + $0x5c] sm:$0x1]
        %v267 = vld [vmem:[%s242 + $0x60] sm:$0xf]
        %v268 = vld [vmem:[%s242 + $0x64] sm:$0xf]
        %v269 = vld [vmem:[%s242 + $0x68] sm:$0x1]
        %v270 = vld [vmem:[%s242 + $0x6c] sm:$0xf]
        %v271 = vld [vmem:[%s242 + $0x70] sm:$0xf]
        %v272 = vld [vmem:[%s242 + $0x74] sm:$0x1]
        %v303 = vunpack.c.l.b16 %v243
        %v304 = vunpack.c.l.b16 %v244
        %v305 = vunpack.c.l.b16 %v245
        %v306 = vunpack.c.l.b16 %v246
        %v307 = vunpack.c.l.b16 %v247
        %v308 = vunpack.c.l.b16 %v248
        %v309 = vunpack.c.l.b16 %v249
        %v310 = vunpack.c.l.b16 %v250
        %v311 = vunpack.c.l.b16 %v251
        %v312 = vunpack.c.l.b16 %v252
        %v313 = vunpack.c.l.b16 %v253
        %v314 = vunpack.c.l.b16 %v254
        %v315 = vunpack.c.l.b16 %v255
        %v316 = vunpack.c.l.b16 %v256
        %v317 = vunpack.c.l.b16 %v257
        %v318 = vunpack.c.l.b16 %v258
        %v319 = vunpack.c.l.b16 %v259
        %v320 = vunpack.c.l.b16 %v260
        %v321 = vunpack.c.l.b16 %v261
        %v322 = vunpack.c.l.b16 %v262
        %v323 = vunpack.c.l.b16 %v263
        %v324 = vunpack.c.l.b16 %v264
        %v325 = vunpack.c.l.b16 %v265
        %v326 = vunpack.c.l.b16 %v266
        %v327 = vunpack.c.l.b16 %v267
        %v328 = vunpack.c.l.b16 %v268
        %v329 = vunpack.c.l.b16 %v269
        %v330 = vunpack.c.l.b16 %v270
        %v331 = vunpack.c.l.b16 %v271
        %v332 = vunpack.c.l.b16 %v272
        %v333 = vpack.c.b16 %v304, %v303
        %v334 = vpack.c.b16 %v305, %v305
        %v335 = vpack.c.b16 %v307, %v306
        %v336 = vpack.c.b16 %v308, %v308
        %v337 = vpack.c.b16 %v310, %v309
        %v338 = vpack.c.b16 %v311, %v311
        %v339 = vpack.c.b16 %v313, %v312
        %v340 = vpack.c.b16 %v314, %v314
        %v341 = vpack.c.b16 %v316, %v315
        %v342 = vpack.c.b16 %v317, %v317
        %v343 = vpack.c.b16 %v319, %v318
        %v344 = vpack.c.b16 %v320, %v320
        %v345 = vpack.c.b16 %v322, %v321
        %v346 = vpack.c.b16 %v323, %v323
        %v347 = vpack.c.b16 %v325, %v324
        %v348 = vpack.c.b16 %v326, %v326
        %v349 = vpack.c.b16 %v328, %v327
        %v350 = vpack.c.b16 %v329, %v329
        %v351 = vpack.c.b16 %v331, %v330
        %v352 = vpack.c.b16 %v332, %v332
        %vm353 = vsmask.f32 7424
        %v355 = vshrl.u32 %v333, 16
        %v357 = vshll.u32 %v333, 16
        %v359 = vrot.slane %v357, 1
        %v360 = vor.u32 %v355, %v359
        %v362 = vshll.u32 %v334, 16
        %v364 = vrot.slane %v362, 1
        %v365 = vsel %vm353, %v360, %v364
        %v367 = vshrl.u32 %v335, 16
        %v369 = vshll.u32 %v335, 16
        %v371 = vrot.slane %v369, 1
        %v372 = vor.u32 %v367, %v371
        %v374 = vshll.u32 %v336, 16
        %v376 = vrot.slane %v374, 1
        %v377 = vsel %vm353, %v372, %v376
        %v379 = vshrl.u32 %v337, 16
        %v381 = vshll.u32 %v337, 16
        %v383 = vrot.slane %v381, 1
        %v384 = vor.u32 %v379, %v383
        %v386 = vshll.u32 %v338, 16
        %v388 = vrot.slane %v386, 1
        %v389 = vsel %vm353, %v384, %v388
        %v391 = vshrl.u32 %v339, 16
        %v393 = vshll.u32 %v339, 16
        %v395 = vrot.slane %v393, 1
        %v396 = vor.u32 %v391, %v395
        %v398 = vshll.u32 %v340, 16
        %v400 = vrot.slane %v398, 1
        %v401 = vsel %vm353, %v396, %v400
        %v403 = vshrl.u32 %v341, 16
        %v405 = vshll.u32 %v341, 16
        %v407 = vrot.slane %v405, 1
        %v408 = vor.u32 %v403, %v407
        %v410 = vshll.u32 %v342, 16
        %v412 = vrot.slane %v410, 1
        %v413 = vsel %vm353, %v408, %v412
        %v415 = vshrl.u32 %v343, 16
        %v417 = vshll.u32 %v343, 16
        %v419 = vrot.slane %v417, 1
        %v420 = vor.u32 %v415, %v419
        %v422 = vshll.u32 %v344, 16
        %v424 = vrot.slane %v422, 1
        %v425 = vsel %vm353, %v420, %v424
        %v427 = vshrl.u32 %v345, 16
        %v429 = vshll.u32 %v345, 16
        %v431 = vrot.slane %v429, 1
        %v432 = vor.u32 %v427, %v431
        %v434 = vshll.u32 %v346, 16
        %v436 = vrot.slane %v434, 1
        %v437 = vsel %vm353, %v432, %v436
        %v439 = vshrl.u32 %v347, 16
        %v441 = vshll.u32 %v347, 16
        %v443 = vrot.slane %v441, 1
        %v444 = vor.u32 %v439, %v443
        %v446 = vshll.u32 %v348, 16
        %v448 = vrot.slane %v446, 1
        %v449 = vsel %vm353, %v444, %v448
        %v451 = vshrl.u32 %v349, 16
        %v453 = vshll.u32 %v349, 16
        %v455 = vrot.slane %v453, 1
        %v456 = vor.u32 %v451, %v455
        %v458 = vshll.u32 %v350, 16
        %v460 = vrot.slane %v458, 1
        %v461 = vsel %vm353, %v456, %v460
        %v463 = vshrl.u32 %v351, 16
        %v465 = vshll.u32 %v351, 16
        %v467 = vrot.slane %v465, 1
        %v468 = vor.u32 %v463, %v467
        %v470 = vshll.u32 %v352, 16
        %v472 = vrot.slane %v470, 1
        %v473 = vsel %vm353, %v468, %v472
        %vm484 = vcmask 23552
        %485 = vst.msk [vmem:[#allocation2] sm:$0xff] %vm484, %v365
        %486 = vst.msk [vmem:[#allocation2 + $0x8] sm:$0xff] %vm484, %v377
        %487 = vst.msk [vmem:[#allocation2 + $0x10] sm:$0xff] %vm484, %v389
        %488 = vst.msk [vmem:[#allocation2 + $0x18] sm:$0xff] %vm484, %v401
        %489 = vst.msk [vmem:[#allocation2 + $0x20] sm:$0xff] %vm484, %v413
        %490 = vst.msk [vmem:[#allocation2 + $0x28] sm:$0xff] %vm484, %v425
        %491 = vst.msk [vmem:[#allocation2 + $0x30] sm:$0xff] %vm484, %v437
        %492 = vst.msk [vmem:[#allocation2 + $0x38] sm:$0xff] %vm484, %v449
        %493 = vst.msk [vmem:[#allocation2 + $0x40] sm:$0xff] %vm484, %v461
        %494 = vst.msk [vmem:[#allocation2 + $0x48] sm:$0xff] %vm484, %v473
        %v495 = vld [vmem:[%s242] sm:$0xe]
        %v496 = vld [vmem:[%s242 + $0x4] sm:$0xf]
        %v497 = vld [vmem:[%s242 + $0x8] sm:$0x1]
        %v498 = vld [vmem:[%s242 + $0xc] sm:$0xe]
        %v499 = vld [vmem:[%s242 + $0x10] sm:$0xf]
        %v500 = vld [vmem:[%s242 + $0x14] sm:$0x1]
        %v501 = vld [vmem:[%s242 + $0x18] sm:$0xe]
        %v502 = vld [vmem:[%s242 + $0x1c] sm:$0xf]
        %v503 = vld [vmem:[%s242 + $0x20] sm:$0x1]
        %v504 = vld [vmem:[%s242 + $0x24] sm:$0xe]
        %v505 = vld [vmem:[%s242 + $0x28] sm:$0xf]
        %v506 = vld [vmem:[%s242 + $0x2c] sm:$0x1]
        %v507 = vld [vmem:[%s242 + $0x30] sm:$0xe]
        %v508 = vld [vmem:[%s242 + $0x34] sm:$0xf]
        %v509 = vld [vmem:[%s242 + $0x38] sm:$0x1]
        %v510 = vld [vmem:[%s242 + $0x3c] sm:$0xe]
        %v511 = vld [vmem:[%s242 + $0x40] sm:$0xf]
        %v512 = vld [vmem:[%s242 + $0x44] sm:$0x1]
        %v513 = vld [vmem:[%s242 + $0x48] sm:$0xe]
        %v514 = vld [vmem:[%s242 + $0x4c] sm:$0xf]
        %v515 = vld [vmem:[%s242 + $0x50] sm:$0x1]
        %v516 = vld [vmem:[%s242 + $0x54] sm:$0xe]
        %v517 = vld [vmem:[%s242 + $0x58] sm:$0xf]
        %v518 = vld [vmem:[%s242 + $0x5c] sm:$0x1]
        %v519 = vld [vmem:[%s242 + $0x60] sm:$0xe]
        %v520 = vld [vmem:[%s242 + $0x64] sm:$0xf]
        %v521 = vld [vmem:[%s242 + $0x68] sm:$0x1]
        %v522 = vld [vmem:[%s242 + $0x6c] sm:$0xe]
        %v523 = vld [vmem:[%s242 + $0x70] sm:$0xf]
        %v524 = vld [vmem:[%s242 + $0x74] sm:$0x1]
        %v555 = vunpack.c.l.b16 %v495
        %v556 = vunpack.c.l.b16 %v496
        %v557 = vunpack.c.l.b16 %v497
        %v558 = vunpack.c.l.b16 %v498
        %v559 = vunpack.c.l.b16 %v499
        %v560 = vunpack.c.l.b16 %v500
        %v561 = vunpack.c.l.b16 %v501
        %v562 = vunpack.c.l.b16 %v502
        %v563 = vunpack.c.l.b16 %v503
        %v564 = vunpack.c.l.b16 %v504
        %v565 = vunpack.c.l.b16 %v505
        %v566 = vunpack.c.l.b16 %v506
        %v567 = vunpack.c.l.b16 %v507
        %v568 = vunpack.c.l.b16 %v508
        %v569 = vunpack.c.l.b16 %v509
        %v570 = vunpack.c.l.b16 %v510
        %v571 = vunpack.c.l.b16 %v511
        %v572 = vunpack.c.l.b16 %v512
        %v573 = vunpack.c.l.b16 %v513
        %v574 = vunpack.c.l.b16 %v514
        %v575 = vunpack.c.l.b16 %v515
        %v576 = vunpack.c.l.b16 %v516
        %v577 = vunpack.c.l.b16 %v517
        %v578 = vunpack.c.l.b16 %v518
        %v579 = vunpack.c.l.b16 %v519
        %v580 = vunpack.c.l.b16 %v520
        %v581 = vunpack.c.l.b16 %v521
        %v582 = vunpack.c.l.b16 %v522
        %v583 = vunpack.c.l.b16 %v523
        %v584 = vunpack.c.l.b16 %v524
        %v585 = vpack.c.b16 %v556, %v555
        %v586 = vpack.c.b16 %v557, %v557
        %v587 = vpack.c.b16 %v559, %v558
        %v588 = vpack.c.b16 %v560, %v560
        %v589 = vpack.c.b16 %v562, %v561
        %v590 = vpack.c.b16 %v563, %v563
        %v591 = vpack.c.b16 %v565, %v564
        %v592 = vpack.c.b16 %v566, %v566
        %v593 = vpack.c.b16 %v568, %v567
        %v594 = vpack.c.b16 %v569, %v569
        %v595 = vpack.c.b16 %v571, %v570
        %v596 = vpack.c.b16 %v572, %v572
        %v597 = vpack.c.b16 %v574, %v573
        %v598 = vpack.c.b16 %v575, %v575
        %v599 = vpack.c.b16 %v577, %v576
        %v600 = vpack.c.b16 %v578, %v578
        %v601 = vpack.c.b16 %v580, %v579
        %v602 = vpack.c.b16 %v581, %v581
        %v603 = vpack.c.b16 %v583, %v582
        %v604 = vpack.c.b16 %v584, %v584
        %vm605 = vcmask 1046528
        %v606 = vrot.slane %v585, 1
        %v607 = vrot.slane %v586, 1
        %v608 = vsel %vm605, %v606, %v607
        %v609 = vrot.slane %v587, 1
        %v610 = vrot.slane %v588, 1
        %v611 = vsel %vm605, %v609, %v610
        %v612 = vrot.slane %v589, 1
        %v613 = vrot.slane %v590, 1
        %v614 = vsel %vm605, %v612, %v613
        %v615 = vrot.slane %v591, 1
        %v616 = vrot.slane %v592, 1
        %v617 = vsel %vm605, %v615, %v616
        %v618 = vrot.slane %v593, 1
        %v619 = vrot.slane %v594, 1
        %v620 = vsel %vm605, %v618, %v619
        %v621 = vrot.slane %v595, 1
        %v622 = vrot.slane %v596, 1
        %v623 = vsel %vm605, %v621, %v622
        %v624 = vrot.slane %v597, 1
        %v625 = vrot.slane %v598, 1
        %v626 = vsel %vm605, %v624, %v625
        %v627 = vrot.slane %v599, 1
        %v628 = vrot.slane %v600, 1
        %v629 = vsel %vm605, %v627, %v628
        %v630 = vrot.slane %v601, 1
        %v631 = vrot.slane %v602, 1
        %v632 = vsel %vm605, %v630, %v631
        %v633 = vrot.slane %v603, 1
        %v634 = vrot.slane %v604, 1
        %v635 = vsel %vm605, %v633, %v634
        %636 = vrot.lane.b32.xlu0 %v608, 3
        %v637 = vpop.permute.xlu0 %636
        %638 = vrot.lane.b32.xlu0 %v611, 3
        %v639 = vpop.permute.xlu0 %638
        %640 = vrot.lane.b32.xlu0 %v614, 3
        %v641 = vpop.permute.xlu0 %640
        %642 = vrot.lane.b32.xlu0 %v617, 3
        %v643 = vpop.permute.xlu0 %642
        %644 = vrot.lane.b32.xlu0 %v620, 3
        %v645 = vpop.permute.xlu0 %644
        %646 = vrot.lane.b32.xlu0 %v623, 3
        %v647 = vpop.permute.xlu0 %646
        %648 = vrot.lane.b32.xlu0 %v626, 3
        %v649 = vpop.permute.xlu0 %648
        %650 = vrot.lane.b32.xlu0 %v629, 3
        %v651 = vpop.permute.xlu0 %650
        %652 = vrot.lane.b32.xlu0 %v632, 3
        %v653 = vpop.permute.xlu0 %652
        %654 = vrot.lane.b32.xlu0 %v635, 3
        %v655 = vpop.permute.xlu0 %654
        %vm666 = vcmask 48152
        %667 = vst.msk [vmem:[#allocation2] sm:$0xff] %vm666, %v637
        %668 = vst.msk [vmem:[#allocation2 + $0x8] sm:$0xff] %vm666, %v639
        %669 = vst.msk [vmem:[#allocation2 + $0x10] sm:$0xff] %vm666, %v641
        %670 = vst.msk [vmem:[#allocation2 + $0x18] sm:$0xff] %vm666, %v643
        %671 = vst.msk [vmem:[#allocation2 + $0x20] sm:$0xff] %vm666, %v645
        %672 = vst.msk [vmem:[#allocation2 + $0x28] sm:$0xff] %vm666, %v647
        %673 = vst.msk [vmem:[#allocation2 + $0x30] sm:$0xff] %vm666, %v649
        %674 = vst.msk [vmem:[#allocation2 + $0x38] sm:$0xff] %vm666, %v651
        %675 = vst.msk [vmem:[#allocation2 + $0x40] sm:$0xff] %vm666, %v653
        %676 = vst.msk [vmem:[#allocation2 + $0x48] sm:$0xff] %vm666, %v655
        %v677 = vld [vmem:[%s242] sm:$0xe]
        %v678 = vld [vmem:[%s242 + $0x4] sm:$0xf]
        %v679 = vld [vmem:[%s242 + $0x8] sm:$0x3]
        %v680 = vld [vmem:[%s242 + $0xc] sm:$0xe]
        %v681 = vld [vmem:[%s242 + $0x10] sm:$0xf]
        %v682 = vld [vmem:[%s242 + $0x14] sm:$0x3]
        %v683 = vld [vmem:[%s242 + $0x18] sm:$0xe]
        %v684 = vld [vmem:[%s242 + $0x1c] sm:$0xf]
        %v685 = vld [vmem:[%s242 + $0x20] sm:$0x3]
        %v686 = vld [vmem:[%s242 + $0x24] sm:$0xe]
        %v687 = vld [vmem:[%s242 + $0x28] sm:$0xf]
        %v688 = vld [vmem:[%s242 + $0x2c] sm:$0x3]
        %v689 = vld [vmem:[%s242 + $0x30] sm:$0xe]
        %v690 = vld [vmem:[%s242 + $0x34] sm:$0xf]
        %v691 = vld [vmem:[%s242 + $0x38] sm:$0x3]
        %v692 = vld [vmem:[%s242 + $0x3c] sm:$0xe]
        %v693 = vld [vmem:[%s242 + $0x40] sm:$0xf]
        %v694 = vld [vmem:[%s242 + $0x44] sm:$0x3]
        %v695 = vld [vmem:[%s242 + $0x48] sm:$0xe]
        %v696 = vld [vmem:[%s242 + $0x4c] sm:$0xf]
        %v697 = vld [vmem:[%s242 + $0x50] sm:$0x3]
        %v698 = vld [vmem:[%s242 + $0x54] sm:$0xe]
        %v699 = vld [vmem:[%s242 + $0x58] sm:$0xf]
        %v700 = vld [vmem:[%s242 + $0x5c] sm:$0x3]
        %v701 = vld [vmem:[%s242 + $0x60] sm:$0xe]
        %v702 = vld [vmem:[%s242 + $0x64] sm:$0xf]
        %v703 = vld [vmem:[%s242 + $0x68] sm:$0x3]
        %v704 = vld [vmem:[%s242 + $0x6c] sm:$0xe]
        %v705 = vld [vmem:[%s242 + $0x70] sm:$0xf]
        %v706 = vld [vmem:[%s242 + $0x74] sm:$0x3]
        %v737 = vunpack.c.l.b16 %v677
        %v738 = vunpack.c.l.b16 %v678
        %v739 = vunpack.c.l.b16 %v679
        %v740 = vunpack.c.l.b16 %v680
        %v741 = vunpack.c.l.b16 %v681
        %v742 = vunpack.c.l.b16 %v682
        %v743 = vunpack.c.l.b16 %v683
        %v744 = vunpack.c.l.b16 %v684
        %v745 = vunpack.c.l.b16 %v685
        %v746 = vunpack.c.l.b16 %v686
        %v747 = vunpack.c.l.b16 %v687
        %v748 = vunpack.c.l.b16 %v688
        %v749 = vunpack.c.l.b16 %v689
        %v750 = vunpack.c.l.b16 %v690
        %v751 = vunpack.c.l.b16 %v691
        %v752 = vunpack.c.l.b16 %v692
        %v753 = vunpack.c.l.b16 %v693
        %v754 = vunpack.c.l.b16 %v694
        %v755 = vunpack.c.l.b16 %v695
        %v756 = vunpack.c.l.b16 %v696
        %v757 = vunpack.c.l.b16 %v697
        %v758 = vunpack.c.l.b16 %v698
        %v759 = vunpack.c.l.b16 %v699
        %v760 = vunpack.c.l.b16 %v700
        %v761 = vunpack.c.l.b16 %v701
        %v762 = vunpack.c.l.b16 %v702
        %v763 = vunpack.c.l.b16 %v703
        %v764 = vunpack.c.l.b16 %v704
        %v765 = vunpack.c.l.b16 %v705
        %v766 = vunpack.c.l.b16 %v706
        %v767 = vpack.c.b16 %v738, %v737
        %v768 = vpack.c.b16 %v739, %v739
        %v769 = vpack.c.b16 %v741, %v740
        %v770 = vpack.c.b16 %v742, %v742
        %v771 = vpack.c.b16 %v744, %v743
        %v772 = vpack.c.b16 %v745, %v745
        %v773 = vpack.c.b16 %v747, %v746
        %v774 = vpack.c.b16 %v748, %v748
        %v775 = vpack.c.b16 %v750, %v749
        %v776 = vpack.c.b16 %v751, %v751
        %v777 = vpack.c.b16 %v753, %v752
        %v778 = vpack.c.b16 %v754, %v754
        %v779 = vpack.c.b16 %v756, %v755
        %v780 = vpack.c.b16 %v757, %v757
        %v781 = vpack.c.b16 %v759, %v758
        %v782 = vpack.c.b16 %v760, %v760
        %v783 = vpack.c.b16 %v762, %v761
        %v784 = vpack.c.b16 %v763, %v763
        %v785 = vpack.c.b16 %v765, %v764
        %v786 = vpack.c.b16 %v766, %v766
        %vm787 = vsmask.f32 6400
        %v789 = vshrl.u32 %v767, 16
        %v791 = vrot.slane %v789, 1
        %v792 = vshll.u32 %v767, 16
        %v794 = vrot.slane %v792, 2
        %v795 = vor.u32 %v791, %v794
        %v797 = vshrl.u32 %v768, 16
        %v799 = vrot.slane %v797, 1
        %v800 = vshll.u32 %v768, 16
        %v802 = vrot.slane %v800, 2
        %v803 = vor.u32 %v799, %v802
        %v804 = vsel %vm787, %v795, %v803
        %v806 = vshrl.u32 %v769, 16
        %v808 = vrot.slane %v806, 1
        %v809 = vshll.u32 %v769, 16
        %v811 = vrot.slane %v809, 2
        %v812 = vor.u32 %v808, %v811
        %v814 = vshrl.u32 %v770, 16
        %v816 = vrot.slane %v814, 1
        %v817 = vshll.u32 %v770, 16
        %v819 = vrot.slane %v817, 2
        %v820 = vor.u32 %v816, %v819
        %v821 = vsel %vm787, %v812, %v820
        %v823 = vshrl.u32 %v771, 16
        %v825 = vrot.slane %v823, 1
        %v826 = vshll.u32 %v771, 16
        %v828 = vrot.slane %v826, 2
        %v829 = vor.u32 %v825, %v828
        %v831 = vshrl.u32 %v772, 16
        %v833 = vrot.slane %v831, 1
        %v834 = vshll.u32 %v772, 16
        %v836 = vrot.slane %v834, 2
        %v837 = vor.u32 %v833, %v836
        %v838 = vsel %vm787, %v829, %v837
        %v840 = vshrl.u32 %v773, 16
        %v842 = vrot.slane %v840, 1
        %v843 = vshll.u32 %v773, 16
        %v845 = vrot.slane %v843, 2
        %v846 = vor.u32 %v842, %v845
        %v848 = vshrl.u32 %v774, 16
        %v850 = vrot.slane %v848, 1
        %v851 = vshll.u32 %v774, 16
        %v853 = vrot.slane %v851, 2
        %v854 = vor.u32 %v850, %v853
        %v855 = vsel %vm787, %v846, %v854
        %v857 = vshrl.u32 %v775, 16
        %v859 = vrot.slane %v857, 1
        %v860 = vshll.u32 %v775, 16
        %v862 = vrot.slane %v860, 2
        %v863 = vor.u32 %v859, %v862
        %v865 = vshrl.u32 %v776, 16
        %v867 = vrot.slane %v865, 1
        %v868 = vshll.u32 %v776, 16
        %v870 = vrot.slane %v868, 2
        %v871 = vor.u32 %v867, %v870
        %v872 = vsel %vm787, %v863, %v871
        %v874 = vshrl.u32 %v777, 16
        %v876 = vrot.slane %v874, 1
        %v877 = vshll.u32 %v777, 16
        %v879 = vrot.slane %v877, 2
        %v880 = vor.u32 %v876, %v879
        %v882 = vshrl.u32 %v778, 16
        %v884 = vrot.slane %v882, 1
        %v885 = vshll.u32 %v778, 16
        %v887 = vrot.slane %v885, 2
        %v888 = vor.u32 %v884, %v887
        %v889 = vsel %vm787, %v880, %v888
        %v891 = vshrl.u32 %v779, 16
        %v893 = vrot.slane %v891, 1
        %v894 = vshll.u32 %v779, 16
        %v896 = vrot.slane %v894, 2
        %v897 = vor.u32 %v893, %v896
        %v899 = vshrl.u32 %v780, 16
        %v901 = vrot.slane %v899, 1
        %v902 = vshll.u32 %v780, 16
        %v904 = vrot.slane %v902, 2
        %v905 = vor.u32 %v901, %v904
        %v906 = vsel %vm787, %v897, %v905
        %v908 = vshrl.u32 %v781, 16
        %v910 = vrot.slane %v908, 1
        %v911 = vshll.u32 %v781, 16
        %v913 = vrot.slane %v911, 2
        %v914 = vor.u32 %v910, %v913
        %v916 = vshrl.u32 %v782, 16
        %v918 = vrot.slane %v916, 1
        %v919 = vshll.u32 %v782, 16
        %v921 = vrot.slane %v919, 2
        %v922 = vor.u32 %v918, %v921
        %v923 = vsel %vm787, %v914, %v922
        %v925 = vshrl.u32 %v783, 16
        %v927 = vrot.slane %v925, 1
        %v928 = vshll.u32 %v783, 16
        %v930 = vrot.slane %v928, 2
        %v931 = vor.u32 %v927, %v930
        %v933 = vshrl.u32 %v784, 16
        %v935 = vrot.slane %v933, 1
        %v936 = vshll.u32 %v784, 16
        %v938 = vrot.slane %v936, 2
        %v939 = vor.u32 %v935, %v938
        %v940 = vsel %vm787, %v931, %v939
        %v942 = vshrl.u32 %v785, 16
        %v944 = vrot.slane %v942, 1
        %v945 = vshll.u32 %v785, 16
        %v947 = vrot.slane %v945, 2
        %v948 = vor.u32 %v944, %v947
        %v950 = vshrl.u32 %v786, 16
        %v952 = vrot.slane %v950, 1
        %v953 = vshll.u32 %v786, 16
        %v955 = vrot.slane %v953, 2
        %v956 = vor.u32 %v952, %v955
        %v957 = vsel %vm787, %v948, %v956
        %958 = vrot.lane.b32.xlu0 %v804, 6
        %v959 = vpop.permute.xlu0 %958
        %960 = vrot.lane.b32.xlu0 %v821, 6
        %v961 = vpop.permute.xlu0 %960
        %962 = vrot.lane.b32.xlu0 %v838, 6
        %v963 = vpop.permute.xlu0 %962
        %964 = vrot.lane.b32.xlu0 %v855, 6
        %v965 = vpop.permute.xlu0 %964
        %966 = vrot.lane.b32.xlu0 %v872, 6
        %v967 = vpop.permute.xlu0 %966
        %968 = vrot.lane.b32.xlu0 %v889, 6
        %v969 = vpop.permute.xlu0 %968
        %970 = vrot.lane.b32.xlu0 %v906, 6
        %v971 = vpop.permute.xlu0 %970
        %972 = vrot.lane.b32.xlu0 %v923, 6
        %v973 = vpop.permute.xlu0 %972
        %974 = vrot.lane.b32.xlu0 %v940, 6
        %v975 = vpop.permute.xlu0 %974
        %976 = vrot.lane.b32.xlu0 %v957, 6
        %v977 = vpop.permute.xlu0 %976
        %vm988 = vcmask 72752
        %989 = vst.msk [vmem:[#allocation2] sm:$0xff] %vm988, %v959
        %990 = vst.msk [vmem:[#allocation2 + $0x8] sm:$0xff] %vm988, %v961
        %991 = vst.msk [vmem:[#allocation2 + $0x10] sm:$0xff] %vm988, %v963
        %992 = vst.msk [vmem:[#allocation2 + $0x18] sm:$0xff] %vm988, %v965
        %993 = vst.msk [vmem:[#allocation2 + $0x20] sm:$0xff] %vm988, %v967
        %994 = vst.msk [vmem:[#allocation2 + $0x28] sm:$0xff] %vm988, %v969
        %995 = vst.msk [vmem:[#allocation2 + $0x30] sm:$0xff] %vm988, %v971
        %996 = vst.msk [vmem:[#allocation2 + $0x38] sm:$0xff] %vm988, %v973
        %997 = vst.msk [vmem:[#allocation2 + $0x40] sm:$0xff] %vm988, %v975
        %998 = vst.msk [vmem:[#allocation2 + $0x48] sm:$0xff] %vm988, %v977
        %s999 = sadd.s32 %s239, 1
        %s1000 = smul.u32 %s999, 3
        %s1001 = smul.addr %s1000, 4
        %s1002 = scalar_lea.vmem %s236, %s1001
        %v1003 = vld [vmem:[%s1002] sm:$0xf]
        %v1004 = vld [vmem:[%s1002 + $0x4] sm:$0xf]
        %v1005 = vld [vmem:[%s1002 + $0x8] sm:$0x1]
        %v1006 = vld [vmem:[%s1002 + $0xc] sm:$0xf]
        %v1007 = vld [vmem:[%s1002 + $0x10] sm:$0xf]
        %v1008 = vld [vmem:[%s1002 + $0x14] sm:$0x1]
        %v1009 = vld [vmem:[%s1002 + $0x18] sm:$0xf]
        %v1010 = vld [vmem:[%s1002 + $0x1c] sm:$0xf]
        %v1011 = vld [vmem:[%s1002 + $0x20] sm:$0x1]
        %v1012 = vld [vmem:[%s1002 + $0x24] sm:$0xf]
        %v1013 = vld [vmem:[%s1002 + $0x28] sm:$0xf]
        %v1014 = vld [vmem:[%s1002 + $0x2c] sm:$0x1]
        %v1015 = vld [vmem:[%s1002 + $0x30] sm:$0xf]
        %v1016 = vld [vmem:[%s1002 + $0x34] sm:$0xf]
        %v1017 = vld [vmem:[%s1002 + $0x38] sm:$0x1]
        %v1018 = vld [vmem:[%s1002 + $0x3c] sm:$0xf]
        %v1019 = vld [vmem:[%s1002 + $0x40] sm:$0xf]
        %v1020 = vld [vmem:[%s1002 + $0x44] sm:$0x1]
        %v1021 = vld [vmem:[%s1002 + $0x48] sm:$0xf]
        %v1022 = vld [vmem:[%s1002 + $0x4c] sm:$0xf]
        %v1023 = vld [vmem:[%s1002 + $0x50] sm:$0x1]
        %v1024 = vld [vmem:[%s1002 + $0x54] sm:$0xf]
        %v1025 = vld [vmem:[%s1002 + $0x58] sm:$0xf]
        %v1026 = vld [vmem:[%s1002 + $0x5c] sm:$0x1]
        %v1027 = vld [vmem:[%s1002 + $0x60] sm:$0xf]
        %v1028 = vld [vmem:[%s1002 + $0x64] sm:$0xf]
        %v1029 = vld [vmem:[%s1002 + $0x68] sm:$0x1]
        %v1030 = vld [vmem:[%s1002 + $0x6c] sm:$0xf]
        %v1031 = vld [vmem:[%s1002 + $0x70] sm:$0xf]
        %v1032 = vld [vmem:[%s1002 + $0x74] sm:$0x1]
        %v1063 = vunpack.c.l.b16 %v1003
        %v1064 = vunpack.c.l.b16 %v1004
        %v1065 = vunpack.c.l.b16 %v1005
        %v1066 = vunpack.c.l.b16 %v1006
        %v1067 = vunpack.c.l.b16 %v1007
        %v1068 = vunpack.c.l.b16 %v1008
        %v1069 = vunpack.c.l.b16 %v1009
        %v1070 = vunpack.c.l.b16 %v1010
        %v1071 = vunpack.c.l.b16 %v1011
        %v1072 = vunpack.c.l.b16 %v1012
        %v1073 = vunpack.c.l.b16 %v1013
        %v1074 = vunpack.c.l.b16 %v1014
        %v1075 = vunpack.c.l.b16 %v1015
        %v1076 = vunpack.c.l.b16 %v1016
        %v1077 = vunpack.c.l.b16 %v1017
        %v1078 = vunpack.c.l.b16 %v1018
        %v1079 = vunpack.c.l.b16 %v1019
        %v1080 = vunpack.c.l.b16 %v1020
        %v1081 = vunpack.c.l.b16 %v1021
        %v1082 = vunpack.c.l.b16 %v1022
        %v1083 = vunpack.c.l.b16 %v1023
        %v1084 = vunpack.c.l.b16 %v1024
        %v1085 = vunpack.c.l.b16 %v1025
        %v1086 = vunpack.c.l.b16 %v1026
        %v1087 = vunpack.c.l.b16 %v1027
        %v1088 = vunpack.c.l.b16 %v1028
        %v1089 = vunpack.c.l.b16 %v1029
        %v1090 = vunpack.c.l.b16 %v1030
        %v1091 = vunpack.c.l.b16 %v1031
        %v1092 = vunpack.c.l.b16 %v1032
        %v1093 = vpack.c.b16 %v1064, %v1063
        %v1094 = vpack.c.b16 %v1065, %v1065
        %v1095 = vpack.c.b16 %v1067, %v1066
        %v1096 = vpack.c.b16 %v1068, %v1068
        %v1097 = vpack.c.b16 %v1070, %v1069
        %v1098 = vpack.c.b16 %v1071, %v1071
        %v1099 = vpack.c.b16 %v1073, %v1072
        %v1100 = vpack.c.b16 %v1074, %v1074
        %v1101 = vpack.c.b16 %v1076, %v1075
        %v1102 = vpack.c.b16 %v1077, %v1077
        %v1103 = vpack.c.b16 %v1079, %v1078
        %v1104 = vpack.c.b16 %v1080, %v1080
        %v1105 = vpack.c.b16 %v1082, %v1081
        %v1106 = vpack.c.b16 %v1083, %v1083
        %v1107 = vpack.c.b16 %v1085, %v1084
        %v1108 = vpack.c.b16 %v1086, %v1086
        %v1109 = vpack.c.b16 %v1088, %v1087
        %v1110 = vpack.c.b16 %v1089, %v1089
        %v1111 = vpack.c.b16 %v1091, %v1090
        %v1112 = vpack.c.b16 %v1092, %v1092
        %v1114 = vshrl.u32 %v1093, 16
        %v1116 = vshll.u32 %v1093, 16
        %v1118 = vrot.slane %v1116, 1
        %v1119 = vor.u32 %v1114, %v1118
        %v1121 = vshll.u32 %v1094, 16
        %v1123 = vrot.slane %v1121, 1
        %v1124 = vsel %vm353, %v1119, %v1123
        %v1126 = vshrl.u32 %v1095, 16
        %v1128 = vshll.u32 %v1095, 16
        %v1130 = vrot.slane %v1128, 1
        %v1131 = vor.u32 %v1126, %v1130
        %v1133 = vshll.u32 %v1096, 16
        %v1135 = vrot.slane %v1133, 1
        %v1136 = vsel %vm353, %v1131, %v1135
        %v1138 = vshrl.u32 %v1097, 16
        %v1140 = vshll.u32 %v1097, 16
        %v1142 = vrot.slane %v1140, 1
        %v1143 = vor.u32 %v1138, %v1142
        %v1145 = vshll.u32 %v1098, 16
        %v1147 = vrot.slane %v1145, 1
        %v1148 = vsel %vm353, %v1143, %v1147
        %v1150 = vshrl.u32 %v1099, 16
        %v1152 = vshll.u32 %v1099, 16
        %v1154 = vrot.slane %v1152, 1
        %v1155 = vor.u32 %v1150, %v1154
        %v1157 = vshll.u32 %v1100, 16
        %v1159 = vrot.slane %v1157, 1
        %v1160 = vsel %vm353, %v1155, %v1159
        %v1162 = vshrl.u32 %v1101, 16
        %v1164 = vshll.u32 %v1101, 16
        %v1166 = vrot.slane %v1164, 1
        %v1167 = vor.u32 %v1162, %v1166
        %v1169 = vshll.u32 %v1102, 16
        %v1171 = vrot.slane %v1169, 1
        %v1172 = vsel %vm353, %v1167, %v1171
        %v1174 = vshrl.u32 %v1103, 16
        %v1176 = vshll.u32 %v1103, 16
        %v1178 = vrot.slane %v1176, 1
        %v1179 = vor.u32 %v1174, %v1178
        %v1181 = vshll.u32 %v1104, 16
        %v1183 = vrot.slane %v1181, 1
        %v1184 = vsel %vm353, %v1179, %v1183
        %v1186 = vshrl.u32 %v1105, 16
        %v1188 = vshll.u32 %v1105, 16
        %v1190 = vrot.slane %v1188, 1
        %v1191 = vor.u32 %v1186, %v1190
        %v1193 = vshll.u32 %v1106, 16
        %v1195 = vrot.slane %v1193, 1
        %v1196 = vsel %vm353, %v1191, %v1195
        %v1198 = vshrl.u32 %v1107, 16
        %v1200 = vshll.u32 %v1107, 16
        %v1202 = vrot.slane %v1200, 1
        %v1203 = vor.u32 %v1198, %v1202
        %v1205 = vshll.u32 %v1108, 16
        %v1207 = vrot.slane %v1205, 1
        %v1208 = vsel %vm353, %v1203, %v1207
        %v1210 = vshrl.u32 %v1109, 16
        %v1212 = vshll.u32 %v1109, 16
        %v1214 = vrot.slane %v1212, 1
        %v1215 = vor.u32 %v1210, %v1214
        %v1217 = vshll.u32 %v1110, 16
        %v1219 = vrot.slane %v1217, 1
        %v1220 = vsel %vm353, %v1215, %v1219
        %v1222 = vshrl.u32 %v1111, 16
        %v1224 = vshll.u32 %v1111, 16
        %v1226 = vrot.slane %v1224, 1
        %v1227 = vor.u32 %v1222, %v1226
        %v1229 = vshll.u32 %v1112, 16
        %v1231 = vrot.slane %v1229, 1
        %v1232 = vsel %vm353, %v1227, %v1231
        %1233 = vrot.lane.b32.xlu0 %v1124, 9
        %v1234 = vpop.permute.xlu0 %1233
        %1235 = vrot.lane.b32.xlu0 %v1136, 9
        %v1236 = vpop.permute.xlu0 %1235
        %1237 = vrot.lane.b32.xlu0 %v1148, 9
        %v1238 = vpop.permute.xlu0 %1237
        %1239 = vrot.lane.b32.xlu0 %v1160, 9
        %v1240 = vpop.permute.xlu0 %1239
        %1241 = vrot.lane.b32.xlu0 %v1172, 9
        %v1242 = vpop.permute.xlu0 %1241
        %1243 = vrot.lane.b32.xlu0 %v1184, 9
        %v1244 = vpop.permute.xlu0 %1243
        %1245 = vrot.lane.b32.xlu0 %v1196, 9
        %v1246 = vpop.permute.xlu0 %1245
        %1247 = vrot.lane.b32.xlu0 %v1208, 9
        %v1248 = vpop.permute.xlu0 %1247
        %1249 = vrot.lane.b32.xlu0 %v1220, 9
        %v1250 = vpop.permute.xlu0 %1249
        %1251 = vrot.lane.b32.xlu0 %v1232, 9
        %v1252 = vpop.permute.xlu0 %1251
        %vm1263 = vcmask 97352
        %1264 = vst.msk [vmem:[#allocation2] sm:$0xff] %vm1263, %v1234
        %1265 = vst.msk [vmem:[#allocation2 + $0x8] sm:$0xff] %vm1263, %v1236
        %1266 = vst.msk [vmem:[#allocation2 + $0x10] sm:$0xff] %vm1263, %v1238
        %1267 = vst.msk [vmem:[#allocation2 + $0x18] sm:$0xff] %vm1263, %v1240
        %1268 = vst.msk [vmem:[#allocation2 + $0x20] sm:$0xff] %vm1263, %v1242
        %1269 = vst.msk [vmem:[#allocation2 + $0x28] sm:$0xff] %vm1263, %v1244
        %1270 = vst.msk [vmem:[#allocation2 + $0x30] sm:$0xff] %vm1263, %v1246
        %1271 = vst.msk [vmem:[#allocation2 + $0x38] sm:$0xff] %vm1263, %v1248
        %1272 = vst.msk [vmem:[#allocation2 + $0x40] sm:$0xff] %vm1263, %v1250
        %1273 = vst.msk [vmem:[#allocation2 + $0x48] sm:$0xff] %vm1263, %v1252
        %v1274 = vld [vmem:[%s1002] sm:$0xe]
        %v1275 = vld [vmem:[%s1002 + $0x4] sm:$0xf]
        %v1276 = vld [vmem:[%s1002 + $0x8] sm:$0x1]
        %v1277 = vld [vmem:[%s1002 + $0xc] sm:$0xe]
        %v1278 = vld [vmem:[%s1002 + $0x10] sm:$0xf]
        %v1279 = vld [vmem:[%s1002 + $0x14] sm:$0x1]
        %v1280 = vld [vmem:[%s1002 + $0x18] sm:$0xe]
        %v1281 = vld [vmem:[%s1002 + $0x1c] sm:$0xf]
        %v1282 = vld [vmem:[%s1002 + $0x20] sm:$0x1]
        %v1283 = vld [vmem:[%s1002 + $0x24] sm:$0xe]
        %v1284 = vld [vmem:[%s1002 + $0x28] sm:$0xf]
        %v1285 = vld [vmem:[%s1002 + $0x2c] sm:$0x1]
        %v1286 = vld [vmem:[%s1002 + $0x30] sm:$0xe]
        %v1287 = vld [vmem:[%s1002 + $0x34] sm:$0xf]
        %v1288 = vld [vmem:[%s1002 + $0x38] sm:$0x1]
        %v1289 = vld [vmem:[%s1002 + $0x3c] sm:$0xe]
        %v1290 = vld [vmem:[%s1002 + $0x40] sm:$0xf]
        %v1291 = vld [vmem:[%s1002 + $0x44] sm:$0x1]
        %v1292 = vld [vmem:[%s1002 + $0x48] sm:$0xe]
        %v1293 = vld [vmem:[%s1002 + $0x4c] sm:$0xf]
        %v1294 = vld [vmem:[%s1002 + $0x50] sm:$0x1]
        %v1295 = vld [vmem:[%s1002 + $0x54] sm:$0xe]
        %v1296 = vld [vmem:[%s1002 + $0x58] sm:$0xf]
        %v1297 = vld [vmem:[%s1002 + $0x5c] sm:$0x1]
        %v1298 = vld [vmem:[%s1002 + $0x60] sm:$0xe]
        %v1299 = vld [vmem:[%s1002 + $0x64] sm:$0xf]
        %v1300 = vld [vmem:[%s1002 + $0x68] sm:$0x1]
        %v1301 = vld [vmem:[%s1002 + $0x6c] sm:$0xe]
        %v1302 = vld [vmem:[%s1002 + $0x70] sm:$0xf]
        %v1303 = vld [vmem:[%s1002 + $0x74] sm:$0x1]
        %v1334 = vunpack.c.l.b16 %v1274
        %v1335 = vunpack.c.l.b16 %v1275
        %v1336 = vunpack.c.l.b16 %v1276
        %v1337 = vunpack.c.l.b16 %v1277
        %v1338 = vunpack.c.l.b16 %v1278
        %v1339 = vunpack.c.l.b16 %v1279
        %v1340 = vunpack.c.l.b16 %v1280
        %v1341 = vunpack.c.l.b16 %v1281
        %v1342 = vunpack.c.l.b16 %v1282
        %v1343 = vunpack.c.l.b16 %v1283
        %v1344 = vunpack.c.l.b16 %v1284
        %v1345 = vunpack.c.l.b16 %v1285
        %v1346 = vunpack.c.l.b16 %v1286
        %v1347 = vunpack.c.l.b16 %v1287
        %v1348 = vunpack.c.l.b16 %v1288
        %v1349 = vunpack.c.l.b16 %v1289
        %v1350 = vunpack.c.l.b16 %v1290
        %v1351 = vunpack.c.l.b16 %v1291
        %v1352 = vunpack.c.l.b16 %v1292
        %v1353 = vunpack.c.l.b16 %v1293
        %v1354 = vunpack.c.l.b16 %v1294
        %v1355 = vunpack.c.l.b16 %v1295
        %v1356 = vunpack.c.l.b16 %v1296
        %v1357 = vunpack.c.l.b16 %v1297
        %v1358 = vunpack.c.l.b16 %v1298
        %v1359 = vunpack.c.l.b16 %v1299
        %v1360 = vunpack.c.l.b16 %v1300
        %v1361 = vunpack.c.l.b16 %v1301
        %v1362 = vunpack.c.l.b16 %v1302
        %v1363 = vunpack.c.l.b16 %v1303
        %v1364 = vpack.c.b16 %v1335, %v1334
        %v1365 = vpack.c.b16 %v1336, %v1336
        %v1366 = vpack.c.b16 %v1338, %v1337
        %v1367 = vpack.c.b16 %v1339, %v1339
        %v1368 = vpack.c.b16 %v1341, %v1340
        %v1369 = vpack.c.b16 %v1342, %v1342
        %v1370 = vpack.c.b16 %v1344, %v1343
        %v1371 = vpack.c.b16 %v1345, %v1345
        %v1372 = vpack.c.b16 %v1347, %v1346
        %v1373 = vpack.c.b16 %v1348, %v1348
        %v1374 = vpack.c.b16 %v1350, %v1349
        %v1375 = vpack.c.b16 %v1351, %v1351
        %v1376 = vpack.c.b16 %v1353, %v1352
        %v1377 = vpack.c.b16 %v1354, %v1354
        %v1378 = vpack.c.b16 %v1356, %v1355
        %v1379 = vpack.c.b16 %v1357, %v1357
        %v1380 = vpack.c.b16 %v1359, %v1358
        %v1381 = vpack.c.b16 %v1360, %v1360
        %v1382 = vpack.c.b16 %v1362, %v1361
        %v1383 = vpack.c.b16 %v1363, %v1363
        %v1384 = vrot.slane %v1364, 1
        %v1385 = vrot.slane %v1365, 1
        %v1386 = vsel %vm605, %v1384, %v1385
        %v1387 = vrot.slane %v1366, 1
        %v1388 = vrot.slane %v1367, 1
        %v1389 = vsel %vm605, %v1387, %v1388
        %v1390 = vrot.slane %v1368, 1
        %v1391 = vrot.slane %v1369, 1
        %v1392 = vsel %vm605, %v1390, %v1391
        %v1393 = vrot.slane %v1370, 1
        %v1394 = vrot.slane %v1371, 1
        %v1395 = vsel %vm605, %v1393, %v1394
        %v1396 = vrot.slane %v1372, 1
        %v1397 = vrot.slane %v1373, 1
        %v1398 = vsel %vm605, %v1396, %v1397
        %v1399 = vrot.slane %v1374, 1
        %v1400 = vrot.slane %v1375, 1
        %v1401 = vsel %vm605, %v1399, %v1400
        %v1402 = vrot.slane %v1376, 1
        %v1403 = vrot.slane %v1377, 1
        %v1404 = vsel %vm605, %v1402, %v1403
        %v1405 = vrot.slane %v1378, 1
        %v1406 = vrot.slane %v1379, 1
        %v1407 = vsel %vm605, %v1405, %v1406
        %v1408 = vrot.slane %v1380, 1
        %v1409 = vrot.slane %v1381, 1
        %v1410 = vsel %vm605, %v1408, %v1409
        %v1411 = vrot.slane %v1382, 1
        %v1412 = vrot.slane %v1383, 1
        %v1413 = vsel %vm605, %v1411, %v1412
        %1414 = vrot.lane.b32.xlu0 %v1386, 12
        %v1415 = vpop.permute.xlu0 %1414
        %1416 = vrot.lane.b32.xlu0 %v1389, 12
        %v1417 = vpop.permute.xlu0 %1416
        %1418 = vrot.lane.b32.xlu0 %v1392, 12
        %v1419 = vpop.permute.xlu0 %1418
        %1420 = vrot.lane.b32.xlu0 %v1395, 12
        %v1421 = vpop.permute.xlu0 %1420
        %1422 = vrot.lane.b32.xlu0 %v1398, 12
        %v1423 = vpop.permute.xlu0 %1422
        %1424 = vrot.lane.b32.xlu0 %v1401, 12
        %v1425 = vpop.permute.xlu0 %1424
        %1426 = vrot.lane.b32.xlu0 %v1404, 12
        %v1427 = vpop.permute.xlu0 %1426
        %1428 = vrot.lane.b32.xlu0 %v1407, 12
        %v1429 = vpop.permute.xlu0 %1428
        %1430 = vrot.lane.b32.xlu0 %v1410, 12
        %v1431 = vpop.permute.xlu0 %1430
        %1432 = vrot.lane.b32.xlu0 %v1413, 12
        %v1433 = vpop.permute.xlu0 %1432
        %vm1444 = vcmask 121952
        %1445 = vst.msk [vmem:[#allocation2] sm:$0xff] %vm1444, %v1415
        %1446 = vst.msk [vmem:[#allocation2 + $0x8] sm:$0xff] %vm1444, %v1417
        %1447 = vst.msk [vmem:[#allocation2 + $0x10] sm:$0xff] %vm1444, %v1419
        %1448 = vst.msk [vmem:[#allocation2 + $0x18] sm:$0xff] %vm1444, %v1421
        %1449 = vst.msk [vmem:[#allocation2 + $0x20] sm:$0xff] %vm1444, %v1423
        %1450 = vst.msk [vmem:[#allocation2 + $0x28] sm:$0xff] %vm1444, %v1425
        %1451 = vst.msk [vmem:[#allocation2 + $0x30] sm:$0xff] %vm1444, %v1427
        %1452 = vst.msk [vmem:[#allocation2 + $0x38] sm:$0xff] %vm1444, %v1429
        %1453 = vst.msk [vmem:[#allocation2 + $0x40] sm:$0xff] %vm1444, %v1431
        %1454 = vst.msk [vmem:[#allocation2 + $0x48] sm:$0xff] %vm1444, %v1433
        %v1455 = vld [vmem:[%s1002] sm:$0xe]
        %v1456 = vld [vmem:[%s1002 + $0x4] sm:$0xf]
        %v1457 = vld [vmem:[%s1002 + $0x8] sm:$0x3]
        %v1458 = vld [vmem:[%s1002 + $0xc] sm:$0xe]
        %v1459 = vld [vmem:[%s1002 + $0x10] sm:$0xf]
        %v1460 = vld [vmem:[%s1002 + $0x14] sm:$0x3]
        %v1461 = vld [vmem:[%s1002 + $0x18] sm:$0xe]
        %v1462 = vld [vmem:[%s1002 + $0x1c] sm:$0xf]
        %v1463 = vld [vmem:[%s1002 + $0x20] sm:$0x3]
        %v1464 = vld [vmem:[%s1002 + $0x24] sm:$0xe]
        %v1465 = vld [vmem:[%s1002 + $0x28] sm:$0xf]
        %v1466 = vld [vmem:[%s1002 + $0x2c] sm:$0x3]
        %v1467 = vld [vmem:[%s1002 + $0x30] sm:$0xe]
        %v1468 = vld [vmem:[%s1002 + $0x34] sm:$0xf]
        %v1469 = vld [vmem:[%s1002 + $0x38] sm:$0x3]
        %v1470 = vld [vmem:[%s1002 + $0x3c] sm:$0xe]
        %v1471 = vld [vmem:[%s1002 + $0x40] sm:$0xf]
        %v1472 = vld [vmem:[%s1002 + $0x44] sm:$0x3]
        %v1473 = vld [vmem:[%s1002 + $0x48] sm:$0xe]
        %v1474 = vld [vmem:[%s1002 + $0x4c] sm:$0xf]
        %v1475 = vld [vmem:[%s1002 + $0x50] sm:$0x3]
        %v1476 = vld [vmem:[%s1002 + $0x54] sm:$0xe]
        %v1477 = vld [vmem:[%s1002 + $0x58] sm:$0xf]
        %v1478 = vld [vmem:[%s1002 + $0x5c] sm:$0x3]
        %v1479 = vld [vmem:[%s1002 + $0x60] sm:$0xe]
        %v1480 = vld [vmem:[%s1002 + $0x64] sm:$0xf]
        %v1481 = vld [vmem:[%s1002 + $0x68] sm:$0x3]
        %v1482 = vld [vmem:[%s1002 + $0x6c] sm:$0xe]
        %v1483 = vld [vmem:[%s1002 + $0x70] sm:$0xf]
        %v1484 = vld [vmem:[%s1002 + $0x74] sm:$0x3]
        %v1515 = vunpack.c.l.b16 %v1455
        %v1516 = vunpack.c.l.b16 %v1456
        %v1517 = vunpack.c.l.b16 %v1457
        %v1518 = vunpack.c.l.b16 %v1458
        %v1519 = vunpack.c.l.b16 %v1459
        %v1520 = vunpack.c.l.b16 %v1460
        %v1521 = vunpack.c.l.b16 %v1461
        %v1522 = vunpack.c.l.b16 %v1462
        %v1523 = vunpack.c.l.b16 %v1463
        %v1524 = vunpack.c.l.b16 %v1464
        %v1525 = vunpack.c.l.b16 %v1465
        %v1526 = vunpack.c.l.b16 %v1466
        %v1527 = vunpack.c.l.b16 %v1467
        %v1528 = vunpack.c.l.b16 %v1468
        %v1529 = vunpack.c.l.b16 %v1469
        %v1530 = vunpack.c.l.b16 %v1470
        %v1531 = vunpack.c.l.b16 %v1471
        %v1532 = vunpack.c.l.b16 %v1472
        %v1533 = vunpack.c.l.b16 %v1473
        %v1534 = vunpack.c.l.b16 %v1474
        %v1535 = vunpack.c.l.b16 %v1475
        %v1536 = vunpack.c.l.b16 %v1476
        %v1537 = vunpack.c.l.b16 %v1477
        %v1538 = vunpack.c.l.b16 %v1478
        %v1539 = vunpack.c.l.b16 %v1479
        %v1540 = vunpack.c.l.b16 %v1480
        %v1541 = vunpack.c.l.b16 %v1481
        %v1542 = vunpack.c.l.b16 %v1482
        %v1543 = vunpack.c.l.b16 %v1483
        %v1544 = vunpack.c.l.b16 %v1484
        %v1545 = vpack.c.b16 %v1516, %v1515
        %v1546 = vpack.c.b16 %v1517, %v1517
        %v1547 = vpack.c.b16 %v1519, %v1518
        %v1548 = vpack.c.b16 %v1520, %v1520
        %v1549 = vpack.c.b16 %v1522, %v1521
        %v1550 = vpack.c.b16 %v1523, %v1523
        %v1551 = vpack.c.b16 %v1525, %v1524
        %v1552 = vpack.c.b16 %v1526, %v1526
        %v1553 = vpack.c.b16 %v1528, %v1527
        %v1554 = vpack.c.b16 %v1529, %v1529
        %v1555 = vpack.c.b16 %v1531, %v1530
        %v1556 = vpack.c.b16 %v1532, %v1532
        %v1557 = vpack.c.b16 %v1534, %v1533
        %v1558 = vpack.c.b16 %v1535, %v1535
        %v1559 = vpack.c.b16 %v1537, %v1536
        %v1560 = vpack.c.b16 %v1538, %v1538
        %v1561 = vpack.c.b16 %v1540, %v1539
        %v1562 = vpack.c.b16 %v1541, %v1541
        %v1563 = vpack.c.b16 %v1543, %v1542
        %v1564 = vpack.c.b16 %v1544, %v1544
        %v1566 = vshrl.u32 %v1545, 16
        %v1568 = vrot.slane %v1566, 1
        %v1569 = vshll.u32 %v1545, 16
        %v1571 = vrot.slane %v1569, 2
        %v1572 = vor.u32 %v1568, %v1571
        %v1574 = vshrl.u32 %v1546, 16
        %v1576 = vrot.slane %v1574, 1
        %v1577 = vshll.u32 %v1546, 16
        %v1579 = vrot.slane %v1577, 2
        %v1580 = vor.u32 %v1576, %v1579
        %v1581 = vsel %vm787, %v1572, %v1580
        %v1583 = vshrl.u32 %v1547, 16
        %v1585 = vrot.slane %v1583, 1
        %v1586 = vshll.u32 %v1547, 16
        %v1588 = vrot.slane %v1586, 2
        %v1589 = vor.u32 %v1585, %v1588
        %v1591 = vshrl.u32 %v1548, 16
        %v1593 = vrot.slane %v1591, 1
        %v1594 = vshll.u32 %v1548, 16
        %v1596 = vrot.slane %v1594, 2
        %v1597 = vor.u32 %v1593, %v1596
        %v1598 = vsel %vm787, %v1589, %v1597
        %v1600 = vshrl.u32 %v1549, 16
        %v1602 = vrot.slane %v1600, 1
        %v1603 = vshll.u32 %v1549, 16
        %v1605 = vrot.slane %v1603, 2
        %v1606 = vor.u32 %v1602, %v1605
        %v1608 = vshrl.u32 %v1550, 16
        %v1610 = vrot.slane %v1608, 1
        %v1611 = vshll.u32 %v1550, 16
        %v1613 = vrot.slane %v1611, 2
        %v1614 = vor.u32 %v1610, %v1613
        %v1615 = vsel %vm787, %v1606, %v1614
        %v1617 = vshrl.u32 %v1551, 16
        %v1619 = vrot.slane %v1617, 1
        %v1620 = vshll.u32 %v1551, 16
        %v1622 = vrot.slane %v1620, 2
        %v1623 = vor.u32 %v1619, %v1622
        %v1625 = vshrl.u32 %v1552, 16
        %v1627 = vrot.slane %v1625, 1
        %v1628 = vshll.u32 %v1552, 16
        %v1630 = vrot.slane %v1628, 2
        %v1631 = vor.u32 %v1627, %v1630
        %v1632 = vsel %vm787, %v1623, %v1631
        %v1634 = vshrl.u32 %v1553, 16
        %v1636 = vrot.slane %v1634, 1
        %v1637 = vshll.u32 %v1553, 16
        %v1639 = vrot.slane %v1637, 2
        %v1640 = vor.u32 %v1636, %v1639
        %v1642 = vshrl.u32 %v1554, 16
        %v1644 = vrot.slane %v1642, 1
        %v1645 = vshll.u32 %v1554, 16
        %v1647 = vrot.slane %v1645, 2
        %v1648 = vor.u32 %v1644, %v1647
        %v1649 = vsel %vm787, %v1640, %v1648
        %v1651 = vshrl.u32 %v1555, 16
        %v1653 = vrot.slane %v1651, 1
        %v1654 = vshll.u32 %v1555, 16
        %v1656 = vrot.slane %v1654, 2
        %v1657 = vor.u32 %v1653, %v1656
        %v1659 = vshrl.u32 %v1556, 16
        %v1661 = vrot.slane %v1659, 1
        %v1662 = vshll.u32 %v1556, 16
        %v1664 = vrot.slane %v1662, 2
        %v1665 = vor.u32 %v1661, %v1664
        %v1666 = vsel %vm787, %v1657, %v1665
        %v1668 = vshrl.u32 %v1557, 16
        %v1670 = vrot.slane %v1668, 1
        %v1671 = vshll.u32 %v1557, 16
        %v1673 = vrot.slane %v1671, 2
        %v1674 = vor.u32 %v1670, %v1673
        %v1676 = vshrl.u32 %v1558, 16
        %v1678 = vrot.slane %v1676, 1
        %v1679 = vshll.u32 %v1558, 16
        %v1681 = vrot.slane %v1679, 2
        %v1682 = vor.u32 %v1678, %v1681
        %v1683 = vsel %vm787, %v1674, %v1682
        %v1685 = vshrl.u32 %v1559, 16
        %v1687 = vrot.slane %v1685, 1
        %v1688 = vshll.u32 %v1559, 16
        %v1690 = vrot.slane %v1688, 2
        %v1691 = vor.u32 %v1687, %v1690
        %v1693 = vshrl.u32 %v1560, 16
        %v1695 = vrot.slane %v1693, 1
        %v1696 = vshll.u32 %v1560, 16
        %v1698 = vrot.slane %v1696, 2
        %v1699 = vor.u32 %v1695, %v1698
        %v1700 = vsel %vm787, %v1691, %v1699
        %v1702 = vshrl.u32 %v1561, 16
        %v1704 = vrot.slane %v1702, 1
        %v1705 = vshll.u32 %v1561, 16
        %v1707 = vrot.slane %v1705, 2
        %v1708 = vor.u32 %v1704, %v1707
        %v1710 = vshrl.u32 %v1562, 16
        %v1712 = vrot.slane %v1710, 1
        %v1713 = vshll.u32 %v1562, 16
        %v1715 = vrot.slane %v1713, 2
        %v1716 = vor.u32 %v1712, %v1715
        %v1717 = vsel %vm787, %v1708, %v1716
        %v1719 = vshrl.u32 %v1563, 16
        %v1721 = vrot.slane %v1719, 1
        %v1722 = vshll.u32 %v1563, 16
        %v1724 = vrot.slane %v1722, 2
        %v1725 = vor.u32 %v1721, %v1724
        %v1727 = vshrl.u32 %v1564, 16
        %v1729 = vrot.slane %v1727, 1
        %v1730 = vshll.u32 %v1564, 16
        %v1732 = vrot.slane %v1730, 2
        %v1733 = vor.u32 %v1729, %v1732
        %v1734 = vsel %vm787, %v1725, %v1733
        %1735 = vrot.lane.b32.xlu0 %v1581, 15
        %v1736 = vpop.permute.xlu0 %1735
        %1737 = vrot.lane.b32.xlu0 %v1598, 15
        %v1738 = vpop.permute.xlu0 %1737
        %1739 = vrot.lane.b32.xlu0 %v1615, 15
        %v1740 = vpop.permute.xlu0 %1739
        %1741 = vrot.lane.b32.xlu0 %v1632, 15
        %v1742 = vpop.permute.xlu0 %1741
        %1743 = vrot.lane.b32.xlu0 %v1649, 15
        %v1744 = vpop.permute.xlu0 %1743
        %1745 = vrot.lane.b32.xlu0 %v1666, 15
        %v1746 = vpop.permute.xlu0 %1745
        %1747 = vrot.lane.b32.xlu0 %v1683, 15
        %v1748 = vpop.permute.xlu0 %1747
        %1749 = vrot.lane.b32.xlu0 %v1700, 15
        %v1750 = vpop.permute.xlu0 %1749
        %1751 = vrot.lane.b32.xlu0 %v1717, 15
        %v1752 = vpop.permute.xlu0 %1751
        %1753 = vrot.lane.b32.xlu0 %v1734, 15
        %v1754 = vpop.permute.xlu0 %1753
        %vm1765 = vcmask 146552
        %1766 = vst.msk [vmem:[#allocation2] sm:$0xff] %vm1765, %v1736
        %1767 = vst.msk [vmem:[#allocation2 + $0x8] sm:$0xff] %vm1765, %v1738
        %1768 = vst.msk [vmem:[#allocation2 + $0x10] sm:$0xff] %vm1765, %v1740
        %1769 = vst.msk [vmem:[#allocation2 + $0x18] sm:$0xff] %vm1765, %v1742
        %1770 = vst.msk [vmem:[#allocation2 + $0x20] sm:$0xff] %vm1765, %v1744
        %1771 = vst.msk [vmem:[#allocation2 + $0x28] sm:$0xff] %vm1765, %v1746
        %1772 = vst.msk [vmem:[#allocation2 + $0x30] sm:$0xff] %vm1765, %v1748
        %1773 = vst.msk [vmem:[#allocation2 + $0x38] sm:$0xff] %vm1765, %v1750
        %1774 = vst.msk [vmem:[#allocation2 + $0x40] sm:$0xff] %vm1765, %v1752
        %1775 = vst.msk [vmem:[#allocation2 + $0x48] sm:$0xff] %vm1765, %v1754
        %s1776 = sadd.s32 %s239, 2
        %s1777 = smul.u32 %s1776, 3
        %s1778 = smul.addr %s1777, 4
        %s1779 = scalar_lea.vmem %s236, %s1778
        %v1780 = vld [vmem:[%s1779] sm:$0xf]
        %v1781 = vld [vmem:[%s1779 + $0x4] sm:$0xf]
        %v1782 = vld [vmem:[%s1779 + $0x8] sm:$0x1]
        %v1783 = vld [vmem:[%s1779 + $0xc] sm:$0xf]
        %v1784 = vld [vmem:[%s1779 + $0x10] sm:$0xf]
        %v1785 = vld [vmem:[%s1779 + $0x14] sm:$0x1]
        %v1786 = vld [vmem:[%s1779 + $0x18] sm:$0xf]
        %v1787 = vld [vmem:[%s1779 + $0x1c] sm:$0xf]
        %v1788 = vld [vmem:[%s1779 + $0x20] sm:$0x1]
        %v1789 = vld [vmem:[%s1779 + $0x24] sm:$0xf]
        %v1790 = vld [vmem:[%s1779 + $0x28] sm:$0xf]
        %v1791 = vld [vmem:[%s1779 + $0x2c] sm:$0x1]
        %v1792 = vld [vmem:[%s1779 + $0x30] sm:$0xf]
        %v1793 = vld [vmem:[%s1779 + $0x34] sm:$0xf]
        %v1794 = vld [vmem:[%s1779 + $0x38] sm:$0x1]
        %v1795 = vld [vmem:[%s1779 + $0x3c] sm:$0xf]
        %v1796 = vld [vmem:[%s1779 + $0x40] sm:$0xf]
        %v1797 = vld [vmem:[%s1779 + $0x44] sm:$0x1]
        %v1798 = vld [vmem:[%s1779 + $0x48] sm:$0xf]
        %v1799 = vld [vmem:[%s1779 + $0x4c] sm:$0xf]
        %v1800 = vld [vmem:[%s1779 + $0x50] sm:$0x1]
        %v1801 = vld [vmem:[%s1779 + $0x54] sm:$0xf]
        %v1802 = vld [vmem:[%s1779 + $0x58] sm:$0xf]
        %v1803 = vld [vmem:[%s1779 + $0x5c] sm:$0x1]
        %v1804 = vld [vmem:[%s1779 + $0x60] sm:$0xf]
        %v1805 = vld [vmem:[%s1779 + $0x64] sm:$0xf]
        %v1806 = vld [vmem:[%s1779 + $0x68] sm:$0x1]
        %v1807 = vld [vmem:[%s1779 + $0x6c] sm:$0xf]
        %v1808 = vld [vmem:[%s1779 + $0x70] sm:$0xf]
        %v1809 = vld [vmem:[%s1779 + $0x74] sm:$0x1]
        %v1840 = vunpack.c.l.b16 %v1780
        %v1841 = vunpack.c.l.b16 %v1781
        %v1842 = vunpack.c.l.b16 %v1782
        %v1843 = vunpack.c.l.b16 %v1783
        %v1844 = vunpack.c.l.b16 %v1784
        %v1845 = vunpack.c.l.b16 %v1785
        %v1846 = vunpack.c.l.b16 %v1786
        %v1847 = vunpack.c.l.b16 %v1787
        %v1848 = vunpack.c.l.b16 %v1788
        %v1849 = vunpack.c.l.b16 %v1789
        %v1850 = vunpack.c.l.b16 %v1790
        %v1851 = vunpack.c.l.b16 %v1791
        %v1852 = vunpack.c.l.b16 %v1792
        %v1853 = vunpack.c.l.b16 %v1793
        %v1854 = vunpack.c.l.b16 %v1794
        %v1855 = vunpack.c.l.b16 %v1795
        %v1856 = vunpack.c.l.b16 %v1796
        %v1857 = vunpack.c.l.b16 %v1797
        %v1858 = vunpack.c.l.b16 %v1798
        %v1859 = vunpack.c.l.b16 %v1799
        %v1860 = vunpack.c.l.b16 %v1800
        %v1861 = vunpack.c.l.b16 %v1801
        %v1862 = vunpack.c.l.b16 %v1802
        %v1863 = vunpack.c.l.b16 %v1803
        %v1864 = vunpack.c.l.b16 %v1804
        %v1865 = vunpack.c.l.b16 %v1805
        %v1866 = vunpack.c.l.b16 %v1806
        %v1867 = vunpack.c.l.b16 %v1807
        %v1868 = vunpack.c.l.b16 %v1808
        %v1869 = vunpack.c.l.b16 %v1809
        %v1870 = vpack.c.b16 %v1841, %v1840
        %v1871 = vpack.c.b16 %v1842, %v1842
        %v1872 = vpack.c.b16 %v1844, %v1843
        %v1873 = vpack.c.b16 %v1845, %v1845
        %v1874 = vpack.c.b16 %v1847, %v1846
        %v1875 = vpack.c.b16 %v1848, %v1848
        %v1876 = vpack.c.b16 %v1850, %v1849
        %v1877 = vpack.c.b16 %v1851, %v1851
        %v1878 = vpack.c.b16 %v1853, %v1852
        %v1879 = vpack.c.b16 %v1854, %v1854
        %v1880 = vpack.c.b16 %v1856, %v1855
        %v1881 = vpack.c.b16 %v1857, %v1857
        %v1882 = vpack.c.b16 %v1859, %v1858
        %v1883 = vpack.c.b16 %v1860, %v1860
        %v1884 = vpack.c.b16 %v1862, %v1861
        %v1885 = vpack.c.b16 %v1863, %v1863
        %v1886 = vpack.c.b16 %v1865, %v1864
        %v1887 = vpack.c.b16 %v1866, %v1866
        %v1888 = vpack.c.b16 %v1868, %v1867
        %v1889 = vpack.c.b16 %v1869, %v1869
        %v1891 = vshrl.u32 %v1870, 16
        %v1893 = vshll.u32 %v1870, 16
        %v1895 = vrot.slane %v1893, 1
        %v1896 = vor.u32 %v1891, %v1895
        %v1898 = vshll.u32 %v1871, 16
        %v1900 = vrot.slane %v1898, 1
        %v1901 = vsel %vm353, %v1896, %v1900
        %v1903 = vshrl.u32 %v1872, 16
        %v1905 = vshll.u32 %v1872, 16
        %v1907 = vrot.slane %v1905, 1
        %v1908 = vor.u32 %v1903, %v1907
        %v1910 = vshll.u32 %v1873, 16
        %v1912 = vrot.slane %v1910, 1
        %v1913 = vsel %vm353, %v1908, %v1912
        %v1915 = vshrl.u32 %v1874, 16
        %v1917 = vshll.u32 %v1874, 16
        %v1919 = vrot.slane %v1917, 1
        %v1920 = vor.u32 %v1915, %v1919
        %v1922 = vshll.u32 %v1875, 16
        %v1924 = vrot.slane %v1922, 1
        %v1925 = vsel %vm353, %v1920, %v1924
        %v1927 = vshrl.u32 %v1876, 16
        %v1929 = vshll.u32 %v1876, 16
        %v1931 = vrot.slane %v1929, 1
        %v1932 = vor.u32 %v1927, %v1931
        %v1934 = vshll.u32 %v1877, 16
        %v1936 = vrot.slane %v1934, 1
        %v1937 = vsel %vm353, %v1932, %v1936
        %v1939 = vshrl.u32 %v1878, 16
        %v1941 = vshll.u32 %v1878, 16
        %v1943 = vrot.slane %v1941, 1
        %v1944 = vor.u32 %v1939, %v1943
        %v1946 = vshll.u32 %v1879, 16
        %v1948 = vrot.slane %v1946, 1
        %v1949 = vsel %vm353, %v1944, %v1948
        %v1951 = vshrl.u32 %v1880, 16
        %v1953 = vshll.u32 %v1880, 16
        %v1955 = vrot.slane %v1953, 1
        %v1956 = vor.u32 %v1951, %v1955
        %v1958 = vshll.u32 %v1881, 16
        %v1960 = vrot.slane %v1958, 1
        %v1961 = vsel %vm353, %v1956, %v1960
        %v1963 = vshrl.u32 %v1882, 16
        %v1965 = vshll.u32 %v1882, 16
        %v1967 = vrot.slane %v1965, 1
        %v1968 = vor.u32 %v1963, %v1967
        %v1970 = vshll.u32 %v1883, 16
        %v1972 = vrot.slane %v1970, 1
        %v1973 = vsel %vm353, %v1968, %v1972
        %v1975 = vshrl.u32 %v1884, 16
        %v1977 = vshll.u32 %v1884, 16
        %v1979 = vrot.slane %v1977, 1
        %v1980 = vor.u32 %v1975, %v1979
        %v1982 = vshll.u32 %v1885, 16
        %v1984 = vrot.slane %v1982, 1
        %v1985 = vsel %vm353, %v1980, %v1984
        %v1987 = vshrl.u32 %v1886, 16
        %v1989 = vshll.u32 %v1886, 16
        %v1991 = vrot.slane %v1989, 1
        %v1992 = vor.u32 %v1987, %v1991
        %v1994 = vshll.u32 %v1887, 16
        %v1996 = vrot.slane %v1994, 1
        %v1997 = vsel %vm353, %v1992, %v1996
        %v1999 = vshrl.u32 %v1888, 16
        %v2001 = vshll.u32 %v1888, 16
        %v2003 = vrot.slane %v2001, 1
        %v2004 = vor.u32 %v1999, %v2003
        %v2006 = vshll.u32 %v1889, 16
        %v2008 = vrot.slane %v2006, 1
        %v2009 = vsel %vm353, %v2004, %v2008
        %2010 = vrot.lane.b32.xlu0 %v1901, 18
        %v2011 = vpop.permute.xlu0 %2010
        %2012 = vrot.lane.b32.xlu0 %v1913, 18
        %v2013 = vpop.permute.xlu0 %2012
        %2014 = vrot.lane.b32.xlu0 %v1925, 18
        %v2015 = vpop.permute.xlu0 %2014
        %2016 = vrot.lane.b32.xlu0 %v1937, 18
        %v2017 = vpop.permute.xlu0 %2016
        %2018 = vrot.lane.b32.xlu0 %v1949, 18
        %v2019 = vpop.permute.xlu0 %2018
        %2020 = vrot.lane.b32.xlu0 %v1961, 18
        %v2021 = vpop.permute.xlu0 %2020
        %2022 = vrot.lane.b32.xlu0 %v1973, 18
        %v2023 = vpop.permute.xlu0 %2022
        %2024 = vrot.lane.b32.xlu0 %v1985, 18
        %v2025 = vpop.permute.xlu0 %2024
        %2026 = vrot.lane.b32.xlu0 %v1997, 18
        %v2027 = vpop.permute.xlu0 %2026
        %2028 = vrot.lane.b32.xlu0 %v2009, 18
        %v2029 = vpop.permute.xlu0 %2028
        %vm2040 = vcmask 171152
        %2041 = vst.msk [vmem:[#allocation2] sm:$0xff] %vm2040, %v2011
        %2042 = vst.msk [vmem:[#allocation2 + $0x8] sm:$0xff] %vm2040, %v2013
        %2043 = vst.msk [vmem:[#allocation2 + $0x10] sm:$0xff] %vm2040, %v2015
        %2044 = vst.msk [vmem:[#allocation2 + $0x18] sm:$0xff] %vm2040, %v2017
        %2045 = vst.msk [vmem:[#allocation2 + $0x20] sm:$0xff] %vm2040, %v2019
        %2046 = vst.msk [vmem:[#allocation2 + $0x28] sm:$0xff] %vm2040, %v2021
        %2047 = vst.msk [vmem:[#allocation2 + $0x30] sm:$0xff] %vm2040, %v2023
        %2048 = vst.msk [vmem:[#allocation2 + $0x38] sm:$0xff] %vm2040, %v2025
        %2049 = vst.msk [vmem:[#allocation2 + $0x40] sm:$0xff] %vm2040, %v2027
        %2050 = vst.msk [vmem:[#allocation2 + $0x48] sm:$0xff] %vm2040, %v2029
        %v2051 = vld [vmem:[%s1779] sm:$0xe]
        %v2052 = vld [vmem:[%s1779 + $0x4] sm:$0xf]
        %v2053 = vld [vmem:[%s1779 + $0x8] sm:$0x1]
        %v2054 = vld [vmem:[%s1779 + $0xc] sm:$0xe]
        %v2055 = vld [vmem:[%s1779 + $0x10] sm:$0xf]
        %v2056 = vld [vmem:[%s1779 + $0x14] sm:$0x1]
        %v2057 = vld [vmem:[%s1779 + $0x18] sm:$0xe]
        %v2058 = vld [vmem:[%s1779 + $0x1c] sm:$0xf]
        %v2059 = vld [vmem:[%s1779 + $0x20] sm:$0x1]
        %v2060 = vld [vmem:[%s1779 + $0x24] sm:$0xe]
        %v2061 = vld [vmem:[%s1779 + $0x28] sm:$0xf]
        %v2062 = vld [vmem:[%s1779 + $0x2c] sm:$0x1]
        %v2063 = vld [vmem:[%s1779 + $0x30] sm:$0xe]
        %v2064 = vld [vmem:[%s1779 + $0x34] sm:$0xf]
        %v2065 = vld [vmem:[%s1779 + $0x38] sm:$0x1]
        %v2066 = vld [vmem:[%s1779 + $0x3c] sm:$0xe]
        %v2067 = vld [vmem:[%s1779 + $0x40] sm:$0xf]
        %v2068 = vld [vmem:[%s1779 + $0x44] sm:$0x1]
        %v2069 = vld [vmem:[%s1779 + $0x48] sm:$0xe]
        %v2070 = vld [vmem:[%s1779 + $0x4c] sm:$0xf]
        %v2071 = vld [vmem:[%s1779 + $0x50] sm:$0x1]
        %v2072 = vld [vmem:[%s1779 + $0x54] sm:$0xe]
        %v2073 = vld [vmem:[%s1779 + $0x58] sm:$0xf]
        %v2074 = vld [vmem:[%s1779 + $0x5c] sm:$0x1]
        %v2075 = vld [vmem:[%s1779 + $0x60] sm:$0xe]
        %v2076 = vld [vmem:[%s1779 + $0x64] sm:$0xf]
        %v2077 = vld [vmem:[%s1779 + $0x68] sm:$0x1]
        %v2078 = vld [vmem:[%s1779 + $0x6c] sm:$0xe]
        %v2079 = vld [vmem:[%s1779 + $0x70] sm:$0xf]
        %v2080 = vld [vmem:[%s1779 + $0x74] sm:$0x1]
        %v2111 = vunpack.c.l.b16 %v2051
        %v2112 = vunpack.c.l.b16 %v2052
        %v2113 = vunpack.c.l.b16 %v2053
        %v2114 = vunpack.c.l.b16 %v2054
        %v2115 = vunpack.c.l.b16 %v2055
        %v2116 = vunpack.c.l.b16 %v2056
        %v2117 = vunpack.c.l.b16 %v2057
        %v2118 = vunpack.c.l.b16 %v2058
        %v2119 = vunpack.c.l.b16 %v2059
        %v2120 = vunpack.c.l.b16 %v2060
        %v2121 = vunpack.c.l.b16 %v2061
        %v2122 = vunpack.c.l.b16 %v2062
        %v2123 = vunpack.c.l.b16 %v2063
        %v2124 = vunpack.c.l.b16 %v2064
        %v2125 = vunpack.c.l.b16 %v2065
        %v2126 = vunpack.c.l.b16 %v2066
        %v2127 = vunpack.c.l.b16 %v2067
        %v2128 = vunpack.c.l.b16 %v2068
        %v2129 = vunpack.c.l.b16 %v2069
        %v2130 = vunpack.c.l.b16 %v2070
        %v2131 = vunpack.c.l.b16 %v2071
        %v2132 = vunpack.c.l.b16 %v2072
        %v2133 = vunpack.c.l.b16 %v2073
        %v2134 = vunpack.c.l.b16 %v2074
        %v2135 = vunpack.c.l.b16 %v2075
        %v2136 = vunpack.c.l.b16 %v2076
        %v2137 = vunpack.c.l.b16 %v2077
        %v2138 = vunpack.c.l.b16 %v2078
        %v2139 = vunpack.c.l.b16 %v2079
        %v2140 = vunpack.c.l.b16 %v2080
        %v2141 = vpack.c.b16 %v2112, %v2111
        %v2142 = vpack.c.b16 %v2113, %v2113
        %v2143 = vpack.c.b16 %v2115, %v2114
        %v2144 = vpack.c.b16 %v2116, %v2116
        %v2145 = vpack.c.b16 %v2118, %v2117
        %v2146 = vpack.c.b16 %v2119, %v2119
        %v2147 = vpack.c.b16 %v2121, %v2120
        %v2148 = vpack.c.b16 %v2122, %v2122
        %v2149 = vpack.c.b16 %v2124, %v2123
        %v2150 = vpack.c.b16 %v2125, %v2125
        %v2151 = vpack.c.b16 %v2127, %v2126
        %v2152 = vpack.c.b16 %v2128, %v2128
        %v2153 = vpack.c.b16 %v2130, %v2129
        %v2154 = vpack.c.b16 %v2131, %v2131
        %v2155 = vpack.c.b16 %v2133, %v2132
        %v2156 = vpack.c.b16 %v2134, %v2134
        %v2157 = vpack.c.b16 %v2136, %v2135
        %v2158 = vpack.c.b16 %v2137, %v2137
        %v2159 = vpack.c.b16 %v2139, %v2138
        %v2160 = vpack.c.b16 %v2140, %v2140
        %v2161 = vrot.slane %v2141, 1
        %v2162 = vrot.slane %v2142, 1
        %v2163 = vsel %vm605, %v2161, %v2162
        %v2164 = vrot.slane %v2143, 1
        %v2165 = vrot.slane %v2144, 1
        %v2166 = vsel %vm605, %v2164, %v2165
        %v2167 = vrot.slane %v2145, 1
        %v2168 = vrot.slane %v2146, 1
        %v2169 = vsel %vm605, %v2167, %v2168
        %v2170 = vrot.slane %v2147, 1
        %v2171 = vrot.slane %v2148, 1
        %v2172 = vsel %vm605, %v2170, %v2171
        %v2173 = vrot.slane %v2149, 1
        %v2174 = vrot.slane %v2150, 1
        %v2175 = vsel %vm605, %v2173, %v2174
        %v2176 = vrot.slane %v2151, 1
        %v2177 = vrot.slane %v2152, 1
        %v2178 = vsel %vm605, %v2176, %v2177
        %v2179 = vrot.slane %v2153, 1
        %v2180 = vrot.slane %v2154, 1
        %v2181 = vsel %vm605, %v2179, %v2180
        %v2182 = vrot.slane %v2155, 1
        %v2183 = vrot.slane %v2156, 1
        %v2184 = vsel %vm605, %v2182, %v2183
        %v2185 = vrot.slane %v2157, 1
        %v2186 = vrot.slane %v2158, 1
        %v2187 = vsel %vm605, %v2185, %v2186
        %v2188 = vrot.slane %v2159, 1
        %v2189 = vrot.slane %v2160, 1
        %v2190 = vsel %vm605, %v2188, %v2189
        %2191 = vrot.lane.b32.xlu0 %v2163, 21
        %v2192 = vpop.permute.xlu0 %2191
        %2193 = vrot.lane.b32.xlu0 %v2166, 21
        %v2194 = vpop.permute.xlu0 %2193
        %2195 = vrot.lane.b32.xlu0 %v2169, 21
        %v2196 = vpop.permute.xlu0 %2195
        %2197 = vrot.lane.b32.xlu0 %v2172, 21
        %v2198 = vpop.permute.xlu0 %2197
        %2199 = vrot.lane.b32.xlu0 %v2175, 21
        %v2200 = vpop.permute.xlu0 %2199
        %2201 = vrot.lane.b32.xlu0 %v2178, 21
        %v2202 = vpop.permute.xlu0 %2201
        %2203 = vrot.lane.b32.xlu0 %v2181, 21
        %v2204 = vpop.permute.xlu0 %2203
        %2205 = vrot.lane.b32.xlu0 %v2184, 21
        %v2206 = vpop.permute.xlu0 %2205
        %2207 = vrot.lane.b32.xlu0 %v2187, 21
        %v2208 = vpop.permute.xlu0 %2207
        %2209 = vrot.lane.b32.xlu0 %v2190, 21
        %v2210 = vpop.permute.xlu0 %2209
        %vm2221 = vcmask 195752
        %2222 = vst.msk [vmem:[#allocation2] sm:$0xff] %vm2221, %v2192
        %2223 = vst.msk [vmem:[#allocation2 + $0x8] sm:$0xff] %vm2221, %v2194
        %2224 = vst.msk [vmem:[#allocation2 + $0x10] sm:$0xff] %vm2221, %v2196
        %2225 = vst.msk [vmem:[#allocation2 + $0x18] sm:$0xff] %vm2221, %v2198
        %2226 = vst.msk [vmem:[#allocation2 + $0x20] sm:$0xff] %vm2221, %v2200
        %2227 = vst.msk [vmem:[#allocation2 + $0x28] sm:$0xff] %vm2221, %v2202
        %2228 = vst.msk [vmem:[#allocation2 + $0x30] sm:$0xff] %vm2221, %v2204
        %2229 = vst.msk [vmem:[#allocation2 + $0x38] sm:$0xff] %vm2221, %v2206
        %2230 = vst.msk [vmem:[#allocation2 + $0x40] sm:$0xff] %vm2221, %v2208
        %2231 = vst.msk [vmem:[#allocation2 + $0x48] sm:$0xff] %vm2221, %v2210
        %v2232 = vld [vmem:[%s1779] sm:$0xe]
        %v2233 = vld [vmem:[%s1779 + $0x4] sm:$0xf]
        %v2234 = vld [vmem:[%s1779 + $0x8] sm:$0x3]
        %v2235 = vld [vmem:[%s1779 + $0xc] sm:$0xe]
        %v2236 = vld [vmem:[%s1779 + $0x10] sm:$0xf]
        %v2237 = vld [vmem:[%s1779 + $0x14] sm:$0x3]
        %v2238 = vld [vmem:[%s1779 + $0x18] sm:$0xe]
        %v2239 = vld [vmem:[%s1779 + $0x1c] sm:$0xf]
        %v2240 = vld [vmem:[%s1779 + $0x20] sm:$0x3]
        %v2241 = vld [vmem:[%s1779 + $0x24] sm:$0xe]
        %v2242 = vld [vmem:[%s1779 + $0x28] sm:$0xf]
        %v2243 = vld [vmem:[%s1779 + $0x2c] sm:$0x3]
        %v2244 = vld [vmem:[%s1779 + $0x30] sm:$0xe]
        %v2245 = vld [vmem:[%s1779 + $0x34] sm:$0xf]
        %v2246 = vld [vmem:[%s1779 + $0x38] sm:$0x3]
        %v2247 = vld [vmem:[%s1779 + $0x3c] sm:$0xe]
        %v2248 = vld [vmem:[%s1779 + $0x40] sm:$0xf]
        %v2249 = vld [vmem:[%s1779 + $0x44] sm:$0x3]
        %v2250 = vld [vmem:[%s1779 + $0x48] sm:$0xe]
        %v2251 = vld [vmem:[%s1779 + $0x4c] sm:$0xf]
        %v2252 = vld [vmem:[%s1779 + $0x50] sm:$0x3]
        %v2253 = vld [vmem:[%s1779 + $0x54] sm:$0xe]
        %v2254 = vld [vmem:[%s1779 + $0x58] sm:$0xf]
        %v2255 = vld [vmem:[%s1779 + $0x5c] sm:$0x3]
        %v2256 = vld [vmem:[%s1779 + $0x60] sm:$0xe]
        %v2257 = vld [vmem:[%s1779 + $0x64] sm:$0xf]
        %v2258 = vld [vmem:[%s1779 + $0x68] sm:$0x3]
        %v2259 = vld [vmem:[%s1779 + $0x6c] sm:$0xe]
        %v2260 = vld [vmem:[%s1779 + $0x70] sm:$0xf]
        %v2261 = vld [vmem:[%s1779 + $0x74] sm:$0x3]
        %v2292 = vunpack.c.l.b16 %v2232
        %v2293 = vunpack.c.l.b16 %v2233
        %v2294 = vunpack.c.l.b16 %v2234
        %v2295 = vunpack.c.l.b16 %v2235
        %v2296 = vunpack.c.l.b16 %v2236
        %v2297 = vunpack.c.l.b16 %v2237
        %v2298 = vunpack.c.l.b16 %v2238
        %v2299 = vunpack.c.l.b16 %v2239
        %v2300 = vunpack.c.l.b16 %v2240
        %v2301 = vunpack.c.l.b16 %v2241
        %v2302 = vunpack.c.l.b16 %v2242
        %v2303 = vunpack.c.l.b16 %v2243
        %v2304 = vunpack.c.l.b16 %v2244
        %v2305 = vunpack.c.l.b16 %v2245
        %v2306 = vunpack.c.l.b16 %v2246
        %v2307 = vunpack.c.l.b16 %v2247
        %v2308 = vunpack.c.l.b16 %v2248
        %v2309 = vunpack.c.l.b16 %v2249
        %v2310 = vunpack.c.l.b16 %v2250
        %v2311 = vunpack.c.l.b16 %v2251
        %v2312 = vunpack.c.l.b16 %v2252
        %v2313 = vunpack.c.l.b16 %v2253
        %v2314 = vunpack.c.l.b16 %v2254
        %v2315 = vunpack.c.l.b16 %v2255
        %v2316 = vunpack.c.l.b16 %v2256
        %v2317 = vunpack.c.l.b16 %v2257
        %v2318 = vunpack.c.l.b16 %v2258
        %v2319 = vunpack.c.l.b16 %v2259
        %v2320 = vunpack.c.l.b16 %v2260
        %v2321 = vunpack.c.l.b16 %v2261
        %v2322 = vpack.c.b16 %v2293, %v2292
        %v2323 = vpack.c.b16 %v2294, %v2294
        %v2324 = vpack.c.b16 %v2296, %v2295
        %v2325 = vpack.c.b16 %v2297, %v2297
        %v2326 = vpack.c.b16 %v2299, %v2298
        %v2327 = vpack.c.b16 %v2300, %v2300
        %v2328 = vpack.c.b16 %v2302, %v2301
        %v2329 = vpack.c.b16 %v2303, %v2303
        %v2330 = vpack.c.b16 %v2305, %v2304
        %v2331 = vpack.c.b16 %v2306, %v2306
        %v2332 = vpack.c.b16 %v2308, %v2307
        %v2333 = vpack.c.b16 %v2309, %v2309
        %v2334 = vpack.c.b16 %v2311, %v2310
        %v2335 = vpack.c.b16 %v2312, %v2312
        %v2336 = vpack.c.b16 %v2314, %v2313
        %v2337 = vpack.c.b16 %v2315, %v2315
        %v2338 = vpack.c.b16 %v2317, %v2316
        %v2339 = vpack.c.b16 %v2318, %v2318
        %v2340 = vpack.c.b16 %v2320, %v2319
        %v2341 = vpack.c.b16 %v2321, %v2321
        %v2343 = vshrl.u32 %v2322, 16
        %v2345 = vrot.slane %v2343, 1
        %v2346 = vshll.u32 %v2322, 16
        %v2348 = vrot.slane %v2346, 2
        %v2349 = vor.u32 %v2345, %v2348
        %v2351 = vshrl.u32 %v2323, 16
        %v2353 = vrot.slane %v2351, 1
        %v2354 = vshll.u32 %v2323, 16
        %v2356 = vrot.slane %v2354, 2
        %v2357 = vor.u32 %v2353, %v2356
        %v2358 = vsel %vm787, %v2349, %v2357
        %v2360 = vshrl.u32 %v2324, 16
        %v2362 = vrot.slane %v2360, 1
        %v2363 = vshll.u32 %v2324, 16
        %v2365 = vrot.slane %v2363, 2
        %v2366 = vor.u32 %v2362, %v2365
        %v2368 = vshrl.u32 %v2325, 16
        %v2370 = vrot.slane %v2368, 1
        %v2371 = vshll.u32 %v2325, 16
        %v2373 = vrot.slane %v2371, 2
        %v2374 = vor.u32 %v2370, %v2373
        %v2375 = vsel %vm787, %v2366, %v2374
        %v2377 = vshrl.u32 %v2326, 16
        %v2379 = vrot.slane %v2377, 1
        %v2380 = vshll.u32 %v2326, 16
        %v2382 = vrot.slane %v2380, 2
        %v2383 = vor.u32 %v2379, %v2382
        %v2385 = vshrl.u32 %v2327, 16
        %v2387 = vrot.slane %v2385, 1
        %v2388 = vshll.u32 %v2327, 16
        %v2390 = vrot.slane %v2388, 2
        %v2391 = vor.u32 %v2387, %v2390
        %v2392 = vsel %vm787, %v2383, %v2391
        %v2394 = vshrl.u32 %v2328, 16
        %v2396 = vrot.slane %v2394, 1
        %v2397 = vshll.u32 %v2328, 16
        %v2399 = vrot.slane %v2397, 2
        %v2400 = vor.u32 %v2396, %v2399
        %v2402 = vshrl.u32 %v2329, 16
        %v2404 = vrot.slane %v2402, 1
        %v2405 = vshll.u32 %v2329, 16
        %v2407 = vrot.slane %v2405, 2
        %v2408 = vor.u32 %v2404, %v2407
        %v2409 = vsel %vm787, %v2400, %v2408
        %v2411 = vshrl.u32 %v2330, 16
        %v2413 = vrot.slane %v2411, 1
        %v2414 = vshll.u32 %v2330, 16
        %v2416 = vrot.slane %v2414, 2
        %v2417 = vor.u32 %v2413, %v2416
        %v2419 = vshrl.u32 %v2331, 16
        %v2421 = vrot.slane %v2419, 1
        %v2422 = vshll.u32 %v2331, 16
        %v2424 = vrot.slane %v2422, 2
        %v2425 = vor.u32 %v2421, %v2424
        %v2426 = vsel %vm787, %v2417, %v2425
        %v2428 = vshrl.u32 %v2332, 16
        %v2430 = vrot.slane %v2428, 1
        %v2431 = vshll.u32 %v2332, 16
        %v2433 = vrot.slane %v2431, 2
        %v2434 = vor.u32 %v2430, %v2433
        %v2436 = vshrl.u32 %v2333, 16
        %v2438 = vrot.slane %v2436, 1
        %v2439 = vshll.u32 %v2333, 16
        %v2441 = vrot.slane %v2439, 2
        %v2442 = vor.u32 %v2438, %v2441
        %v2443 = vsel %vm787, %v2434, %v2442
        %v2445 = vshrl.u32 %v2334, 16
        %v2447 = vrot.slane %v2445, 1
        %v2448 = vshll.u32 %v2334, 16
        %v2450 = vrot.slane %v2448, 2
        %v2451 = vor.u32 %v2447, %v2450
        %v2453 = vshrl.u32 %v2335, 16
        %v2455 = vrot.slane %v2453, 1
        %v2456 = vshll.u32 %v2335, 16
        %v2458 = vrot.slane %v2456, 2
        %v2459 = vor.u32 %v2455, %v2458
        %v2460 = vsel %vm787, %v2451, %v2459
        %v2462 = vshrl.u32 %v2336, 16
        %v2464 = vrot.slane %v2462, 1
        %v2465 = vshll.u32 %v2336, 16
        %v2467 = vrot.slane %v2465, 2
        %v2468 = vor.u32 %v2464, %v2467
        %v2470 = vshrl.u32 %v2337, 16
        %v2472 = vrot.slane %v2470, 1
        %v2473 = vshll.u32 %v2337, 16
        %v2475 = vrot.slane %v2473, 2
        %v2476 = vor.u32 %v2472, %v2475
        %v2477 = vsel %vm787, %v2468, %v2476
        %v2479 = vshrl.u32 %v2338, 16
        %v2481 = vrot.slane %v2479, 1
        %v2482 = vshll.u32 %v2338, 16
        %v2484 = vrot.slane %v2482, 2
        %v2485 = vor.u32 %v2481, %v2484
        %v2487 = vshrl.u32 %v2339, 16
        %v2489 = vrot.slane %v2487, 1
        %v2490 = vshll.u32 %v2339, 16
        %v2492 = vrot.slane %v2490, 2
        %v2493 = vor.u32 %v2489, %v2492
        %v2494 = vsel %vm787, %v2485, %v2493
        %v2496 = vshrl.u32 %v2340, 16
        %v2498 = vrot.slane %v2496, 1
        %v2499 = vshll.u32 %v2340, 16
        %v2501 = vrot.slane %v2499, 2
        %v2502 = vor.u32 %v2498, %v2501
        %v2504 = vshrl.u32 %v2341, 16
        %v2506 = vrot.slane %v2504, 1
        %v2507 = vshll.u32 %v2341, 16
        %v2509 = vrot.slane %v2507, 2
        %v2510 = vor.u32 %v2506, %v2509
        %v2511 = vsel %vm787, %v2502, %v2510
        %2512 = vrot.lane.b32.xlu0 %v2358, 24
        %v2513 = vpop.permute.xlu0 %2512
        %2514 = vrot.lane.b32.xlu0 %v2375, 24
        %v2515 = vpop.permute.xlu0 %2514
        %2516 = vrot.lane.b32.xlu0 %v2392, 24
        %v2517 = vpop.permute.xlu0 %2516
        %2518 = vrot.lane.b32.xlu0 %v2409, 24
        %v2519 = vpop.permute.xlu0 %2518
        %2520 = vrot.lane.b32.xlu0 %v2426, 24
        %v2521 = vpop.permute.xlu0 %2520
        %2522 = vrot.lane.b32.xlu0 %v2443, 24
        %v2523 = vpop.permute.xlu0 %2522
        %2524 = vrot.lane.b32.xlu0 %v2460, 24
        %v2525 = vpop.permute.xlu0 %2524
        %2526 = vrot.lane.b32.xlu0 %v2477, 24
        %v2527 = vpop.permute.xlu0 %2526
        %2528 = vrot.lane.b32.xlu0 %v2494, 24
        %v2529 = vpop.permute.xlu0 %2528
        %2530 = vrot.lane.b32.xlu0 %v2511, 24
        %v2531 = vpop.permute.xlu0 %2530
        %vm2542 = vcmask 220352
        %2543 = vst.msk [vmem:[#allocation2] sm:$0xff] %vm2542, %v2513
        %2544 = vst.msk [vmem:[#allocation2 + $0x8] sm:$0xff] %vm2542, %v2515
        %2545 = vst.msk [vmem:[#allocation2 + $0x10] sm:$0xff] %vm2542, %v2517
        %2546 = vst.msk [vmem:[#allocation2 + $0x18] sm:$0xff] %vm2542, %v2519
        %2547 = vst.msk [vmem:[#allocation2 + $0x20] sm:$0xff] %vm2542, %v2521
        %2548 = vst.msk [vmem:[#allocation2 + $0x28] sm:$0xff] %vm2542, %v2523
        %2549 = vst.msk [vmem:[#allocation2 + $0x30] sm:$0xff] %vm2542, %v2525
        %2550 = vst.msk [vmem:[#allocation2 + $0x38] sm:$0xff] %vm2542, %v2527
        %2551 = vst.msk [vmem:[#allocation2 + $0x40] sm:$0xff] %vm2542, %v2529
        %2552 = vst.msk [vmem:[#allocation2 + $0x48] sm:$0xff] %vm2542, %v2531
        %v2553 = vld [vmem:[#allocation2] sm:$0xff]
        %v2554 = vld [vmem:[#allocation2 + $0x8] sm:$0xff]
        %v2555 = vld [vmem:[#allocation2 + $0x10] sm:$0xff]
        %v2556 = vld [vmem:[#allocation2 + $0x18] sm:$0xff]
        %v2557 = vld [vmem:[#allocation2 + $0x20] sm:$0xff]
        %v2558 = vld [vmem:[#allocation2 + $0x28] sm:$0xff]
        %v2559 = vld [vmem:[#allocation2 + $0x30] sm:$0xff]
        %v2560 = vld [vmem:[#allocation2 + $0x38] sm:$0xff]
        %v2561 = vld [vmem:[#allocation2 + $0x40] sm:$0xff]
        %v2562 = vld [vmem:[#allocation2 + $0x48] sm:$0xff]
        %v2563 = vld [vmem:[%s1] sm:$0xf]
        %v2564 = vld [vmem:[%s1 + $0x4] sm:$0xf]
        %v2565 = vld [vmem:[%s1 + $0x8] sm:$0xf]
        %v2566 = vld [vmem:[%s1 + $0xc] sm:$0x3]
        %v2567 = vld [vmem:[%s2] sm:$0x1]
        %v2569 = vlaneseq
        %v2570 = vshrl.u32 %v2569, 7
        %v2571 = vsub.s32 0, %v2570
        %v2572 = vrot.slane %v2567, %v2571
        %v2578 = vunpack.c.l.b16 %v2563
        %v2579 = vunpack.c.l.b16 %v2564
        %v2580 = vunpack.c.l.b16 %v2565
        %v2581 = vunpack.c.l.b16 %v2566
        %v2582 = vpack.c.b16 %v2579, %v2578
        %v2583 = vpack.c.b16 %v2581, %v2580
        %vm2585 = vcmask 220160
        %v2587 = vsel %vm2585, %v2553, 0
        %v2590 = vsel %vm2585, %v2554, 0
        %v2593 = vsel %vm2585, %v2555, 0
        %v2596 = vsel %vm2585, %v2556, 0
        %v2599 = vsel %vm2585, %v2557, 0
        %v2602 = vsel %vm2585, %v2558, 0
        %v2605 = vsel %vm2585, %v2559, 0
        %v2608 = vsel %vm2585, %v2560, 0
        %v2611 = vsel %vm2585, %v2561, 0
        %v2614 = vsel %vm2585, %v2562, 0
        %vm2616 = vcmask 1044480
        %vm2617 = vcmask 1045504
        %v2618 = vsel %vm2616, 4294967295, 65535
        %v2619 = vsel %vm2617, %v2618, 0
        %v2621 = vand.u32 %v2583, %v2619
        %2623 = vmatprep.subr.bf16.mxu0 0
        %2624 = vmatpush1.bf16.msra.mxu0 %v2582
        %2625 = vmatprep.subr.bf16.mxu0 0
        %2626 = vmatpush1.bf16.msra.mxu0 %v2621
        %2627 = vmatprep.subr.bf16.mxu0 0
        %2628 = vmatpush1.bf16.msra.mxu0 0
        %2629 = vmatprep.subr.bf16.mxu0 0
        %2630 = vmatpush1.bf16.msra.mxu0 0
        %2631 = vmatprep.subr.bf16.mxu0 0
        %2632 = vmatpush1.bf16.msra.mxu0 0
        %2633 = vmatprep.subr.bf16.mxu0 0
        %2634 = vmatpush1.bf16.msra.mxu0 0
        %2635 = vmatprep.subr.bf16.mxu0 0
        %2636 = vmatpush1.bf16.msra.mxu0 0
        %2637 = vmatprep.subr.bf16.mxu0 0
        %2638 = vmatpush1.bf16.msra.mxu0 0
        %2639 = vmatprep.subr.bf16.mxu0 0
        %2640 = vmatpush1.bf16.msra.mxu0 0
        %2641 = vmatprep.subr.bf16.mxu0 0
        %2642 = vmatpush1.bf16.msra.mxu0 0
        %2643 = vmatprep.subr.bf16.mxu0 0
        %2644 = vmatpush1.bf16.msra.mxu0 0
        %2645 = vmatprep.subr.bf16.mxu0 0
        %2646 = vmatpush1.bf16.msra.mxu0 0
        %2647 = vmatprep.subr.bf16.mxu0 0
        %2648 = vmatpush1.bf16.msra.mxu0 0
        %2649 = vmatprep.subr.bf16.mxu0 0
        %2650 = vmatpush1.bf16.msra.mxu0 0
        %2651 = vmatprep.subr.bf16.mxu0 0
        %2652 = vmatpush1.bf16.msra.mxu0 0
        %2653 = vmatprep.subr.bf16.mxu0 0
        %2654 = vmatpush1.bf16.msra.mxu0 0
        %2655 = vmatprep.mubr.bf16.mxu0 0
        %2656 = vmatmul.mubr.bf16.gmra.mrb[0].mxu0 %v2587
        %v2657 = vpop.f32.mrb[0].mxu0
        %v2658 = vadd.f32 %v2572, %v2657
        %v2659 = vpop.f32.mrb[0].mxu0
        %v2660 = vpop.f32.mrb[0].mxu0
        %v2661 = vadd.f32 %v2572, %v2660
        %v2662 = vpop.f32.mrb[0].mxu0
        %2663 = vmatprep.mubr.bf16.mxu0 0
        %2664 = vmatmul.mubr.bf16.gmra.mrb[0].mxu0 %v2590
        %v2665 = vpop.f32.mrb[0].mxu0
        %v2666 = vadd.f32 %v2572, %v2665
        %v2667 = vpop.f32.mrb[0].mxu0
        %v2668 = vpop.f32.mrb[0].mxu0
        %v2669 = vadd.f32 %v2572, %v2668
        %v2670 = vpop.f32.mrb[0].mxu0
        %2671 = vmatprep.mubr.bf16.mxu0 0
        %2672 = vmatmul.mubr.bf16.gmra.mrb[0].mxu0 %v2593
        %v2673 = vpop.f32.mrb[0].mxu0
        %v2674 = vadd.f32 %v2572, %v2673
        %v2675 = vpop.f32.mrb[0].mxu0
        %v2676 = vpop.f32.mrb[0].mxu0
        %v2677 = vadd.f32 %v2572, %v2676
        %v2678 = vpop.f32.mrb[0].mxu0
        %2679 = vmatprep.mubr.bf16.mxu0 0
        %2680 = vmatmul.mubr.bf16.gmra.mrb[0].mxu0 %v2596
        %v2681 = vpop.f32.mrb[0].mxu0
        %v2682 = vadd.f32 %v2572, %v2681
        %v2683 = vpop.f32.mrb[0].mxu0
        %v2684 = vpop.f32.mrb[0].mxu0
        %v2685 = vadd.f32 %v2572, %v2684
        %v2686 = vpop.f32.mrb[0].mxu0
        %2687 = vmatprep.mubr.bf16.mxu0 0
        %2688 = vmatmul.mubr.bf16.gmra.mrb[0].mxu0 %v2599
        %v2689 = vpop.f32.mrb[0].mxu0
        %v2690 = vadd.f32 %v2572, %v2689
        %v2691 = vpop.f32.mrb[0].mxu0
        %v2692 = vpop.f32.mrb[0].mxu0
        %v2693 = vadd.f32 %v2572, %v2692
        %v2694 = vpop.f32.mrb[0].mxu0
        %2695 = vmatprep.mubr.bf16.mxu0 0
        %2696 = vmatmul.mubr.bf16.gmra.mrb[0].mxu0 %v2602
        %v2697 = vpop.f32.mrb[0].mxu0
        %v2698 = vadd.f32 %v2572, %v2697
        %v2699 = vpop.f32.mrb[0].mxu0
        %v2700 = vpop.f32.mrb[0].mxu0
        %v2701 = vadd.f32 %v2572, %v2700
        %v2702 = vpop.f32.mrb[0].mxu0
        %2703 = vmatprep.mubr.bf16.mxu0 0
        %2704 = vmatmul.mubr.bf16.gmra.mrb[0].mxu0 %v2605
        %v2705 = vpop.f32.mrb[0].mxu0
        %v2706 = vadd.f32 %v2572, %v2705
        %v2707 = vpop.f32.mrb[0].mxu0
        %v2708 = vpop.f32.mrb[0].mxu0
        %v2709 = vadd.f32 %v2572, %v2708
        %v2710 = vpop.f32.mrb[0].mxu0
        %2711 = vmatprep.mubr.bf16.mxu0 0
        %2712 = vmatmul.mubr.bf16.gmra.mrb[0].mxu0 %v2608
        %v2713 = vpop.f32.mrb[0].mxu0
        %v2714 = vadd.f32 %v2572, %v2713
        %v2715 = vpop.f32.mrb[0].mxu0
        %v2716 = vpop.f32.mrb[0].mxu0
        %v2717 = vadd.f32 %v2572, %v2716
        %v2718 = vpop.f32.mrb[0].mxu0
        %2719 = vmatprep.mubr.bf16.mxu0 0
        %2720 = vmatmul.mubr.bf16.gmra.mrb[0].mxu0 %v2611
        %v2721 = vpop.f32.mrb[0].mxu0
        %v2722 = vadd.f32 %v2572, %v2721
        %v2723 = vpop.f32.mrb[0].mxu0
        %v2724 = vpop.f32.mrb[0].mxu0
        %v2725 = vadd.f32 %v2572, %v2724
        %v2726 = vpop.f32.mrb[0].mxu0
        %2727 = vmatprep.mubr.bf16.mxu0 0
        %2728 = vmatmul.mubr.bf16.gmra.mrb[0].mxu0 %v2614
        %v2729 = vpop.f32.mrb[0].mxu0
        %v2730 = vadd.f32 %v2572, %v2729
        %v2731 = vpop.f32.mrb[0].mxu0
        %v2732 = vpop.f32.mrb[0].mxu0
        %v2733 = vadd.f32 %v2572, %v2732
        %v2734 = vpop.f32.mrb[0].mxu0
        %2735 = vdwg.mxu0
        %v2736 = vmax.f32 %v2658, 0.0
        %v2737 = vmax.f32 %v2661, 0.0
        %v2738 = vmax.f32 %v2666, 0.0
        %v2739 = vmax.f32 %v2669, 0.0
        %v2740 = vmax.f32 %v2674, 0.0
        %v2741 = vmax.f32 %v2677, 0.0
        %v2742 = vmax.f32 %v2682, 0.0
        %v2743 = vmax.f32 %v2685, 0.0
        %v2744 = vmax.f32 %v2690, 0.0
        %v2745 = vmax.f32 %v2693, 0.0
        %v2746 = vmax.f32 %v2698, 0.0
        %v2747 = vmax.f32 %v2701, 0.0
        %v2748 = vmax.f32 %v2706, 0.0
        %v2749 = vmax.f32 %v2709, 0.0
        %v2750 = vmax.f32 %v2714, 0.0
        %v2751 = vmax.f32 %v2717, 0.0
        %v2752 = vmax.f32 %v2722, 0.0
        %v2753 = vmax.f32 %v2725, 0.0
        %v2754 = vmax.f32 %v2730, 0.0
        %v2755 = vmax.f32 %v2733, 0.0
        %v2756 = vpack.c.bf16 %v2737, %v2736
        %v2757 = vpack.c.bf16 %v2739, %v2738
        %v2758 = vpack.c.bf16 %v2741, %v2740
        %v2759 = vpack.c.bf16 %v2743, %v2742
        %v2760 = vpack.c.bf16 %v2745, %v2744
        %v2761 = vpack.c.bf16 %v2747, %v2746
        %v2762 = vpack.c.bf16 %v2749, %v2748
        %v2763 = vpack.c.bf16 %v2751, %v2750
        %v2764 = vpack.c.bf16 %v2753, %v2752
        %v2765 = vpack.c.bf16 %v2755, %v2754
        %2776 = vrot.lane.b32.xlu0 %v2756, 64
        %v2777 = vpop.permute.xlu0 %2776
        %2778 = vrot.lane.b32.xlu0 %v2757, 64
        %v2779 = vpop.permute.xlu0 %2778
        %2780 = vrot.lane.b32.xlu0 %v2758, 64
        %v2781 = vpop.permute.xlu0 %2780
        %2782 = vrot.lane.b32.xlu0 %v2759, 64
        %v2783 = vpop.permute.xlu0 %2782
        %2784 = vrot.lane.b32.xlu0 %v2760, 64
        %v2785 = vpop.permute.xlu0 %2784
        %2786 = vrot.lane.b32.xlu0 %v2761, 64
        %v2787 = vpop.permute.xlu0 %2786
        %2788 = vrot.lane.b32.xlu0 %v2762, 64
        %v2789 = vpop.permute.xlu0 %2788
        %2790 = vrot.lane.b32.xlu0 %v2763, 64
        %v2791 = vpop.permute.xlu0 %2790
        %2792 = vrot.lane.b32.xlu0 %v2764, 64
        %v2793 = vpop.permute.xlu0 %2792
        %2794 = vrot.lane.b32.xlu0 %v2765, 64
        %v2795 = vpop.permute.xlu0 %2794
        %vm2806 = vcmask 1048064
        %2807 = vst.msk [vmem:[#allocation3] sm:$0xff] %vm2806, %v2777
        %2808 = vst.msk [vmem:[#allocation3 + $0x10] sm:$0xff] %vm2806, %v2779
        %2809 = vst.msk [vmem:[#allocation3 + $0x20] sm:$0xff] %vm2806, %v2781
        %2810 = vst.msk [vmem:[#allocation3 + $0x30] sm:$0xff] %vm2806, %v2783
        %2811 = vst.msk [vmem:[#allocation3 + $0x40] sm:$0xff] %vm2806, %v2785
        %2812 = vst.msk [vmem:[#allocation3 + $0x50] sm:$0xff] %vm2806, %v2787
        %2813 = vst.msk [vmem:[#allocation3 + $0x60] sm:$0xff] %vm2806, %v2789
        %2814 = vst.msk [vmem:[#allocation3 + $0x70] sm:$0xff] %vm2806, %v2791
        %2815 = vst.msk [vmem:[#allocation3 + $0x80] sm:$0xff] %vm2806, %v2793
        %2816 = vst.msk [vmem:[#allocation3 + $0x90] sm:$0xff] %vm2806, %v2795
        %vm2817 = vcmask 516096
        %vm2818 = vsmask.f32 256
        %vm2819 = vmand %vm2817, %vm2818
        %v2820 = vld [vmem:[#allocation3] sm:$0x1]
        %v2821 = vsel %vm2819, 0, %v2820
        %2822 = vst [vmem:[#allocation3] sm:$0x1] %v2821
        %v2823 = vld [vmem:[#allocation3 + $0x10] sm:$0x1]
        %v2824 = vsel %vm2819, 0, %v2823
        %2825 = vst [vmem:[#allocation3 + $0x10] sm:$0x1] %v2824
        %v2826 = vld [vmem:[#allocation3 + $0x20] sm:$0x1]
        %v2827 = vsel %vm2819, 0, %v2826
        %2828 = vst [vmem:[#allocation3 + $0x20] sm:$0x1] %v2827
        %v2829 = vld [vmem:[#allocation3 + $0x30] sm:$0x1]
        %v2830 = vsel %vm2819, 0, %v2829
        %2831 = vst [vmem:[#allocation3 + $0x30] sm:$0x1] %v2830
        %v2832 = vld [vmem:[#allocation3 + $0x40] sm:$0x1]
        %v2833 = vsel %vm2819, 0, %v2832
        %2834 = vst [vmem:[#allocation3 + $0x40] sm:$0x1] %v2833
        %v2835 = vld [vmem:[#allocation3 + $0x50] sm:$0x1]
        %v2836 = vsel %vm2819, 0, %v2835
        %2837 = vst [vmem:[#allocation3 + $0x50] sm:$0x1] %v2836
        %v2838 = vld [vmem:[#allocation3 + $0x60] sm:$0x1]
        %v2839 = vsel %vm2819, 0, %v2838
        %2840 = vst [vmem:[#allocation3 + $0x60] sm:$0x1] %v2839
        %v2841 = vld [vmem:[#allocation3 + $0x70] sm:$0x1]
        %v2842 = vsel %vm2819, 0, %v2841
        %2843 = vst [vmem:[#allocation3 + $0x70] sm:$0x1] %v2842
        %v2844 = vld [vmem:[#allocation3 + $0x80] sm:$0x1]
        %v2845 = vsel %vm2819, 0, %v2844
        %2846 = vst [vmem:[#allocation3 + $0x80] sm:$0x1] %v2845
        %v2847 = vld [vmem:[#allocation3 + $0x90] sm:$0x1]
        %v2848 = vsel %vm2819, 0, %v2847
        %2849 = vst [vmem:[#allocation3 + $0x90] sm:$0x1] %v2848
        %v2851 = vshrl.u32 %v2756, 16
        %v2853 = vrot.slane %v2851, 7
        %v2854 = vshll.u32 %v2756, 16
        %v2856 = vor.u32 %v2853, %v2854
        %v2858 = vshrl.u32 %v2757, 16
        %v2860 = vrot.slane %v2858, 7
        %v2861 = vshll.u32 %v2757, 16
        %v2863 = vor.u32 %v2860, %v2861
        %v2865 = vshrl.u32 %v2758, 16
        %v2867 = vrot.slane %v2865, 7
        %v2868 = vshll.u32 %v2758, 16
        %v2870 = vor.u32 %v2867, %v2868
        %v2872 = vshrl.u32 %v2759, 16
        %v2874 = vrot.slane %v2872, 7
        %v2875 = vshll.u32 %v2759, 16
        %v2877 = vor.u32 %v2874, %v2875
        %v2879 = vshrl.u32 %v2760, 16
        %v2881 = vrot.slane %v2879, 7
        %v2882 = vshll.u32 %v2760, 16
        %v2884 = vor.u32 %v2881, %v2882
        %v2886 = vshrl.u32 %v2761, 16
        %v2888 = vrot.slane %v2886, 7
        %v2889 = vshll.u32 %v2761, 16
        %v2891 = vor.u32 %v2888, %v2889
        %v2893 = vshrl.u32 %v2762, 16
        %v2895 = vrot.slane %v2893, 7
        %v2896 = vshll.u32 %v2762, 16
        %v2898 = vor.u32 %v2895, %v2896
        %v2900 = vshrl.u32 %v2763, 16
        %v2902 = vrot.slane %v2900, 7
        %v2903 = vshll.u32 %v2763, 16
        %v2905 = vor.u32 %v2902, %v2903
        %v2907 = vshrl.u32 %v2764, 16
        %v2909 = vrot.slane %v2907, 7
        %v2910 = vshll.u32 %v2764, 16
        %v2912 = vor.u32 %v2909, %v2910
        %v2914 = vshrl.u32 %v2765, 16
        %v2916 = vrot.slane %v2914, 7
        %v2917 = vshll.u32 %v2765, 16
        %v2919 = vor.u32 %v2916, %v2917
        %vm2930 = vcmask 523264
        %vm2931 = vsmask.f32 7938
        %vm2932 = vmand %vm2930, %vm2931
        %v2933 = vld [vmem:[#allocation3] sm:$0xff]
        %v2934 = vsel %vm2932, %v2856, %v2933
        %2935 = vst [vmem:[#allocation3] sm:$0xff] %v2934
        %v2936 = vld [vmem:[#allocation3 + $0x10] sm:$0xff]
        %v2937 = vsel %vm2932, %v2863, %v2936
        %2938 = vst [vmem:[#allocation3 + $0x10] sm:$0xff] %v2937
        %v2939 = vld [vmem:[#allocation3 + $0x20] sm:$0xff]
        %v2940 = vsel %vm2932, %v2870, %v2939
        %2941 = vst [vmem:[#allocation3 + $0x20] sm:$0xff] %v2940
        %v2942 = vld [vmem:[#allocation3 + $0x30] sm:$0xff]
        %v2943 = vsel %vm2932, %v2877, %v2942
        %2944 = vst [vmem:[#allocation3 + $0x30] sm:$0xff] %v2943
        %v2945 = vld [vmem:[#allocation3 + $0x40] sm:$0xff]
        %v2946 = vsel %vm2932, %v2884, %v2945
        %2947 = vst [vmem:[#allocation3 + $0x40] sm:$0xff] %v2946
        %v2948 = vld [vmem:[#allocation3 + $0x50] sm:$0xff]
        %v2949 = vsel %vm2932, %v2891, %v2948
        %2950 = vst [vmem:[#allocation3 + $0x50] sm:$0xff] %v2949
        %v2951 = vld [vmem:[#allocation3 + $0x60] sm:$0xff]
        %v2952 = vsel %vm2932, %v2898, %v2951
        %2953 = vst [vmem:[#allocation3 + $0x60] sm:$0xff] %v2952
        %v2954 = vld [vmem:[#allocation3 + $0x70] sm:$0xff]
        %v2955 = vsel %vm2932, %v2905, %v2954
        %2956 = vst [vmem:[#allocation3 + $0x70] sm:$0xff] %v2955
        %v2957 = vld [vmem:[#allocation3 + $0x80] sm:$0xff]
        %v2958 = vsel %vm2932, %v2912, %v2957
        %2959 = vst [vmem:[#allocation3 + $0x80] sm:$0xff] %v2958
        %v2960 = vld [vmem:[#allocation3 + $0x90] sm:$0xff]
        %v2961 = vsel %vm2932, %v2919, %v2960
        %2962 = vst [vmem:[#allocation3 + $0x90] sm:$0xff] %v2961
        %vm2963 = vcmask 523271
        %vm2964 = vsmask.f32 7966
        %vm2965 = vmand %vm2963, %vm2964
        %v2966 = vld [vmem:[#allocation3 + $0x8] sm:$0x80]
        %v2967 = vsel %vm2965, 0, %v2966
        %2968 = vst [vmem:[#allocation3 + $0x8] sm:$0x80] %v2967
        %v2969 = vld [vmem:[#allocation3 + $0x18] sm:$0x80]
        %v2970 = vsel %vm2965, 0, %v2969
        %2971 = vst [vmem:[#allocation3 + $0x18] sm:$0x80] %v2970
        %v2972 = vld [vmem:[#allocation3 + $0x28] sm:$0x80]
        %v2973 = vsel %vm2965, 0, %v2972
        %2974 = vst [vmem:[#allocation3 + $0x28] sm:$0x80] %v2973
        %v2975 = vld [vmem:[#allocation3 + $0x38] sm:$0x80]
        %v2976 = vsel %vm2965, 0, %v2975
        %2977 = vst [vmem:[#allocation3 + $0x38] sm:$0x80] %v2976
        %v2978 = vld [vmem:[#allocation3 + $0x48] sm:$0x80]
        %v2979 = vsel %vm2965, 0, %v2978
        %2980 = vst [vmem:[#allocation3 + $0x48] sm:$0x80] %v2979
        %v2981 = vld [vmem:[#allocation3 + $0x58] sm:$0x80]
        %v2982 = vsel %vm2965, 0, %v2981
        %2983 = vst [vmem:[#allocation3 + $0x58] sm:$0x80] %v2982
        %v2984 = vld [vmem:[#allocation3 + $0x68] sm:$0x80]
        %v2985 = vsel %vm2965, 0, %v2984
        %2986 = vst [vmem:[#allocation3 + $0x68] sm:$0x80] %v2985
        %v2987 = vld [vmem:[#allocation3 + $0x78] sm:$0x80]
        %v2988 = vsel %vm2965, 0, %v2987
        %2989 = vst [vmem:[#allocation3 + $0x78] sm:$0x80] %v2988
        %v2990 = vld [vmem:[#allocation3 + $0x88] sm:$0x80]
        %v2991 = vsel %vm2965, 0, %v2990
        %2992 = vst [vmem:[#allocation3 + $0x88] sm:$0x80] %v2991
        %v2993 = vld [vmem:[#allocation3 + $0x98] sm:$0x80]
        %v2994 = vsel %vm2965, 0, %v2993
        %2995 = vst [vmem:[#allocation3 + $0x98] sm:$0x80] %v2994
        %v2996 = vrot.slane %v2854, 1
        %v2997 = vor.u32 %v2851, %v2996
        %v2998 = vrot.slane %v2861, 1
        %v2999 = vor.u32 %v2858, %v2998
        %v3000 = vrot.slane %v2868, 1
        %v3001 = vor.u32 %v2865, %v3000
        %v3002 = vrot.slane %v2875, 1
        %v3003 = vor.u32 %v2872, %v3002
        %v3004 = vrot.slane %v2882, 1
        %v3005 = vor.u32 %v2879, %v3004
        %v3006 = vrot.slane %v2889, 1
        %v3007 = vor.u32 %v2886, %v3006
        %v3008 = vrot.slane %v2896, 1
        %v3009 = vor.u32 %v2893, %v3008
        %v3010 = vrot.slane %v2903, 1
        %v3011 = vor.u32 %v2900, %v3010
        %v3012 = vrot.slane %v2910, 1
        %v3013 = vor.u32 %v2907, %v3012
        %v3014 = vrot.slane %v2917, 1
        %v3015 = vor.u32 %v2914, %v3014
        %vm3026 = vmand %vm2930, %vm353
        %v3027 = vld [vmem:[#allocation3 + $0x8] sm:$0xff]
        %v3028 = vsel %vm3026, %v2997, %v3027
        %3029 = vst [vmem:[#allocation3 + $0x8] sm:$0xff] %v3028
        %v3030 = vld [vmem:[#allocation3 + $0x18] sm:$0xff]
        %v3031 = vsel %vm3026, %v2999, %v3030
        %3032 = vst [vmem:[#allocation3 + $0x18] sm:$0xff] %v3031
        %v3033 = vld [vmem:[#allocation3 + $0x28] sm:$0xff]
        %v3034 = vsel %vm3026, %v3001, %v3033
        %3035 = vst [vmem:[#allocation3 + $0x28] sm:$0xff] %v3034
        %v3036 = vld [vmem:[#allocation3 + $0x38] sm:$0xff]
        %v3037 = vsel %vm3026, %v3003, %v3036
        %3038 = vst [vmem:[#allocation3 + $0x38] sm:$0xff] %v3037
        %v3039 = vld [vmem:[#allocation3 + $0x48] sm:$0xff]
        %v3040 = vsel %vm3026, %v3005, %v3039
        %3041 = vst [vmem:[#allocation3 + $0x48] sm:$0xff] %v3040
        %v3042 = vld [vmem:[#allocation3 + $0x58] sm:$0xff]
        %v3043 = vsel %vm3026, %v3007, %v3042
        %3044 = vst [vmem:[#allocation3 + $0x58] sm:$0xff] %v3043
        %v3045 = vld [vmem:[#allocation3 + $0x68] sm:$0xff]
        %v3046 = vsel %vm3026, %v3009, %v3045
        %3047 = vst [vmem:[#allocation3 + $0x68] sm:$0xff] %v3046
        %v3048 = vld [vmem:[#allocation3 + $0x78] sm:$0xff]
        %v3049 = vsel %vm3026, %v3011, %v3048
        %3050 = vst [vmem:[#allocation3 + $0x78] sm:$0xff] %v3049
        %v3051 = vld [vmem:[#allocation3 + $0x88] sm:$0xff]
        %v3052 = vsel %vm3026, %v3013, %v3051
        %3053 = vst [vmem:[#allocation3 + $0x88] sm:$0xff] %v3052
        %v3054 = vld [vmem:[#allocation3 + $0x98] sm:$0xff]
        %v3055 = vsel %vm3026, %v3015, %v3054
        %3056 = vst [vmem:[#allocation3 + $0x98] sm:$0xff] %v3055
        %p3057 = scmp.eq.s32.totalorder %s24, 0
        // Predicated region
        $region41: #{vgg_feature_extractor.1} parent=39 // pred_check
          %p3058 = pneg %p3057
        $region42: #{vgg_feature_extractor.1} parent=39 // pred_check_branch
          %3060 = sbr.rel (%p3058) target = $region44
        $region43: #{vgg_feature_extractor.1} parent=39 // pred_region
          %3061 = vst [vmem:[#allocation3] sm:$0xff] 0
          %vm3062 = vcmask 523264
          %3063 = vst.msk [vmem:[#allocation3 + $0x8] sm:$0xff] %vm3062, 0
        $region44: #{vgg_feature_extractor.1} parent=39 // pred_fallthru
          _
        %p3064 = scmp.eq.s32.totalorder %s24, 1
        // Predicated region
        $region45: #{vgg_feature_extractor.1} parent=39 // pred_check
          %p3065 = pneg %p3064
        $region46: #{vgg_feature_extractor.1} parent=39 // pred_check_branch
          %3067 = sbr.rel (%p3065) target = $region48
        $region47: #{vgg_feature_extractor.1} parent=39 // pred_region
          %s3068 = scalar_lea.vmem [#allocation3], 144
          %3069 = vst [vmem:[%s3068] sm:$0xff] 0
          %vm3070 = vcmask 523264
          %3071 = vst.msk [vmem:[%s3068 + $0x8] sm:$0xff] %vm3070, 0
        $region48: #{vgg_feature_extractor.1} parent=39 // pred_fallthru
          _
        %v3072 = vld [vmem:[#allocation3] sm:$0xff]
        %v3073 = vld [vmem:[#allocation3 + $0x8] sm:$0xff]
        %v3074 = vld [vmem:[#allocation3 + $0x10] sm:$0xff]
        %v3075 = vld [vmem:[#allocation3 + $0x18] sm:$0xff]
        %v3076 = vld [vmem:[#allocation3 + $0x20] sm:$0xff]
        %v3077 = vld [vmem:[#allocation3 + $0x28] sm:$0xff]
        %v3078 = vld [vmem:[#allocation3 + $0x30] sm:$0xff]
        %v3079 = vld [vmem:[#allocation3 + $0x38] sm:$0xff]
        %v3080 = vld [vmem:[#allocation3 + $0x40] sm:$0xff]
        %v3081 = vld [vmem:[#allocation3 + $0x48] sm:$0xff]
        %v3082 = vld [vmem:[#allocation3 + $0x50] sm:$0xff]
        %v3083 = vld [vmem:[#allocation3 + $0x58] sm:$0xff]
        %v3084 = vld [vmem:[#allocation3 + $0x60] sm:$0xff]
        %v3085 = vld [vmem:[#allocation3 + $0x68] sm:$0xff]
        %v3086 = vld [vmem:[#allocation3 + $0x70] sm:$0xff]
        %v3087 = vld [vmem:[#allocation3 + $0x78] sm:$0xff]
        %v3088 = vld [vmem:[%s3] sm:$0xf]
        %v3089 = vld [vmem:[%s3 + $0x4] sm:$0xf]
        %v3090 = vld [vmem:[%s3 + $0x8] sm:$0xf]
        %v3091 = vld [vmem:[%s3 + $0xc] sm:$0xf]
        %v3092 = vld [vmem:[%s3 + $0x10] sm:$0xf]
        %v3093 = vld [vmem:[%s3 + $0x14] sm:$0xf]
        %v3094 = vld [vmem:[%s3 + $0x18] sm:$0xf]
        %v3095 = vld [vmem:[%s3 + $0x1c] sm:$0xf]
        %v3096 = vld [vmem:[%s3 + $0x20] sm:$0xf]
        %v3097 = vld [vmem:[%s3 + $0x24] sm:$0xf]
        %v3098 = vld [vmem:[%s3 + $0x28] sm:$0xf]
        %v3099 = vld [vmem:[%s3 + $0x2c] sm:$0xf]
        %v3100 = vld [vmem:[%s3 + $0x30] sm:$0xf]
        %v3101 = vld [vmem:[%s3 + $0x34] sm:$0xf]
        %v3102 = vld [vmem:[%s3 + $0x38] sm:$0xf]
        %v3103 = vld [vmem:[%s3 + $0x3c] sm:$0xf]
        %v3104 = vld [vmem:[%s3 + $0x40] sm:$0xf]
        %v3105 = vld [vmem:[%s3 + $0x44] sm:$0xf]
        %v3106 = vld [vmem:[%s3 + $0x48] sm:$0xf]
        %v3107 = vld [vmem:[%s3 + $0x4c] sm:$0xf]
        %v3108 = vld [vmem:[%s3 + $0x50] sm:$0xf]
        %v3109 = vld [vmem:[%s3 + $0x54] sm:$0xf]
        %v3110 = vld [vmem:[%s3 + $0x58] sm:$0xf]
        %v3111 = vld [vmem:[%s3 + $0x5c] sm:$0xf]
        %s3112 = scalar_lea.vmem [#allocation3], 16
        %v3113 = vld [vmem:[%s3112] sm:$0xff]
        %v3114 = vld [vmem:[%s3112 + $0x8] sm:$0xff]
        %v3115 = vld [vmem:[%s3112 + $0x10] sm:$0xff]
        %v3116 = vld [vmem:[%s3112 + $0x18] sm:$0xff]
        %v3117 = vld [vmem:[%s3112 + $0x20] sm:$0xff]
        %v3118 = vld [vmem:[%s3112 + $0x28] sm:$0xff]
        %v3119 = vld [vmem:[%s3112 + $0x30] sm:$0xff]
        %v3120 = vld [vmem:[%s3112 + $0x38] sm:$0xff]
        %v3121 = vld [vmem:[%s3112 + $0x40] sm:$0xff]
        %v3122 = vld [vmem:[%s3112 + $0x48] sm:$0xff]
        %v3123 = vld [vmem:[%s3112 + $0x50] sm:$0xff]
        %v3124 = vld [vmem:[%s3112 + $0x58] sm:$0xff]
        %v3125 = vld [vmem:[%s3112 + $0x60] sm:$0xff]
        %v3126 = vld [vmem:[%s3112 + $0x68] sm:$0xff]
        %v3127 = vld [vmem:[%s3112 + $0x70] sm:$0xff]
        %v3128 = vld [vmem:[%s3112 + $0x78] sm:$0xff]
        %s3129 = scalar_lea.vmem %s3, 96
        %v3130 = vld [vmem:[%s3129] sm:$0xf]
        %v3131 = vld [vmem:[%s3129 + $0x4] sm:$0xf]
        %v3132 = vld [vmem:[%s3129 + $0x8] sm:$0xf]
        %v3133 = vld [vmem:[%s3129 + $0xc] sm:$0xf]
        %v3134 = vld [vmem:[%s3129 + $0x10] sm:$0xf]
        %v3135 = vld [vmem:[%s3129 + $0x14] sm:$0xf]
        %v3136 = vld [vmem:[%s3129 + $0x18] sm:$0xf]
        %v3137 = vld [vmem:[%s3129 + $0x1c] sm:$0xf]
        %v3138 = vld [vmem:[%s3129 + $0x20] sm:$0xf]
        %v3139 = vld [vmem:[%s3129 + $0x24] sm:$0xf]
        %v3140 = vld [vmem:[%s3129 + $0x28] sm:$0xf]
        %v3141 = vld [vmem:[%s3129 + $0x2c] sm:$0xf]
        %v3142 = vld [vmem:[%s3129 + $0x30] sm:$0xf]
        %v3143 = vld [vmem:[%s3129 + $0x34] sm:$0xf]
        %v3144 = vld [vmem:[%s3129 + $0x38] sm:$0xf]
        %v3145 = vld [vmem:[%s3129 + $0x3c] sm:$0xf]
        %v3146 = vld [vmem:[%s3129 + $0x40] sm:$0xf]
        %v3147 = vld [vmem:[%s3129 + $0x44] sm:$0xf]
        %v3148 = vld [vmem:[%s3129 + $0x48] sm:$0xf]
        %v3149 = vld [vmem:[%s3129 + $0x4c] sm:$0xf]
        %v3150 = vld [vmem:[%s3129 + $0x50] sm:$0xf]
        %v3151 = vld [vmem:[%s3129 + $0x54] sm:$0xf]
        %v3152 = vld [vmem:[%s3129 + $0x58] sm:$0xf]
        %v3153 = vld [vmem:[%s3129 + $0x5c] sm:$0xf]
        %v3178 = vunpack.c.l.b16 %v3130
        %v3179 = vunpack.c.l.b16 %v3131
        %v3180 = vunpack.c.l.b16 %v3132
        %v3181 = vunpack.c.l.b16 %v3133
        %v3182 = vunpack.c.l.b16 %v3134
        %v3183 = vunpack.c.l.b16 %v3135
        %v3184 = vunpack.c.l.b16 %v3136
        %v3185 = vunpack.c.l.b16 %v3137
        %v3186 = vunpack.c.l.b16 %v3138
        %v3187 = vunpack.c.l.b16 %v3139
        %v3188 = vunpack.c.l.b16 %v3140
        %v3189 = vunpack.c.l.b16 %v3141
        %v3190 = vunpack.c.l.b16 %v3142
        %v3191 = vunpack.c.l.b16 %v3143
        %v3192 = vunpack.c.l.b16 %v3144
        %v3193 = vunpack.c.l.b16 %v3145
        %v3194 = vunpack.c.l.b16 %v3146
        %v3195 = vunpack.c.l.b16 %v3147
        %v3196 = vunpack.c.l.b16 %v3148
        %v3197 = vunpack.c.l.b16 %v3149
        %v3198 = vunpack.c.l.b16 %v3150
        %v3199 = vunpack.c.l.b16 %v3151
        %v3200 = vunpack.c.l.b16 %v3152
        %v3201 = vunpack.c.l.b16 %v3153
        %v3202 = vpack.c.b16 %v3179, %v3178
        %v3203 = vpack.c.b16 %v3181, %v3180
        %v3204 = vpack.c.b16 %v3183, %v3182
        %v3205 = vpack.c.b16 %v3185, %v3184
        %v3206 = vpack.c.b16 %v3187, %v3186
        %v3207 = vpack.c.b16 %v3189, %v3188
        %v3208 = vpack.c.b16 %v3191, %v3190
        %v3209 = vpack.c.b16 %v3193, %v3192
        %v3210 = vpack.c.b16 %v3195, %v3194
        %v3211 = vpack.c.b16 %v3197, %v3196
        %v3212 = vpack.c.b16 %v3199, %v3198
        %v3213 = vpack.c.b16 %v3201, %v3200
        %vm3226 = vcmask 523264
        %v3228 = vsel %vm3226, %v3114, 0
        %v3231 = vsel %vm3226, %v3116, 0
        %v3234 = vsel %vm3226, %v3118, 0
        %v3237 = vsel %vm3226, %v3120, 0
        %v3240 = vsel %vm3226, %v3122, 0
        %v3243 = vsel %vm3226, %v3124, 0
        %v3246 = vsel %vm3226, %v3126, 0
        %v3249 = vsel %vm3226, %v3128, 0
        %3251 = vmatprep.subr.bf16.mxu0 0
        %3252 = vmatpush1.bf16.msra.mxu0 %v3202
        %3253 = vmatprep.subr.bf16.mxu0 0
        %3254 = vmatpush1.bf16.msra.mxu0 %v3203
        %3255 = vmatprep.subr.bf16.mxu0 0
        %3256 = vmatpush1.bf16.msra.mxu0 %v3204
        %3257 = vmatprep.subr.bf16.mxu0 0
        %3258 = vmatpush1.bf16.msra.mxu0 %v3205
        %3259 = vmatprep.subr.bf16.mxu0 0
        %3260 = vmatpush1.bf16.msra.mxu0 %v3206
        %3261 = vmatprep.subr.bf16.mxu0 0
        %3262 = vmatpush1.bf16.msra.mxu0 %v3207
        %3263 = vmatprep.subr.bf16.mxu0 0
        %3264 = vmatpush1.bf16.msra.mxu0 %v3208
        %3265 = vmatprep.subr.bf16.mxu0 0
        %3266 = vmatpush1.bf16.msra.mxu0 %v3209
        %3267 = vmatprep.subr.bf16.mxu0 0
        %3268 = vmatpush1.bf16.msra.mxu0 %v3210
        %3269 = vmatprep.subr.bf16.mxu0 0
        %3270 = vmatpush1.bf16.msra.mxu0 %v3211
        %3271 = vmatprep.subr.bf16.mxu0 0
        %3272 = vmatpush1.bf16.msra.mxu0 %v3212
        %3273 = vmatprep.subr.bf16.mxu0 0
        %3274 = vmatpush1.bf16.msra.mxu0 %v3213
        %3275 = vmatprep.subr.bf16.mxu0 0
        %3276 = vmatpush1.bf16.msra.mxu0 0
        %3277 = vmatprep.subr.bf16.mxu0 0
        %3278 = vmatpush1.bf16.msra.mxu0 0
        %3279 = vmatprep.subr.bf16.mxu0 0
        %3280 = vmatpush1.bf16.msra.mxu0 0
        %3281 = vmatprep.subr.bf16.mxu0 0
        %3282 = vmatpush1.bf16.msra.mxu0 0
        %3283 = vmatprep.mubr.bf16.mxu0 %v3228
        %3284 = vmatmul.mubr.bf16.gmra.mrb[0].mxu0 %v3113
        %v3285 = vpop.f32.mrb[0].mxu0
        %v3286 = vadd.f32 0.0, %v3285
        %v3287 = vpop.f32.mrb[0].mxu0
        %v3288 = vpop.f32.mrb[0].mxu0
        %v3289 = vadd.f32 0.0, %v3288
        %v3290 = vpop.f32.mrb[0].mxu0
        %3291 = vmatprep.mubr.bf16.mxu0 %v3231
        %3292 = vmatmul.mubr.bf16.gmra.mrb[0].mxu0 %v3115
        %v3293 = vpop.f32.mrb[0].mxu0
        %v3294 = vadd.f32 0.0, %v3293
        %v3295 = vpop.f32.mrb[0].mxu0
        %v3296 = vpop.f32.mrb[0].mxu0
        %v3297 = vadd.f32 0.0, %v3296
        %v3298 = vpop.f32.mrb[0].mxu0
        %3299 = vmatprep.mubr.bf16.mxu0 %v3234
        %3300 = vmatmul.mubr.bf16.gmra.mrb[0].mxu0 %v3117
        %v3301 = vpop.f32.mrb[0].mxu0
        %v3302 = vadd.f32 0.0, %v3301
        %v3303 = vpop.f32.mrb[0].mxu0
        %v3304 = vpop.f32.mrb[0].mxu0
        %v3305 = vadd.f32 0.0, %v3304
        %v3306 = vpop.f32.mrb[0].mxu0
        %3307 = vmatprep.mubr.bf16.mxu0 %v3237
        %3308 = vmatmul.mubr.bf16.gmra.mrb[0].mxu0 %v3119
        %v3309 = vpop.f32.mrb[0].mxu0
        %v3310 = vadd.f32 0.0, %v3309
        %v3311 = vpop.f32.mrb[0].mxu0
        %v3312 = vpop.f32.mrb[0].mxu0
        %v3313 = vadd.f32 0.0, %v3312
        %v3314 = vpop.f32.mrb[0].mxu0
        %3315 = vmatprep.mubr.bf16.mxu0 %v3240
        %3316 = vmatmul.mubr.bf16.gmra.mrb[0].mxu0 %v3121
        %v3317 = vpop.f32.mrb[0].mxu0
        %v3318 = vadd.f32 0.0, %v3317
        %v3319 = vpop.f32.mrb[0].mxu0
        %v3320 = vpop.f32.mrb[0].mxu0
        %v3321 = vadd.f32 0.0, %v3320
        %v3322 = vpop.f32.mrb[0].mxu0
        %3323 = vmatprep.mubr.bf16.mxu0 %v3243
        %3324 = vmatmul.mubr.bf16.gmra.mrb[0].mxu0 %v3123
        %v3325 = vpop.f32.mrb[0].mxu0
        %v3326 = vadd.f32 0.0, %v3325
        %v3327 = vpop.f32.mrb[0].mxu0
        %v3328 = vpop.f32.mrb[0].mxu0
        %v3329 = vadd.f32 0.0, %v3328
        %v3330 = vpop.f32.mrb[0].mxu0
        %3331 = vmatprep.mubr.bf16.mxu0 %v3246
        %3332 = vmatmul.mubr.bf16.gmra.mrb[0].mxu0 %v3125
        %v3333 = vpop.f32.mrb[0].mxu0
        %v3334 = vadd.f32 0.0, %v3333
        %v3335 = vpop.f32.mrb[0].mxu0
        %v3336 = vpop.f32.mrb[0].mxu0
        %v3337 = vadd.f32 0.0, %v3336
        %v3338 = vpop.f32.mrb[0].mxu0
        %3339 = vmatprep.mubr.bf16.mxu0 %v3249
        %3340 = vmatmul.mubr.bf16.gmra.mrb[0].mxu0 %v3127
        %v3341 = vpop.f32.mrb[0].mxu0
        %v3342 = vadd.f32 0.0, %v3341
        %v3343 = vpop.f32.mrb[0].mxu0
        %v3344 = vpop.f32.mrb[0].mxu0
        %v3345 = vadd.f32 0.0, %v3344
        %v3346 = vpop.f32.mrb[0].mxu0
        %3347 = vdwg.mxu0
        %v3372 = vunpack.c.l.b16 %v3088
        %v3373 = vunpack.c.l.b16 %v3089
        %v3374 = vunpack.c.l.b16 %v3090
        %v3375 = vunpack.c.l.b16 %v3091
        %v3376 = vunpack.c.l.b16 %v3092
        %v3377 = vunpack.c.l.b16 %v3093
        %v3378 = vunpack.c.l.b16 %v3094
        %v3379 = vunpack.c.l.b16 %v3095
        %v3380 = vunpack.c.l.b16 %v3096
        %v3381 = vunpack.c.l.b16 %v3097
        %v3382 = vunpack.c.l.b16 %v3098
        %v3383 = vunpack.c.l.b16 %v3099
        %v3384 = vunpack.c.l.b16 %v3100
        %v3385 = vunpack.c.l.b16 %v3101
        %v3386 = vunpack.c.l.b16 %v3102
        %v3387 = vunpack.c.l.b16 %v3103
        %v3388 = vunpack.c.l.b16 %v3104
        %v3389 = vunpack.c.l.b16 %v3105
        %v3390 = vunpack.c.l.b16 %v3106
        %v3391 = vunpack.c.l.b16 %v3107
        %v3392 = vunpack.c.l.b16 %v3108
        %v3393 = vunpack.c.l.b16 %v3109
        %v3394 = vunpack.c.l.b16 %v3110
        %v3395 = vunpack.c.l.b16 %v3111
        %v3396 = vpack.c.b16 %v3373, %v3372
        %v3397 = vpack.c.b16 %v3375, %v3374
        %v3398 = vpack.c.b16 %v3377, %v3376
        %v3399 = vpack.c.b16 %v3379, %v3378
        %v3400 = vpack.c.b16 %v3381, %v3380
        %v3401 = vpack.c.b16 %v3383, %v3382
        %v3402 = vpack.c.b16 %v3385, %v3384
        %v3403 = vpack.c.b16 %v3387, %v3386
        %v3404 = vpack.c.b16 %v3389, %v3388
        %v3405 = vpack.c.b16 %v3391, %v3390
        %v3406 = vpack.c.b16 %v3393, %v3392
        %v3407 = vpack.c.b16 %v3395, %v3394
        %v3421 = vsel %vm3226, %v3073, 0
        %v3424 = vsel %vm3226, %v3075, 0
        %v3427 = vsel %vm3226, %v3077, 0
        %v3430 = vsel %vm3226, %v3079, 0
        %v3433 = vsel %vm3226, %v3081, 0
        %v3436 = vsel %vm3226, %v3083, 0
        %v3439 = vsel %vm3226, %v3085, 0
        %v3442 = vsel %vm3226, %v3087, 0
        %3444 = vmatprep.subr.bf16.mxu0 0
        %3445 = vmatpush1.bf16.msra.mxu0 %v3396
        %3446 = vmatprep.subr.bf16.mxu0 0
        %3447 = vmatpush1.bf16.msra.mxu0 %v3397
        %3448 = vmatprep.subr.bf16.mxu0 0
        %3449 = vmatpush1.bf16.msra.mxu0 %v3398
        %3450 = vmatprep.subr.bf16.mxu0 0
        %3451 = vmatpush1.bf16.msra.mxu0 %v3399
        %3452 = vmatprep.subr.bf16.mxu0 0
        %3453 = vmatpush1.bf16.msra.mxu0 %v3400
        %3454 = vmatprep.subr.bf16.mxu0 0
        %3455 = vmatpush1.bf16.msra.mxu0 %v3401
        %3456 = vmatprep.subr.bf16.mxu0 0
        %3457 = vmatpush1.bf16.msra.mxu0 %v3402
        %3458 = vmatprep.subr.bf16.mxu0 0
        %3459 = vmatpush1.bf16.msra.mxu0 %v3403
        %3460 = vmatprep.subr.bf16.mxu0 0
        %3461 = vmatpush1.bf16.msra.mxu0 %v3404
        %3462 = vmatprep.subr.bf16.mxu0 0
        %3463 = vmatpush1.bf16.msra.mxu0 %v3405
        %3464 = vmatprep.subr.bf16.mxu0 0
        %3465 = vmatpush1.bf16.msra.mxu0 %v3406
        %3466 = vmatprep.subr.bf16.mxu0 0
        %3467 = vmatpush1.bf16.msra.mxu0 %v3407
        %3468 = vmatprep.subr.bf16.mxu0 0
        %3469 = vmatpush1.bf16.msra.mxu0 0
        %3470 = vmatprep.subr.bf16.mxu0 0
        %3471 = vmatpush1.bf16.msra.mxu0 0
        %3472 = vmatprep.subr.bf16.mxu0 0
        %3473 = vmatpush1.bf16.msra.mxu0 0
        %3474 = vmatprep.subr.bf16.mxu0 0
        %3475 = vmatpush1.bf16.msra.mxu0 0
        %3476 = vmatprep.mubr.bf16.mxu0 %v3421
        %3477 = vmatmul.mubr.bf16.gmra.mrb[0].mxu0 %v3072
        %v3478 = vpop.f32.mrb[0].mxu0
        %v3479 = vadd.f32 %v3286, %v3478
        %v3480 = vpop.f32.mrb[0].mxu0
        %v3481 = vpop.f32.mrb[0].mxu0
        %v3482 = vadd.f32 %v3289, %v3481
        %v3483 = vpop.f32.mrb[0].mxu0
        %3484 = vmatprep.mubr.bf16.mxu0 %v3424
        %3485 = vmatmul.mubr.bf16.gmra.mrb[0].mxu0 %v3074
        %v3486 = vpop.f32.mrb[0].mxu0
        %v3487 = vadd.f32 %v3294, %v3486
        %v3488 = vpop.f32.mrb[0].mxu0
        %v3489 = vpop.f32.mrb[0].mxu0
        %v3490 = vadd.f32 %v3297, %v3489
        %v3491 = vpop.f32.mrb[0].mxu0
        %3492 = vmatprep.mubr.bf16.mxu0 %v3427
        %3493 = vmatmul.mubr.bf16.gmra.mrb[0].mxu0 %v3076
        %v3494 = vpop.f32.mrb[0].mxu0
        %v3495 = vadd.f32 %v3302, %v3494
        %v3496 = vpop.f32.mrb[0].mxu0
        %v3497 = vpop.f32.mrb[0].mxu0
        %v3498 = vadd.f32 %v3305, %v3497
        %v3499 = vpop.f32.mrb[0].mxu0
        %3500 = vmatprep.mubr.bf16.mxu0 %v3430
        %3501 = vmatmul.mubr.bf16.gmra.mrb[0].mxu0 %v3078
        %v3502 = vpop.f32.mrb[0].mxu0
        %v3503 = vadd.f32 %v3310, %v3502
        %v3504 = vpop.f32.mrb[0].mxu0
        %v3505 = vpop.f32.mrb[0].mxu0
        %v3506 = vadd.f32 %v3313, %v3505
        %v3507 = vpop.f32.mrb[0].mxu0
        %3508 = vmatprep.mubr.bf16.mxu0 %v3433
        %3509 = vmatmul.mubr.bf16.gmra.mrb[0].mxu0 %v3080
        %v3510 = vpop.f32.mrb[0].mxu0
        %v3511 = vadd.f32 %v3318, %v3510
        %v3512 = vpop.f32.mrb[0].mxu0
        %v3513 = vpop.f32.mrb[0].mxu0
        %v3514 = vadd.f32 %v3321, %v3513
        %v3515 = vpop.f32.mrb[0].mxu0
        %3516 = vmatprep.mubr.bf16.mxu0 %v3436
        %3517 = vmatmul.mubr.bf16.gmra.mrb[0].mxu0 %v3082
        %v3518 = vpop.f32.mrb[0].mxu0
        %v3519 = vadd.f32 %v3326, %v3518
        %v3520 = vpop.f32.mrb[0].mxu0
        %v3521 = vpop.f32.mrb[0].mxu0
        %v3522 = vadd.f32 %v3329, %v3521
        %v3523 = vpop.f32.mrb[0].mxu0
        %3524 = vmatprep.mubr.bf16.mxu0 %v3439
        %3525 = vmatmul.mubr.bf16.gmra.mrb[0].mxu0 %v3084
        %v3526 = vpop.f32.mrb[0].mxu0
        %v3527 = vadd.f32 %v3334, %v3526
        %v3528 = vpop.f32.mrb[0].mxu0
        %v3529 = vpop.f32.mrb[0].mxu0
        %v3530 = vadd.f32 %v3337, %v3529
        %v3531 = vpop.f32.mrb[0].mxu0
        %3532 = vmatprep.mubr.bf16.mxu0 %v3442
        %3533 = vmatmul.mubr.bf16.gmra.mrb[0].mxu0 %v3086
        %v3534 = vpop.f32.mrb[0].mxu0
        %v3535 = vadd.f32 %v3342, %v3534
        %v3536 = vpop.f32.mrb[0].mxu0
        %v3537 = vpop.f32.mrb[0].mxu0
        %v3538 = vadd.f32 %v3345, %v3537
        %v3539 = vpop.f32.mrb[0].mxu0
        %3540 = vdwg.mxu0
        %s3541 = scalar_lea.vmem [#allocation3], 32
        %v3542 = vld [vmem:[%s3541] sm:$0xff]
        %v3543 = vld [vmem:[%s3541 + $0x8] sm:$0xff]
        %v3544 = vld [vmem:[%s3541 + $0x10] sm:$0xff]
        %v3545 = vld [vmem:[%s3541 + $0x18] sm:$0xff]
        %v3546 = vld [vmem:[%s3541 + $0x20] sm:$0xff]
        %v3547 = vld [vmem:[%s3541 + $0x28] sm:$0xff]
        %v3548 = vld [vmem:[%s3541 + $0x30] sm:$0xff]
        %v3549 = vld [vmem:[%s3541 + $0x38] sm:$0xff]
        %v3550 = vld [vmem:[%s3541 + $0x40] sm:$0xff]
        %v3551 = vld [vmem:[%s3541 + $0x48] sm:$0xff]
        %v3552 = vld [vmem:[%s3541 + $0x50] sm:$0xff]
        %v3553 = vld [vmem:[%s3541 + $0x58] sm:$0xff]
        %v3554 = vld [vmem:[%s3541 + $0x60] sm:$0xff]
        %v3555 = vld [vmem:[%s3541 + $0x68] sm:$0xff]
        %v3556 = vld [vmem:[%s3541 + $0x70] sm:$0xff]
        %v3557 = vld [vmem:[%s3541 + $0x78] sm:$0xff]
        %s3558 = scalar_lea.vmem %s3, 192
        %v3559 = vld [vmem:[%s3558] sm:$0xf]
        %v3560 = vld [vmem:[%s3558 + $0x4] sm:$0xf]
        %v3561 = vld [vmem:[%s3558 + $0x8] sm:$0xf]
        %v3562 = vld [vmem:[%s3558 + $0xc] sm:$0xf]
        %v3563 = vld [vmem:[%s3558 + $0x10] sm:$0xf]
        %v3564 = vld [vmem:[%s3558 + $0x14] sm:$0xf]
        %v3565 = vld [vmem:[%s3558 + $0x18] sm:$0xf]
        %v3566 = vld [vmem:[%s3558 + $0x1c] sm:$0xf]
        %v3567 = vld [vmem:[%s3558 + $0x20] sm:$0xf]
        %v3568 = vld [vmem:[%s3558 + $0x24] sm:$0xf]
        %v3569 = vld [vmem:[%s3558 + $0x28] sm:$0xf]
        %v3570 = vld [vmem:[%s3558 + $0x2c] sm:$0xf]
        %v3571 = vld [vmem:[%s3558 + $0x30] sm:$0xf]
        %v3572 = vld [vmem:[%s3558 + $0x34] sm:$0xf]
        %v3573 = vld [vmem:[%s3558 + $0x38] sm:$0xf]
        %v3574 = vld [vmem:[%s3558 + $0x3c] sm:$0xf]
        %v3575 = vld [vmem:[%s3558 + $0x40] sm:$0xf]
        %v3576 = vld [vmem:[%s3558 + $0x44] sm:$0xf]
        %v3577 = vld [vmem:[%s3558 + $0x48] sm:$0xf]
        %v3578 = vld [vmem:[%s3558 + $0x4c] sm:$0xf]
        %v3579 = vld [vmem:[%s3558 + $0x50] sm:$0xf]
        %v3580 = vld [vmem:[%s3558 + $0x54] sm:$0xf]
        %v3581 = vld [vmem:[%s3558 + $0x58] sm:$0xf]
        %v3582 = vld [vmem:[%s3558 + $0x5c] sm:$0xf]
        %v3607 = vunpack.c.l.b16 %v3559
        %v3608 = vunpack.c.l.b16 %v3560
        %v3609 = vunpack.c.l.b16 %v3561
        %v3610 = vunpack.c.l.b16 %v3562
        %v3611 = vunpack.c.l.b16 %v3563
        %v3612 = vunpack.c.l.b16 %v3564
        %v3613 = vunpack.c.l.b16 %v3565
        %v3614 = vunpack.c.l.b16 %v3566
        %v3615 = vunpack.c.l.b16 %v3567
        %v3616 = vunpack.c.l.b16 %v3568
        %v3617 = vunpack.c.l.b16 %v3569
        %v3618 = vunpack.c.l.b16 %v3570
        %v3619 = vunpack.c.l.b16 %v3571
        %v3620 = vunpack.c.l.b16 %v3572
        %v3621 = vunpack.c.l.b16 %v3573
        %v3622 = vunpack.c.l.b16 %v3574
        %v3623 = vunpack.c.l.b16 %v3575
        %v3624 = vunpack.c.l.b16 %v3576
        %v3625 = vunpack.c.l.b16 %v3577
        %v3626 = vunpack.c.l.b16 %v3578
        %v3627 = vunpack.c.l.b16 %v3579
        %v3628 = vunpack.c.l.b16 %v3580
        %v3629 = vunpack.c.l.b16 %v3581
        %v3630 = vunpack.c.l.b16 %v3582
        %v3631 = vpack.c.b16 %v3608, %v3607
        %v3632 = vpack.c.b16 %v3610, %v3609
        %v3633 = vpack.c.b16 %v3612, %v3611
        %v3634 = vpack.c.b16 %v3614, %v3613
        %v3635 = vpack.c.b16 %v3616, %v3615
        %v3636 = vpack.c.b16 %v3618, %v3617
        %v3637 = vpack.c.b16 %v3620, %v3619
        %v3638 = vpack.c.b16 %v3622, %v3621
        %v3639 = vpack.c.b16 %v3624, %v3623
        %v3640 = vpack.c.b16 %v3626, %v3625
        %v3641 = vpack.c.b16 %v3628, %v3627
        %v3642 = vpack.c.b16 %v3630, %v3629
        %v3656 = vsel %vm3226, %v3543, 0
        %v3659 = vsel %vm3226, %v3545, 0
        %v3662 = vsel %vm3226, %v3547, 0
        %v3665 = vsel %vm3226, %v3549, 0
        %v3668 = vsel %vm3226, %v3551, 0
        %v3671 = vsel %vm3226, %v3553, 0
        %v3674 = vsel %vm3226, %v3555, 0
        %v3677 = vsel %vm3226, %v3557, 0
        %3679 = vmatprep.subr.bf16.mxu0 0
        %3680 = vmatpush1.bf16.msra.mxu0 %v3631
        %3681 = vmatprep.subr.bf16.mxu0 0
        %3682 = vmatpush1.bf16.msra.mxu0 %v3632
        %3683 = vmatprep.subr.bf16.mxu0 0
        %3684 = vmatpush1.bf16.msra.mxu0 %v3633
        %3685 = vmatprep.subr.bf16.mxu0 0
        %3686 = vmatpush1.bf16.msra.mxu0 %v3634
        %3687 = vmatprep.subr.bf16.mxu0 0
        %3688 = vmatpush1.bf16.msra.mxu0 %v3635
        %3689 = vmatprep.subr.bf16.mxu0 0
        %3690 = vmatpush1.bf16.msra.mxu0 %v3636
        %3691 = vmatprep.subr.bf16.mxu0 0
        %3692 = vmatpush1.bf16.msra.mxu0 %v3637
        %3693 = vmatprep.subr.bf16.mxu0 0
        %3694 = vmatpush1.bf16.msra.mxu0 %v3638
        %3695 = vmatprep.subr.bf16.mxu0 0
        %3696 = vmatpush1.bf16.msra.mxu0 %v3639
        %3697 = vmatprep.subr.bf16.mxu0 0
        %3698 = vmatpush1.bf16.msra.mxu0 %v3640
        %3699 = vmatprep.subr.bf16.mxu0 0
        %3700 = vmatpush1.bf16.msra.mxu0 %v3641
        %3701 = vmatprep.subr.bf16.mxu0 0
        %3702 = vmatpush1.bf16.msra.mxu0 %v3642
        %3703 = vmatprep.subr.bf16.mxu0 0
        %3704 = vmatpush1.bf16.msra.mxu0 0
        %3705 = vmatprep.subr.bf16.mxu0 0
        %3706 = vmatpush1.bf16.msra.mxu0 0
        %3707 = vmatprep.subr.bf16.mxu0 0
        %3708 = vmatpush1.bf16.msra.mxu0 0
        %3709 = vmatprep.subr.bf16.mxu0 0
        %3710 = vmatpush1.bf16.msra.mxu0 0
        %3711 = vmatprep.mubr.bf16.mxu0 %v3656
        %3712 = vmatmul.mubr.bf16.gmra.mrb[0].mxu0 %v3542
        %v3713 = vpop.f32.mrb[0].mxu0
        %v3714 = vadd.f32 0.0, %v3713
        %v3715 = vpop.f32.mrb[0].mxu0
        %v3716 = vpop.f32.mrb[0].mxu0
        %v3717 = vadd.f32 0.0, %v3716
        %v3718 = vpop.f32.mrb[0].mxu0
        %3719 = vmatprep.mubr.bf16.mxu0 %v3659
        %3720 = vmatmul.mubr.bf16.gmra.mrb[0].mxu0 %v3544
        %v3721 = vpop.f32.mrb[0].mxu0
        %v3722 = vadd.f32 0.0, %v3721
        %v3723 = vpop.f32.mrb[0].mxu0
        %v3724 = vpop.f32.mrb[0].mxu0
        %v3725 = vadd.f32 0.0, %v3724
        %v3726 = vpop.f32.mrb[0].mxu0
        %3727 = vmatprep.mubr.bf16.mxu0 %v3662
        %3728 = vmatmul.mubr.bf16.gmra.mrb[0].mxu0 %v3546
        %v3729 = vpop.f32.mrb[0].mxu0
        %v3730 = vadd.f32 0.0, %v3729
        %v3731 = vpop.f32.mrb[0].mxu0
        %v3732 = vpop.f32.mrb[0].mxu0
        %v3733 = vadd.f32 0.0, %v3732
        %v3734 = vpop.f32.mrb[0].mxu0
        %3735 = vmatprep.mubr.bf16.mxu0 %v3665
        %3736 = vmatmul.mubr.bf16.gmra.mrb[0].mxu0 %v3548
        %v3737 = vpop.f32.mrb[0].mxu0
        %v3738 = vadd.f32 0.0, %v3737
        %v3739 = vpop.f32.mrb[0].mxu0
        %v3740 = vpop.f32.mrb[0].mxu0
        %v3741 = vadd.f32 0.0, %v3740
        %v3742 = vpop.f32.mrb[0].mxu0
        %3743 = vmatprep.mubr.bf16.mxu0 %v3668
        %3744 = vmatmul.mubr.bf16.gmra.mrb[0].mxu0 %v3550
        %v3745 = vpop.f32.mrb[0].mxu0
        %v3746 = vadd.f32 0.0, %v3745
        %v3747 = vpop.f32.mrb[0].mxu0
        %v3748 = vpop.f32.mrb[0].mxu0
        %v3749 = vadd.f32 0.0, %v3748
        %v3750 = vpop.f32.mrb[0].mxu0
        %3751 = vmatprep.mubr.bf16.mxu0 %v3671
        %3752 = vmatmul.mubr.bf16.gmra.mrb[0].mxu0 %v3552
        %v3753 = vpop.f32.mrb[0].mxu0
        %v3754 = vadd.f32 0.0, %v3753
        %v3755 = vpop.f32.mrb[0].mxu0
        %v3756 = vpop.f32.mrb[0].mxu0
        %v3757 = vadd.f32 0.0, %v3756
        %v3758 = vpop.f32.mrb[0].mxu0
        %3759 = vmatprep.mubr.bf16.mxu0 %v3674
        %3760 = vmatmul.mubr.bf16.gmra.mrb[0].mxu0 %v3554
        %v3761 = vpop.f32.mrb[0].mxu0
        %v3762 = vadd.f32 0.0, %v3761
        %v3763 = vpop.f32.mrb[0].mxu0
        %v3764 = vpop.f32.mrb[0].mxu0
        %v3765 = vadd.f32 0.0, %v3764
        %v3766 = vpop.f32.mrb[0].mxu0
        %3767 = vmatprep.mubr.bf16.mxu0 %v3677
        %3768 = vmatmul.mubr.bf16.gmra.mrb[0].mxu0 %v3556
        %v3769 = vpop.f32.mrb[0].mxu0
        %v3770 = vadd.f32 0.0, %v3769
        %v3771 = vpop.f32.mrb[0].mxu0
        %v3772 = vpop.f32.mrb[0].mxu0
        %v3773 = vadd.f32 0.0, %v3772
        %v3774 = vpop.f32.mrb[0].mxu0
        %3775 = vdwg.mxu0
        %v3776 = vadd.f32 %v3479, %v3714
        %v3777 = vadd.f32 %v3482, %v3717
        %v3778 = vadd.f32 %v3487, %v3722
        %v3779 = vadd.f32 %v3490, %v3725
        %v3780 = vadd.f32 %v3495, %v3730
        %v3781 = vadd.f32 %v3498, %v3733
        %v3782 = vadd.f32 %v3503, %v3738
        %v3783 = vadd.f32 %v3506, %v3741
        %v3784 = vadd.f32 %v3511, %v3746
        %v3785 = vadd.f32 %v3514, %v3749
        %v3786 = vadd.f32 %v3519, %v3754
        %v3787 = vadd.f32 %v3522, %v3757
        %v3788 = vadd.f32 %v3527, %v3762
        %v3789 = vadd.f32 %v3530, %v3765
        %v3790 = vadd.f32 %v3535, %v3770
        %v3791 = vadd.f32 %v3538, %v3773
        %v3792 = vld [vmem:[%s4] sm:$0x1]
        %v3794 = vlaneseq
        %v3795 = vshrl.u32 %v3794, 7
        %v3796 = vsub.s32 0, %v3795
        %v3797 = vrot.slane %v3792, %v3796
        %v3799 = vadd.f32 %v3776, %v3797
        %v3800 = vadd.f32 %v3777, %v3797
        %v3801 = vadd.f32 %v3778, %v3797
        %v3802 = vadd.f32 %v3779, %v3797
        %v3803 = vadd.f32 %v3780, %v3797
        %v3804 = vadd.f32 %v3781, %v3797
        %v3805 = vadd.f32 %v3782, %v3797
        %v3806 = vadd.f32 %v3783, %v3797
        %v3807 = vadd.f32 %v3784, %v3797
        %v3808 = vadd.f32 %v3785, %v3797
        %v3809 = vadd.f32 %v3786, %v3797
        %v3810 = vadd.f32 %v3787, %v3797
        %v3811 = vadd.f32 %v3788, %v3797
        %v3812 = vadd.f32 %v3789, %v3797
        %v3813 = vadd.f32 %v3790, %v3797
        %v3814 = vadd.f32 %v3791, %v3797
        %3815 = vst.msk [vmem:[%s231] sm:$0xff] %vm3226, %v3799
        %3816 = vst.msk [vmem:[%s231 + $0x8] sm:$0xff] %vm3226, %v3800
        %3817 = vst.msk [vmem:[%s231 + $0x10] sm:$0xff] %vm3226, %v3801
        %3818 = vst.msk [vmem:[%s231 + $0x18] sm:$0xff] %vm3226, %v3802
        %3819 = vst.msk [vmem:[%s231 + $0x20] sm:$0xff] %vm3226, %v3803
        %3820 = vst.msk [vmem:[%s231 + $0x28] sm:$0xff] %vm3226, %v3804
        %3821 = vst.msk [vmem:[%s231 + $0x30] sm:$0xff] %vm3226, %v3805
        %3822 = vst.msk [vmem:[%s231 + $0x38] sm:$0xff] %vm3226, %v3806
        %3823 = vst.msk [vmem:[%s231 + $0x40] sm:$0xff] %vm3226, %v3807
        %3824 = vst.msk [vmem:[%s231 + $0x48] sm:$0xff] %vm3226, %v3808
        %3825 = vst.msk [vmem:[%s231 + $0x50] sm:$0xff] %vm3226, %v3809
        %3826 = vst.msk [vmem:[%s231 + $0x58] sm:$0xff] %vm3226, %v3810
        %3827 = vst.msk [vmem:[%s231 + $0x60] sm:$0xff] %vm3226, %v3811
        %3828 = vst.msk [vmem:[%s231 + $0x68] sm:$0xff] %vm3226, %v3812
        %3829 = vst.msk [vmem:[%s231 + $0x70] sm:$0xff] %vm3226, %v3813
        %3830 = vst.msk [vmem:[%s231 + $0x78] sm:$0xff] %vm3226, %v3814
        %s3831 = sand.u32 %s151, 1
        %s3832 = scalar_lea.sflag [#allocation5], %s3831
        %s3833 = sand.u32 %s151, 1
        %s3834 = smul.addr %s3833, 128
        %s3835 = scalar_lea.vmem [#allocation4], %s3834
        // Predicated region
        $region49: #{vgg_feature_extractor.1} parent=39 // pred_check
          %p3836 = pneg %p161
        $region50: #{vgg_feature_extractor.1} parent=39 // pred_check_branch
          %3838 = sbr.rel (%p3836) target = $region52
        $region51: #{vgg_feature_extractor.1} parent=39 // pred_region
          %s3839 = smul.u32 8, %s24
          %s3841 = ssub.s32 2048, 2048
          %3842 = vsyncadd %s3832, %s3841
          %s3843 = smul.addr %s3839, 2
          %s3844 = smul.addr %s23, 32
          %s3845 = sadd.s32 %s3843, %s3844
          %s3846 = smul.addr %s3845, 128
          %s3847 = scalar_lea.hbm %s5, %s3846
          %s3848 = sshll.u32 %s3835, 4
          %s3849 = int_to_ptr.vmem [resolvable:$true] %s3848
          %3854 = dma.vmem_to_hbm [thread:$0]  %s3849, 2048, %s3847, %s3832, 128, 128, 8
        $region52: #{vgg_feature_extractor.1} parent=39 // pred_fallthru
          _
      $region40: #{vgg_feature_extractor.1} parent=5 // pred_fallthru
        _
      %p3855 = scmp.le.s32.totalorder 2, %s14
      // Predicated region
      $region53: #{vgg_feature_extractor.1} parent=5 // pred_check
        %p3856 = pneg %p3855
      $region54: #{vgg_feature_extractor.1} parent=5 // pred_check_branch
        %3858 = sbr.rel (%p3856) target = $region56
      $region55: #{vgg_feature_extractor.1} parent=5 // pred_region
        %s3859 = ssub.s32 %s14, 2
        // Predicated region
        $region57: #{vgg_feature_extractor.1} parent=55 // pred_check
          %p3860 = pneg %p167
        $region58: #{vgg_feature_extractor.1} parent=55 // pred_check_branch
          %3862 = sbr.rel (%p3860) target = $region60
        $region59: #{vgg_feature_extractor.1} parent=55 // pred_region
          %s3863 = sand.u32 %s152, 1
          %s3864 = scalar_lea.sflag [#allocation5], %s3863
          %s3865 = sand.u32 %s152, 1
          %s3866 = smul.addr %s3865, 128
          %s3867 = scalar_lea.vmem [#allocation4], %s3866
          %3868 = dma.done %s3864, 2048
        $region60: #{vgg_feature_extractor.1} parent=55 // pred_fallthru
          _
      $region56: #{vgg_feature_extractor.1} parent=5 // pred_fallthru
        _
    $region6: #{vgg_feature_extractor.1} parent=1 // loop_footer
      %s18 = sadd.s32 1, %s14
    $region7: #{vgg_feature_extractor.1} parent=1 // loop_footer_branch
      %13 = sbr.rel target = $region3
    $region8: #{vgg_feature_extractor.1} parent=1 // loop_exit
      _
    %3869 = vsyncpa [#allocation5], 1
    %s3870 = scalar_lea.sflag [#allocation5], 1
    %3871 = vsyncpa %s3870, 1

</llo_original>
